<compile_context>
chip_gen: v7x
topology: tpu7x:2x2x1
jax: 0.10.0
libtpu: 0.0.40
codegen_flags: <defaults>
</compile_context>

<pallas_src>
import functools

import jax
import jax.numpy as jnp
import numpy as np
from jax import lax
from jax.experimental import pallas as pl
from jax.experimental.pallas import tpu as pltpu

LANE = 128


def _round_up(x, m):
    return (x + m - 1) // m * m


# ------------------------------ Pallas kernel ------------------------------

def down_kernel(x_ref, w1_ref, b1_ref, w2_ref, b2_ref, out_ref, *,
                tile_h, hp, wp, wc, wout, n_tiles):
    """Fused conv3x3->BN->ReLU->conv3x3->BN->ReLU on one haloed row tile.

    x_ref  : (1, tile_h+4, wc+2, Cin)   pooled input tile (2-row/2-col halo), bf16
    w1_ref : (9, Cin, Cmid_p)           conv1 weight, BN1-folded, bf16
    b1_ref : (1, Cmid_p)                folded bias, f32
    w2_ref : (9, Cmid_p, Cout_p)        conv2 weight, BN2-folded, bf16
    b2_ref : (1, Cout_p)                folded bias, f32
    out_ref: (1, tile_h, wout, Cout_p)  f32 (lane-dense store)
    """
    r1 = tile_h + 2
    cin = x_ref.shape[-1]
    cmid = w1_ref.shape[-1]
    cout = w2_ref.shape[-1]

    # first output row handled by this tile (grid is flattened over (B, T))
    r0 = (pl.program_id(0) % n_tiles) * tile_h

    # ---- conv1 over the extended (tile_h+2, wc) window: 9 accumulating dots
    acc1 = None
    for dr in range(3):
        for dc in range(3):
            patch = x_ref[0, dr:dr + r1, dc:dc + wc, :]            # (r1, wc, cin)
            term = jnp.dot(patch.reshape(r1 * wc, cin),
                           w1_ref[dr * 3 + dc],
                           preferred_element_type=jnp.float32)
            acc1 = term if acc1 is None else acc1 + term

    a1 = jnp.maximum(acc1 + b1_ref[...], 0.0).reshape(r1, wc, cmid)

    # zero positions outside the real image: this *is* conv2's zero padding.
    row = lax.broadcasted_iota(jnp.int32, (r1, wc, 1), 0) + (r0 - 1)
    col = lax.broadcasted_iota(jnp.int32, (r1, wc, 1), 1) - 1
    valid = (row >= 0) & (row < hp) & (col >= 0) & (col < wp)
    a1 = jnp.where(valid, a1, 0.0).astype(w2_ref.dtype)

    # ---- conv2: 9 accumulating dots on shifted views of a1 ----------------
    acc2 = None
    for dr in range(3):
        for dc in range(3):
            patch = a1[dr:dr + tile_h, dc:dc + wout, :]            # (tile_h, wout, cmid)
            term = jnp.dot(patch.reshape(tile_h * wout, cmid),
                           w2_ref[dr * 3 + dc],
                           preferred_element_type=jnp.float32)
            acc2 = term if acc2 is None else acc2 + term

    y = jnp.maximum(acc2 + b2_ref[...], 0.0)
    out_ref[0] = y.reshape(tile_h, wout, cout).astype(out_ref.dtype)


# ------------------------------ wrapper glue --------------------------------

def fold_bn(w, b, bn, eps=1e-5):
    gamma, beta, mean, var = bn
    s = gamma / jnp.sqrt(var + eps)
    return w * s[:, None, None, None], (b - mean) * s + beta


def down_forward(x_nchw, params, *, tile_h=32, storage_dtype=jnp.bfloat16):
    B, Cin, H, W = x_nchw.shape
    Hp, Wp = H // 2, W // 2

    # 2x2 max-pool (floor) in NHWC
    x = jnp.transpose(x_nchw, (0, 2, 3, 1))[:, :Hp * 2, :Wp * 2, :]
    xpool = x.reshape(B, Hp, 2, Wp, 2, Cin).max(axis=(2, 4))       # (B, Hp, Wp, Cin)

    Cmid = params['w1'].shape[0]
    Cout = params['w2'].shape[0]
    Cmid_p = _round_up(Cmid, LANE)
    Cout_p = _round_up(Cout, LANE)

    tile_h = max(1, min(tile_h, Hp))
    T = -(-Hp // tile_h)
    Hp_t = T * tile_h
    Wout_c = _round_up(Wp, 8)                 # conv2 compute width (mult of 8)
    Wc = _round_up(Wout_c + 2, 8)             # conv1 compute width (mult of 8)
    Win = Wc + 2                              # input tile width (incl. halo)

    # spatial zero pad: 2-row / 2-col halo + row/col round-up padding
    xpad = jnp.pad(xpool, ((0, 0), (2, 2 + Hp_t - Hp), (2, Win - Wp - 2), (0, 0)))

    # overlapping row windows (halo rows duplicated: 4/tile_h overhead)
    xw = jnp.stack([xpad[:, t * tile_h: t * tile_h + tile_h + 4]
                    for t in range(T)], axis=1)
    xw = xw.reshape(B * T, tile_h + 4, Win, Cin).astype(storage_dtype)

    # fold conv bias + eval-mode BN into weights / a single bias; pad channels
    w1f, b1f = fold_bn(params['w1'], params['b1'], params['bn1'])
    w2f, b2f = fold_bn(params['w2'], params['b2'], params['bn2'])

    w1k = jnp.transpose(w1f, (2, 3, 1, 0)).reshape(9, Cin, Cmid)
    w1k = jnp.pad(w1k, ((0, 0), (0, 0), (0, Cmid_p - Cmid))).astype(storage_dtype)
    w2k = jnp.transpose(w2f, (2, 3, 1, 0)).reshape(9, Cmid, Cout)
    w2k = jnp.pad(w2k, ((0, 0), (0, Cmid_p - Cmid),
                        (0, Cout_p - Cout))).astype(storage_dtype)
    b1k = jnp.pad(b1f, (0, Cmid_p - Cmid)).reshape(1, Cmid_p).astype(jnp.float32)
    b2k = jnp.pad(b2f, (0, Cout_p - Cout)).reshape(1, Cout_p).astype(jnp.float32)

    kernel = functools.partial(down_kernel, tile_h=tile_h, hp=Hp, wp=Wp,
                               wc=Wc, wout=Wout_c, n_tiles=T)

    out = pl.pallas_call(
        kernel,
        out_shape=jax.ShapeDtypeStruct((B * T, tile_h, Wout_c, Cout_p),
                                       jnp.float32),
        grid=(B * T,),
        in_specs=[
            pl.BlockSpec((1, tile_h + 4, Win, Cin), lambda i: (i, 0, 0, 0)),
            pl.BlockSpec((9, Cin, Cmid_p), lambda i: (0, 0, 0)),
            pl.BlockSpec((1, Cmid_p), lambda i: (0, 0)),
            pl.BlockSpec((9, Cmid_p, Cout_p), lambda i: (0, 0, 0)),
            pl.BlockSpec((1, Cout_p), lambda i: (0, 0)),
        ],
        out_specs=pl.BlockSpec((1, tile_h, Wout_c, Cout_p),
                               lambda i: (i, 0, 0, 0)),
        compiler_params=pltpu.CompilerParams(
            dimension_semantics=("parallel",),
            vmem_limit_bytes=48 * 1024 * 1024),
    )(xw, w1k, b1k, w2k, b2k)

    out = out.reshape(B, Hp_t, Wout_c, Cout_p)[:, :Hp, :Wp, :Cout]
    return jnp.transpose(out, (0, 3, 1, 2))                        # NCHW


# ------------------------------ references ---------------------------------

def ref_forward(x, params):
    """Pure f32 reference with the module's semantics (BN in eval mode)."""
    dn = ('NCHW', 'OIHW', 'NCHW')

    def bn(y, p):
        gamma, beta, mean, var = p
        s = gamma / jnp.sqrt(var + 1e-5)
        return y * s[None, :, None, None] + (beta - mean * s)[None, :, None, None]

    B, C, H, W = x.shape
    Hp, Wp = H // 2, W // 2
    xp = x[:, :, :Hp * 2, :Wp * 2].reshape(B, C, Hp, 2, Wp, 2).max(axis=(3, 5))
    y = lax.conv_general_dilated(xp, params['w1'], (1, 1), [(1, 1), (1, 1)],
                                 dimension_numbers=dn)
    y = jax.nn.relu(bn(y + params['b1'][None, :, None, None], params['bn1']))
    y = lax.conv_general_dilated(y, params['w2'], (1, 1), [(1, 1), (1, 1)],
                                 dimension_numbers=dn)
    y = jax.nn.relu(bn(y + params['b2'][None, :, None, None], params['bn2']))
    return y


def ref_forward_like_kernel(x, params, storage_dtype=jnp.bfloat16):
    """Reference that mirrors the kernel's folding + bf16 storage casts."""
    dn = ('NCHW', 'OIHW', 'NCHW')
    q = lambda a: a.astype(storage_dtype).astype(jnp.float32)
    B, C, H, W = x.shape
    Hp, Wp = H // 2, W // 2
    xp = x[:, :, :Hp * 2, :Wp * 2].reshape(B, C, Hp, 2, Wp, 2).max(axis=(3, 5))
    w1f, b1f = fold_bn(params['w1'], params['b1'], params['bn1'])
    w2f, b2f = fold_bn(params['w2'], params['b2'], params['bn2'])
    y = lax.conv_general_dilated(q(xp), q(w1f), (1, 1), [(1, 1), (1, 1)],
                                 dimension_numbers=dn)
    y = jax.nn.relu(y + b1f[None, :, None, None])
    y = lax.conv_general_dilated(q(y), q(w2f), (1, 1), [(1, 1), (1, 1)],
                                 dimension_numbers=dn)
    y = jax.nn.relu(y + b2f[None, :, None, None])
    return y


# --------------------------------- demo -------------------------------------

if __name__ == "__main__":
    key = jax.random.PRNGKey(0)
    B, Cin, H, W = 2, 4, 32, 32
    Cout = 16
    ks = jax.random.split(key, 8)

    x = jax.random.normal(ks[0], (B, Cin, H, W), jnp.float32)

    def bn_params(k, c):
        k1, k2, k3, k4 = jax.random.split(k, 4)
        gamma = 1.0 + 0.1 * jax.random.normal(k1, (c,), jnp.float32)
        beta = 0.1 * jax.random.normal(k2, (c,), jnp.float32)
        mean = 0.1 * jax.random.normal(k3, (c,), jnp.float32)
        var = jax.random.uniform(k4, (c,), jnp.float32, minval=0.5, maxval=1.5)
        return (gamma, beta, mean, var)

    params = {
        'w1': 0.1 * jax.random.normal(ks[1], (Cout, Cin, 3, 3), jnp.float32),
        'b1': 0.1 * jax.random.normal(ks[2], (Cout,), jnp.float32),
        'bn1': bn_params(ks[3], Cout),
        'w2': 0.1 * jax.random.normal(ks[4], (Cout, Cout, 3, 3), jnp.float32),
        'b2': 0.1 * jax.random.normal(ks[5], (Cout,), jnp.float32),
        'bn2': bn_params(ks[6], Cout),
    }

    fwd = jax.jit(functools.partial(down_forward, tile_h=8))
    out = jax.block_until_ready(fwd(x, params))
    assert out.shape == (B, Cout, H // 2, W // 2)

    # tight check against a reference that mirrors the bf16-storage casts
    ref_q = ref_forward_like_kernel(x, params)
    np.testing.assert_allclose(np.asarray(out), np.asarray(ref_q),
                               atol=2e-3, rtol=2e-3)
    # loose check against the true f32 module semantics (bf16 quantization slack)
    ref = ref_forward(x, params)
    np.testing.assert_allclose(np.asarray(out), np.asarray(ref),
                               atol=2.5e-1, rtol=2.5e-1)

    print("KERNEL_OK")
</pallas_src>

<mosaic_0001>
module attributes {stable_mosaic.version = 11 : i64} {
  func.func @down_kernel(%arg0: i32, %arg1: memref<1x12x26x4xbf16, #tpu.memory_space<vmem>>, %arg2: memref<9x4x128xbf16, #tpu.memory_space<vmem>>, %arg3: memref<1x128xf32, #tpu.memory_space<vmem>>, %arg4: memref<9x128x128xbf16, #tpu.memory_space<vmem>>, %arg5: memref<1x128xf32, #tpu.memory_space<vmem>>, %arg6: memref<1x8x16x128xf32, #tpu.memory_space<vmem>>) attributes {dimension_semantics = [#tpu.dimension_semantics<parallel>], iteration_bounds = array<i64: 4>, scalar_prefetch = 0 : i64, scratch_operands = 0 : i64, tpu.core_type = #tpu.core_type<tc>, window_params = [{transform_indices = @transform_0, window_bounds = array<i64: 1, 12, 26, 4>}, {pipeline_mode = #tpu.pipeline_mode<synchronous>, transform_indices = @transform_1, window_bounds = array<i64: 9, 4, 128>}, {pipeline_mode = #tpu.pipeline_mode<synchronous>, transform_indices = @transform_2, window_bounds = array<i64: 1, 128>}, {pipeline_mode = #tpu.pipeline_mode<synchronous>, transform_indices = @transform_3, window_bounds = array<i64: 9, 128, 128>}, {pipeline_mode = #tpu.pipeline_mode<synchronous>, transform_indices = @transform_4, window_bounds = array<i64: 1, 128>}, {transform_indices = @transform_5, window_bounds = array<i64: 1, 8, 16, 128>}]} {
    %c2_i32 = arith.constant 2 : i32
    %c0_i32 = arith.constant 0 : i32
    %0 = arith.cmpi eq, %c2_i32, %c0_i32 : i32
    %c1_i32 = arith.constant 1 : i32
    %1 = arith.select %0, %c1_i32, %c2_i32 : i32
    %2 = arith.remsi %arg0, %1 : i32
    %c0_i32_0 = arith.constant 0 : i32
    %3 = arith.cmpi ne, %2, %c0_i32_0 : i32
    %c0_i32_1 = arith.constant 0 : i32
    %4 = arith.cmpi slt, %2, %c0_i32_1 : i32
    %c0_i32_2 = arith.constant 0 : i32
    %5 = arith.cmpi slt, %1, %c0_i32_2 : i32
    %6 = arith.xori %4, %5 : i1
    %7 = arith.andi %6, %3 : i1
    %8 = arith.addi %2, %1 : i32
    %9 = arith.select %7, %8, %2 : i32
    %c8_i32 = arith.constant 8 : i32
    %10 = arith.muli %9, %c8_i32 : i32
    %c0 = arith.constant 0 : index
    %c0_3 = arith.constant 0 : index
    %c0_4 = arith.constant 0 : index
    %c0_5 = arith.constant 0 : index
    %11 = vector.load %arg1[%c0, %c0_3, %c0_4, %c0_5] : memref<1x12x26x4xbf16, #tpu.memory_space<vmem>>, vector<1x10x24x4xbf16>
    %12 = vector.shape_cast %11 : vector<1x10x24x4xbf16> to vector<10x24x4xbf16>
    %13 = vector.shape_cast %12 : vector<10x24x4xbf16> to vector<240x4xbf16>
    %c0_6 = arith.constant 0 : index
    %c0_7 = arith.constant 0 : index
    %c0_8 = arith.constant 0 : index
    %14 = vector.load %arg2[%c0_6, %c0_7, %c0_8] : memref<9x4x128xbf16, #tpu.memory_space<vmem>>, vector<1x4x128xbf16>
    %15 = vector.shape_cast %14 : vector<1x4x128xbf16> to vector<4x128xbf16>
    %cst = arith.constant dense<0.000000e+00> : vector<240x128xf32>
    %16 = tpu.matmul %13, %15, %cst {dimension_numbers = #tpu.dot_dimension_numbers<[1], [0], [0], [1], [0, 0, 1, 1], [], []>} : vector<240x4xbf16>, vector<4x128xbf16>, vector<240x128xf32> -> vector<240x128xf32>
    %c0_9 = arith.constant 0 : index
    %c0_10 = arith.constant 0 : index
    %c1 = arith.constant 1 : index
    %c0_11 = arith.constant 0 : index
    %17 = vector.load %arg1[%c0_9, %c0_10, %c1, %c0_11] : memref<1x12x26x4xbf16, #tpu.memory_space<vmem>>, vector<1x10x24x4xbf16>
    %18 = vector.shape_cast %17 : vector<1x10x24x4xbf16> to vector<10x24x4xbf16>
    %19 = vector.shape_cast %18 : vector<10x24x4xbf16> to vector<240x4xbf16>
    %c1_12 = arith.constant 1 : index
    %c0_13 = arith.constant 0 : index
    %c0_14 = arith.constant 0 : index
    %20 = vector.load %arg2[%c1_12, %c0_13, %c0_14] : memref<9x4x128xbf16, #tpu.memory_space<vmem>>, vector<1x4x128xbf16>
    %21 = vector.shape_cast %20 : vector<1x4x128xbf16> to vector<4x128xbf16>
    %cst_15 = arith.constant dense<0.000000e+00> : vector<240x128xf32>
    %22 = tpu.matmul %19, %21, %cst_15 {dimension_numbers = #tpu.dot_dimension_numbers<[1], [0], [0], [1], [0, 0, 1, 1], [], []>} : vector<240x4xbf16>, vector<4x128xbf16>, vector<240x128xf32> -> vector<240x128xf32>
    %23 = arith.addf %16, %22 : vector<240x128xf32>
    %c0_16 = arith.constant 0 : index
    %c0_17 = arith.constant 0 : index
    %c2 = arith.constant 2 : index
    %c0_18 = arith.constant 0 : index
    %24 = vector.load %arg1[%c0_16, %c0_17, %c2, %c0_18] : memref<1x12x26x4xbf16, #tpu.memory_space<vmem>>, vector<1x10x24x4xbf16>
    %25 = vector.shape_cast %24 : vector<1x10x24x4xbf16> to vector<10x24x4xbf16>
    %26 = vector.shape_cast %25 : vector<10x24x4xbf16> to vector<240x4xbf16>
    %c2_19 = arith.constant 2 : index
    %c0_20 = arith.constant 0 : index
    %c0_21 = arith.constant 0 : index
    %27 = vector.load %arg2[%c2_19, %c0_20, %c0_21] : memref<9x4x128xbf16, #tpu.memory_space<vmem>>, vector<1x4x128xbf16>
    %28 = vector.shape_cast %27 : vector<1x4x128xbf16> to vector<4x128xbf16>
    %cst_22 = arith.constant dense<0.000000e+00> : vector<240x128xf32>
    %29 = tpu.matmul %26, %28, %cst_22 {dimension_numbers = #tpu.dot_dimension_numbers<[1], [0], [0], [1], [0, 0, 1, 1], [], []>} : vector<240x4xbf16>, vector<4x128xbf16>, vector<240x128xf32> -> vector<240x128xf32>
    %30 = arith.addf %23, %29 : vector<240x128xf32>
    %c0_23 = arith.constant 0 : index
    %c1_24 = arith.constant 1 : index
    %c0_25 = arith.constant 0 : index
    %c0_26 = arith.constant 0 : index
    %31 = vector.load %arg1[%c0_23, %c1_24, %c0_25, %c0_26] : memref<1x12x26x4xbf16, #tpu.memory_space<vmem>>, vector<1x10x24x4xbf16>
    %32 = vector.shape_cast %31 : vector<1x10x24x4xbf16> to vector<10x24x4xbf16>
    %33 = vector.shape_cast %32 : vector<10x24x4xbf16> to vector<240x4xbf16>
    %c3 = arith.constant 3 : index
    %c0_27 = arith.constant 0 : index
    %c0_28 = arith.constant 0 : index
    %34 = vector.load %arg2[%c3, %c0_27, %c0_28] : memref<9x4x128xbf16, #tpu.memory_space<vmem>>, vector<1x4x128xbf16>
    %35 = vector.shape_cast %34 : vector<1x4x128xbf16> to vector<4x128xbf16>
    %cst_29 = arith.constant dense<0.000000e+00> : vector<240x128xf32>
    %36 = tpu.matmul %33, %35, %cst_29 {dimension_numbers = #tpu.dot_dimension_numbers<[1], [0], [0], [1], [0, 0, 1, 1], [], []>} : vector<240x4xbf16>, vector<4x128xbf16>, vector<240x128xf32> -> vector<240x128xf32>
    %37 = arith.addf %30, %36 : vector<240x128xf32>
    %c0_30 = arith.constant 0 : index
    %c1_31 = arith.constant 1 : index
    %c1_32 = arith.constant 1 : index
    %c0_33 = arith.constant 0 : index
    %38 = vector.load %arg1[%c0_30, %c1_31, %c1_32, %c0_33] : memref<1x12x26x4xbf16, #tpu.memory_space<vmem>>, vector<1x10x24x4xbf16>
    %39 = vector.shape_cast %38 : vector<1x10x24x4xbf16> to vector<10x24x4xbf16>
    %40 = vector.shape_cast %39 : vector<10x24x4xbf16> to vector<240x4xbf16>
    %c4 = arith.constant 4 : index
    %c0_34 = arith.constant 0 : index
    %c0_35 = arith.constant 0 : index
    %41 = vector.load %arg2[%c4, %c0_34, %c0_35] : memref<9x4x128xbf16, #tpu.memory_space<vmem>>, vector<1x4x128xbf16>
    %42 = vector.shape_cast %41 : vector<1x4x128xbf16> to vector<4x128xbf16>
    %cst_36 = arith.constant dense<0.000000e+00> : vector<240x128xf32>
    %43 = tpu.matmul %40, %42, %cst_36 {dimension_numbers = #tpu.dot_dimension_numbers<[1], [0], [0], [1], [0, 0, 1, 1], [], []>} : vector<240x4xbf16>, vector<4x128xbf16>, vector<240x128xf32> -> vector<240x128xf32>
    %44 = arith.addf %37, %43 : vector<240x128xf32>
    %c0_37 = arith.constant 0 : index
    %c1_38 = arith.constant 1 : index
    %c2_39 = arith.constant 2 : index
    %c0_40 = arith.constant 0 : index
    %45 = vector.load %arg1[%c0_37, %c1_38, %c2_39, %c0_40] : memref<1x12x26x4xbf16, #tpu.memory_space<vmem>>, vector<1x10x24x4xbf16>
    %46 = vector.shape_cast %45 : vector<1x10x24x4xbf16> to vector<10x24x4xbf16>
    %47 = vector.shape_cast %46 : vector<10x24x4xbf16> to vector<240x4xbf16>
    %c5 = arith.constant 5 : index
    %c0_41 = arith.constant 0 : index
    %c0_42 = arith.constant 0 : index
    %48 = vector.load %arg2[%c5, %c0_41, %c0_42] : memref<9x4x128xbf16, #tpu.memory_space<vmem>>, vector<1x4x128xbf16>
    %49 = vector.shape_cast %48 : vector<1x4x128xbf16> to vector<4x128xbf16>
    %cst_43 = arith.constant dense<0.000000e+00> : vector<240x128xf32>
    %50 = tpu.matmul %47, %49, %cst_43 {dimension_numbers = #tpu.dot_dimension_numbers<[1], [0], [0], [1], [0, 0, 1, 1], [], []>} : vector<240x4xbf16>, vector<4x128xbf16>, vector<240x128xf32> -> vector<240x128xf32>
    %51 = arith.addf %44, %50 : vector<240x128xf32>
    %c0_44 = arith.constant 0 : index
    %c2_45 = arith.constant 2 : index
    %c0_46 = arith.constant 0 : index
    %c0_47 = arith.constant 0 : index
    %52 = vector.load %arg1[%c0_44, %c2_45, %c0_46, %c0_47] : memref<1x12x26x4xbf16, #tpu.memory_space<vmem>>, vector<1x10x24x4xbf16>
    %53 = vector.shape_cast %52 : vector<1x10x24x4xbf16> to vector<10x24x4xbf16>
    %54 = vector.shape_cast %53 : vector<10x24x4xbf16> to vector<240x4xbf16>
    %c6 = arith.constant 6 : index
    %c0_48 = arith.constant 0 : index
    %c0_49 = arith.constant 0 : index
    %55 = vector.load %arg2[%c6, %c0_48, %c0_49] : memref<9x4x128xbf16, #tpu.memory_space<vmem>>, vector<1x4x128xbf16>
    %56 = vector.shape_cast %55 : vector<1x4x128xbf16> to vector<4x128xbf16>
    %cst_50 = arith.constant dense<0.000000e+00> : vector<240x128xf32>
    %57 = tpu.matmul %54, %56, %cst_50 {dimension_numbers = #tpu.dot_dimension_numbers<[1], [0], [0], [1], [0, 0, 1, 1], [], []>} : vector<240x4xbf16>, vector<4x128xbf16>, vector<240x128xf32> -> vector<240x128xf32>
    %58 = arith.addf %51, %57 : vector<240x128xf32>
    %c0_51 = arith.constant 0 : index
    %c2_52 = arith.constant 2 : index
    %c1_53 = arith.constant 1 : index
    %c0_54 = arith.constant 0 : index
    %59 = vector.load %arg1[%c0_51, %c2_52, %c1_53, %c0_54] : memref<1x12x26x4xbf16, #tpu.memory_space<vmem>>, vector<1x10x24x4xbf16>
    %60 = vector.shape_cast %59 : vector<1x10x24x4xbf16> to vector<10x24x4xbf16>
    %61 = vector.shape_cast %60 : vector<10x24x4xbf16> to vector<240x4xbf16>
    %c7 = arith.constant 7 : index
    %c0_55 = arith.constant 0 : index
    %c0_56 = arith.constant 0 : index
    %62 = vector.load %arg2[%c7, %c0_55, %c0_56] : memref<9x4x128xbf16, #tpu.memory_space<vmem>>, vector<1x4x128xbf16>
    %63 = vector.shape_cast %62 : vector<1x4x128xbf16> to vector<4x128xbf16>
    %cst_57 = arith.constant dense<0.000000e+00> : vector<240x128xf32>
    %64 = tpu.matmul %61, %63, %cst_57 {dimension_numbers = #tpu.dot_dimension_numbers<[1], [0], [0], [1], [0, 0, 1, 1], [], []>} : vector<240x4xbf16>, vector<4x128xbf16>, vector<240x128xf32> -> vector<240x128xf32>
    %65 = arith.addf %58, %64 : vector<240x128xf32>
    %c0_58 = arith.constant 0 : index
    %c2_59 = arith.constant 2 : index
    %c2_60 = arith.constant 2 : index
    %c0_61 = arith.constant 0 : index
    %66 = vector.load %arg1[%c0_58, %c2_59, %c2_60, %c0_61] : memref<1x12x26x4xbf16, #tpu.memory_space<vmem>>, vector<1x10x24x4xbf16>
    %67 = vector.shape_cast %66 : vector<1x10x24x4xbf16> to vector<10x24x4xbf16>
    %68 = vector.shape_cast %67 : vector<10x24x4xbf16> to vector<240x4xbf16>
    %c8 = arith.constant 8 : index
    %c0_62 = arith.constant 0 : index
    %c0_63 = arith.constant 0 : index
    %69 = vector.load %arg2[%c8, %c0_62, %c0_63] : memref<9x4x128xbf16, #tpu.memory_space<vmem>>, vector<1x4x128xbf16>
    %70 = vector.shape_cast %69 : vector<1x4x128xbf16> to vector<4x128xbf16>
    %cst_64 = arith.constant dense<0.000000e+00> : vector<240x128xf32>
    %71 = tpu.matmul %68, %70, %cst_64 {dimension_numbers = #tpu.dot_dimension_numbers<[1], [0], [0], [1], [0, 0, 1, 1], [], []>} : vector<240x4xbf16>, vector<4x128xbf16>, vector<240x128xf32> -> vector<240x128xf32>
    %72 = arith.addf %65, %71 : vector<240x128xf32>
    %c0_65 = arith.constant 0 : index
    %c0_66 = arith.constant 0 : index
    %73 = vector.load %arg3[%c0_65, %c0_66] : memref<1x128xf32, #tpu.memory_space<vmem>>, vector<1x128xf32>
    %74 = vector.broadcast %73 : vector<1x128xf32> to vector<240x128xf32>
    %75 = arith.addf %72, %74 : vector<240x128xf32>
    %cst_67 = arith.constant 0.000000e+00 : f32
    %76 = vector.broadcast %cst_67 : f32 to vector<240x128xf32>
    %77 = arith.maximumf %75, %76 : vector<240x128xf32>
    %78 = vector.shape_cast %77 : vector<240x128xf32> to vector<10x24x128xf32>
    %79 = tpu.iota {dimensions = array<i32: 0>} : vector<10x24x1xi32>
    %c1_i32_68 = arith.constant 1 : i32
    %80 = arith.subi %10, %c1_i32_68 : i32
    %81 = vector.broadcast %80 : i32 to vector<10x24x1xi32>
    %82 = arith.addi %79, %81 : vector<10x24x1xi32>
    %83 = tpu.iota {dimensions = array<i32: 1>} : vector<10x24x1xi32>
    %c1_i32_69 = arith.constant 1 : i32
    %84 = vector.broadcast %c1_i32_69 : i32 to vector<10x24x1xi32>
    %85 = arith.subi %83, %84 : vector<10x24x1xi32>
    %c0_i32_70 = arith.constant 0 : i32
    %86 = vector.broadcast %c0_i32_70 : i32 to vector<10x24x1xi32>
    %87 = arith.cmpi sge, %82, %86 : vector<10x24x1xi32>
    %c16_i32 = arith.constant 16 : i32
    %88 = vector.broadcast %c16_i32 : i32 to vector<10x24x1xi32>
    %89 = arith.cmpi slt, %82, %88 : vector<10x24x1xi32>
    %90 = arith.andi %87, %89 : vector<10x24x1xi1>
    %c0_i32_71 = arith.constant 0 : i32
    %91 = vector.broadcast %c0_i32_71 : i32 to vector<10x24x1xi32>
    %92 = arith.cmpi sge, %85, %91 : vector<10x24x1xi32>
    %93 = arith.andi %90, %92 : vector<10x24x1xi1>
    %c16_i32_72 = arith.constant 16 : i32
    %94 = vector.broadcast %c16_i32_72 : i32 to vector<10x24x1xi32>
    %95 = arith.cmpi slt, %85, %94 : vector<10x24x1xi32>
    %96 = arith.andi %93, %95 : vector<10x24x1xi1>
    %cst_73 = arith.constant 0.000000e+00 : f32
    %97 = vector.shape_cast %96 : vector<10x24x1xi1> to vector<10x24x1xi1>
    %98 = vector.broadcast %97 : vector<10x24x1xi1> to vector<10x24x128xi1>
    %99 = vector.broadcast %cst_73 : f32 to vector<10x24x128xf32>
    %100 = arith.select %98, %78, %99 : vector<10x24x128xi1>, vector<10x24x128xf32>
    %101 = arith.truncf %100 : vector<10x24x128xf32> to vector<10x24x128xbf16>
    %102 = vector.extract_strided_slice %101 {offsets = [0, 0, 0], sizes = [8, 16, 128], strides = [1, 1, 1]} : vector<10x24x128xbf16> to vector<8x16x128xbf16>
    %103 = vector.shape_cast %102 : vector<8x16x128xbf16> to vector<128x128xbf16>
    %c0_74 = arith.constant 0 : index
    %c0_75 = arith.constant 0 : index
    %c0_76 = arith.constant 0 : index
    %104 = vector.load %arg4[%c0_74, %c0_75, %c0_76] : memref<9x128x128xbf16, #tpu.memory_space<vmem>>, vector<1x128x128xbf16>
    %105 = vector.shape_cast %104 : vector<1x128x128xbf16> to vector<128x128xbf16>
    %cst_77 = arith.constant dense<0.000000e+00> : vector<128x128xf32>
    %106 = tpu.matmul %103, %105, %cst_77 {dimension_numbers = #tpu.dot_dimension_numbers<[1], [0], [0], [1], [0, 0, 1, 1], [], []>} : vector<128x128xbf16>, vector<128x128xbf16>, vector<128x128xf32> -> vector<128x128xf32>
    %107 = vector.extract_strided_slice %101 {offsets = [0, 1, 0], sizes = [8, 16, 128], strides = [1, 1, 1]} : vector<10x24x128xbf16> to vector<8x16x128xbf16>
    %108 = vector.shape_cast %107 : vector<8x16x128xbf16> to vector<128x128xbf16>
    %c1_78 = arith.constant 1 : index
    %c0_79 = arith.constant 0 : index
    %c0_80 = arith.constant 0 : index
    %109 = vector.load %arg4[%c1_78, %c0_79, %c0_80] : memref<9x128x128xbf16, #tpu.memory_space<vmem>>, vector<1x128x128xbf16>
    %110 = vector.shape_cast %109 : vector<1x128x128xbf16> to vector<128x128xbf16>
    %cst_81 = arith.constant dense<0.000000e+00> : vector<128x128xf32>
    %111 = tpu.matmul %108, %110, %cst_81 {dimension_numbers = #tpu.dot_dimension_numbers<[1], [0], [0], [1], [0, 0, 1, 1], [], []>} : vector<128x128xbf16>, vector<128x128xbf16>, vector<128x128xf32> -> vector<128x128xf32>
    %112 = arith.addf %106, %111 : vector<128x128xf32>
    %113 = vector.extract_strided_slice %101 {offsets = [0, 2, 0], sizes = [8, 16, 128], strides = [1, 1, 1]} : vector<10x24x128xbf16> to vector<8x16x128xbf16>
    %114 = vector.shape_cast %113 : vector<8x16x128xbf16> to vector<128x128xbf16>
    %c2_82 = arith.constant 2 : index
    %c0_83 = arith.constant 0 : index
    %c0_84 = arith.constant 0 : index
    %115 = vector.load %arg4[%c2_82, %c0_83, %c0_84] : memref<9x128x128xbf16, #tpu.memory_space<vmem>>, vector<1x128x128xbf16>
    %116 = vector.shape_cast %115 : vector<1x128x128xbf16> to vector<128x128xbf16>
    %cst_85 = arith.constant dense<0.000000e+00> : vector<128x128xf32>
    %117 = tpu.matmul %114, %116, %cst_85 {dimension_numbers = #tpu.dot_dimension_numbers<[1], [0], [0], [1], [0, 0, 1, 1], [], []>} : vector<128x128xbf16>, vector<128x128xbf16>, vector<128x128xf32> -> vector<128x128xf32>
    %118 = arith.addf %112, %117 : vector<128x128xf32>
    %119 = vector.extract_strided_slice %101 {offsets = [1, 0, 0], sizes = [8, 16, 128], strides = [1, 1, 1]} : vector<10x24x128xbf16> to vector<8x16x128xbf16>
    %120 = vector.shape_cast %119 : vector<8x16x128xbf16> to vector<128x128xbf16>
    %c3_86 = arith.constant 3 : index
    %c0_87 = arith.constant 0 : index
    %c0_88 = arith.constant 0 : index
    %121 = vector.load %arg4[%c3_86, %c0_87, %c0_88] : memref<9x128x128xbf16, #tpu.memory_space<vmem>>, vector<1x128x128xbf16>
    %122 = vector.shape_cast %121 : vector<1x128x128xbf16> to vector<128x128xbf16>
    %cst_89 = arith.constant dense<0.000000e+00> : vector<128x128xf32>
    %123 = tpu.matmul %120, %122, %cst_89 {dimension_numbers = #tpu.dot_dimension_numbers<[1], [0], [0], [1], [0, 0, 1, 1], [], []>} : vector<128x128xbf16>, vector<128x128xbf16>, vector<128x128xf32> -> vector<128x128xf32>
    %124 = arith.addf %118, %123 : vector<128x128xf32>
    %125 = vector.extract_strided_slice %101 {offsets = [1, 1, 0], sizes = [8, 16, 128], strides = [1, 1, 1]} : vector<10x24x128xbf16> to vector<8x16x128xbf16>
    %126 = vector.shape_cast %125 : vector<8x16x128xbf16> to vector<128x128xbf16>
    %c4_90 = arith.constant 4 : index
    %c0_91 = arith.constant 0 : index
    %c0_92 = arith.constant 0 : index
    %127 = vector.load %arg4[%c4_90, %c0_91, %c0_92] : memref<9x128x128xbf16, #tpu.memory_space<vmem>>, vector<1x128x128xbf16>
    %128 = vector.shape_cast %127 : vector<1x128x128xbf16> to vector<128x128xbf16>
    %cst_93 = arith.constant dense<0.000000e+00> : vector<128x128xf32>
    %129 = tpu.matmul %126, %128, %cst_93 {dimension_numbers = #tpu.dot_dimension_numbers<[1], [0], [0], [1], [0, 0, 1, 1], [], []>} : vector<128x128xbf16>, vector<128x128xbf16>, vector<128x128xf32> -> vector<128x128xf32>
    %130 = arith.addf %124, %129 : vector<128x128xf32>
    %131 = vector.extract_strided_slice %101 {offsets = [1, 2, 0], sizes = [8, 16, 128], strides = [1, 1, 1]} : vector<10x24x128xbf16> to vector<8x16x128xbf16>
    %132 = vector.shape_cast %131 : vector<8x16x128xbf16> to vector<128x128xbf16>
    %c5_94 = arith.constant 5 : index
    %c0_95 = arith.constant 0 : index
    %c0_96 = arith.constant 0 : index
    %133 = vector.load %arg4[%c5_94, %c0_95, %c0_96] : memref<9x128x128xbf16, #tpu.memory_space<vmem>>, vector<1x128x128xbf16>
    %134 = vector.shape_cast %133 : vector<1x128x128xbf16> to vector<128x128xbf16>
    %cst_97 = arith.constant dense<0.000000e+00> : vector<128x128xf32>
    %135 = tpu.matmul %132, %134, %cst_97 {dimension_numbers = #tpu.dot_dimension_numbers<[1], [0], [0], [1], [0, 0, 1, 1], [], []>} : vector<128x128xbf16>, vector<128x128xbf16>, vector<128x128xf32> -> vector<128x128xf32>
    %136 = arith.addf %130, %135 : vector<128x128xf32>
    %137 = vector.extract_strided_slice %101 {offsets = [2, 0, 0], sizes = [8, 16, 128], strides = [1, 1, 1]} : vector<10x24x128xbf16> to vector<8x16x128xbf16>
    %138 = vector.shape_cast %137 : vector<8x16x128xbf16> to vector<128x128xbf16>
    %c6_98 = arith.constant 6 : index
    %c0_99 = arith.constant 0 : index
    %c0_100 = arith.constant 0 : index
    %139 = vector.load %arg4[%c6_98, %c0_99, %c0_100] : memref<9x128x128xbf16, #tpu.memory_space<vmem>>, vector<1x128x128xbf16>
    %140 = vector.shape_cast %139 : vector<1x128x128xbf16> to vector<128x128xbf16>
    %cst_101 = arith.constant dense<0.000000e+00> : vector<128x128xf32>
    %141 = tpu.matmul %138, %140, %cst_101 {dimension_numbers = #tpu.dot_dimension_numbers<[1], [0], [0], [1], [0, 0, 1, 1], [], []>} : vector<128x128xbf16>, vector<128x128xbf16>, vector<128x128xf32> -> vector<128x128xf32>
    %142 = arith.addf %136, %141 : vector<128x128xf32>
    %143 = vector.extract_strided_slice %101 {offsets = [2, 1, 0], sizes = [8, 16, 128], strides = [1, 1, 1]} : vector<10x24x128xbf16> to vector<8x16x128xbf16>
    %144 = vector.shape_cast %143 : vector<8x16x128xbf16> to vector<128x128xbf16>
    %c7_102 = arith.constant 7 : index
    %c0_103 = arith.constant 0 : index
    %c0_104 = arith.constant 0 : index
    %145 = vector.load %arg4[%c7_102, %c0_103, %c0_104] : memref<9x128x128xbf16, #tpu.memory_space<vmem>>, vector<1x128x128xbf16>
    %146 = vector.shape_cast %145 : vector<1x128x128xbf16> to vector<128x128xbf16>
    %cst_105 = arith.constant dense<0.000000e+00> : vector<128x128xf32>
    %147 = tpu.matmul %144, %146, %cst_105 {dimension_numbers = #tpu.dot_dimension_numbers<[1], [0], [0], [1], [0, 0, 1, 1], [], []>} : vector<128x128xbf16>, vector<128x128xbf16>, vector<128x128xf32> -> vector<128x128xf32>
    %148 = arith.addf %142, %147 : vector<128x128xf32>
    %149 = vector.extract_strided_slice %101 {offsets = [2, 2, 0], sizes = [8, 16, 128], strides = [1, 1, 1]} : vector<10x24x128xbf16> to vector<8x16x128xbf16>
    %150 = vector.shape_cast %149 : vector<8x16x128xbf16> to vector<128x128xbf16>
    %c8_106 = arith.constant 8 : index
    %c0_107 = arith.constant 0 : index
    %c0_108 = arith.constant 0 : index
    %151 = vector.load %arg4[%c8_106, %c0_107, %c0_108] : memref<9x128x128xbf16, #tpu.memory_space<vmem>>, vector<1x128x128xbf16>
    %152 = vector.shape_cast %151 : vector<1x128x128xbf16> to vector<128x128xbf16>
    %cst_109 = arith.constant dense<0.000000e+00> : vector<128x128xf32>
    %153 = tpu.matmul %150, %152, %cst_109 {dimension_numbers = #tpu.dot_dimension_numbers<[1], [0], [0], [1], [0, 0, 1, 1], [], []>} : vector<128x128xbf16>, vector<128x128xbf16>, vector<128x128xf32> -> vector<128x128xf32>
    %154 = arith.addf %148, %153 : vector<128x128xf32>
    %c0_110 = arith.constant 0 : index
    %c0_111 = arith.constant 0 : index
    %155 = vector.load %arg5[%c0_110, %c0_111] : memref<1x128xf32, #tpu.memory_space<vmem>>, vector<1x128xf32>
    %156 = vector.broadcast %155 : vector<1x128xf32> to vector<128x128xf32>
    %157 = arith.addf %154, %156 : vector<128x128xf32>
    %cst_112 = arith.constant 0.000000e+00 : f32
    %158 = vector.broadcast %cst_112 : f32 to vector<128x128xf32>
    %159 = arith.maximumf %157, %158 : vector<128x128xf32>
    %160 = vector.shape_cast %159 : vector<128x128xf32> to vector<8x16x128xf32>
    %c0_113 = arith.constant 0 : index
    %c0_114 = arith.constant 0 : index
    %c0_115 = arith.constant 0 : index
    %c0_116 = arith.constant 0 : index
    %161 = vector.load %arg6[%c0_113, %c0_114, %c0_115, %c0_116] : memref<1x8x16x128xf32, #tpu.memory_space<vmem>>, vector<1x8x16x128xf32>
    %162 = vector.shape_cast %161 : vector<1x8x16x128xf32> to vector<8x16x128xf32>
    %163 = vector.shape_cast %160 : vector<8x16x128xf32> to vector<1x8x16x128xf32>
    tpu.vector_store %arg6[%c0_113, %c0_114, %c0_115, %c0_116], %163 {strides = array<i32>} : memref<1x8x16x128xf32, #tpu.memory_space<vmem>>, vector<1x8x16x128xf32>,
    return
  }
  func.func @transform_0(%arg0: i32) -> (i32, i32, i32, i32) {
    %c0_i32 = arith.constant 0 : i32
    %c0_i32_0 = arith.constant 0 : i32
    %c0_i32_1 = arith.constant 0 : i32
    %c0_i32_2 = arith.constant 0 : i32
    return %arg0, %c0_i32, %c0_i32_0, %c0_i32_1 : i32, i32, i32, i32
  }
  func.func @transform_1(%arg0: i32) -> (i32, i32, i32) {
    %c0_i32 = arith.constant 0 : i32
    %c0_i32_0 = arith.constant 0 : i32
    %c0_i32_1 = arith.constant 0 : i32
    %c0_i32_2 = arith.constant 0 : i32
    return %c0_i32, %c0_i32_0, %c0_i32_1 : i32, i32, i32
  }
  func.func @transform_2(%arg0: i32) -> (i32, i32) {
    %c0_i32 = arith.constant 0 : i32
    %c0_i32_0 = arith.constant 0 : i32
    %c0_i32_1 = arith.constant 0 : i32
    return %c0_i32, %c0_i32_0 : i32, i32
  }
  func.func @transform_3(%arg0: i32) -> (i32, i32, i32) {
    %c0_i32 = arith.constant 0 : i32
    %c0_i32_0 = arith.constant 0 : i32
    %c0_i32_1 = arith.constant 0 : i32
    %c0_i32_2 = arith.constant 0 : i32
    return %c0_i32, %c0_i32_0, %c0_i32_1 : i32, i32, i32
  }
  func.func @transform_4(%arg0: i32) -> (i32, i32) {
    %c0_i32 = arith.constant 0 : i32
    %c0_i32_0 = arith.constant 0 : i32
    %c0_i32_1 = arith.constant 0 : i32
    return %c0_i32, %c0_i32_0 : i32, i32
  }
  func.func @transform_5(%arg0: i32) -> (i32, i32, i32, i32) {
    %c0_i32 = arith.constant 0 : i32
    %c0_i32_0 = arith.constant 0 : i32
    %c0_i32_1 = arith.constant 0 : i32
    %c0_i32_2 = arith.constant 0 : i32
    return %arg0, %c0_i32, %c0_i32_0, %c0_i32_1 : i32, i32, i32, i32
  }
}

</mosaic_0001>

<llo_original>
// kernel: down_forward.1
$region0: #{down_forward.1}
  #allocation0 [shape = 'u32[]', space=smem, size = 0x4, offset = 0x4, fixed_abs, tag = 'smem constant byte address 0x4 - core index']
  #allocation1 [shape = 'u32[144,128]{1,0:T(1,128)}', space=vmem, size = 0x12000, scoped, tag = 'internal scratch']
  %s0 = inlined_call_operand.vmem [shape: bf16[4,12,26,4], index: 0, kind: input, shape index: {}]
  %s1 = inlined_call_operand.vmem [shape: bf16[9,4,128], index: 1, kind: input, shape index: {}]
  %s2 = inlined_call_operand.vmem [shape: f32[1,128], index: 2, kind: input, shape index: {}]
  %s3 = inlined_call_operand.vmem [shape: bf16[9,128,128], index: 3, kind: input, shape index: {}]
  %s4 = inlined_call_operand.vmem [shape: f32[1,128], index: 4, kind: input, shape index: {}]
  %s5 = inlined_call_operand.vmem [shape: f32[4,8,16,128], index: 5, kind: output, shape index: {}]
  %s6 = sld [smem:[#allocation0]]
  $region53: #{down_forward.1} parent=0
    _
  %s8 = ssub.s32 1, %s6
  %s9 = scalar_select 0, %s8, %s6
  loop: start=0, step=1, limit=6
  $region2: #{down_forward.1} parent=0 // loop_pre_header
    _
  $region3: #{down_forward.1} parent=0 // loop_header
    %s11 = sphi 0, %s15
    %p12 = scmp.ge.s32.totalorder %s11, 6
    %s21 = sphi 0, %s23
    %s24 = sphi 0, %s21
    %s25 = sphi 0, %s24
    %s41 = sphi 0, %s25
    %s45 = sphi 0, %s45
    %s47 = sphi 0, %s45
    %s48 = sphi 0, %s47
    %s62 = sphi 0, %s48
    %s66 = sphi 0, %s66
    %s68 = sphi 0, %s66
    %s69 = sphi 0, %s68
    %s83 = sphi 0, %s69
    %s87 = sphi 0, %s87
    %s89 = sphi 0, %s87
    %s90 = sphi 0, %s89
    %s104 = sphi 0, %s90
    %s108 = sphi 0, %s108
    %s110 = sphi 0, %s108
    %s111 = sphi 0, %s110
    %s125 = sphi 0, %s111
    %s131 = sphi 0, %s133
    %s134 = sphi 0, %s131
    %s135 = sphi 0, %s134
    %s151 = sphi 0, %s135
  $region4: #{down_forward.1} parent=0 // loop_header_branch
    %14 = sbr.rel (%p12) target = $region8
  $region5: #{down_forward.1} parent=0 // loop_body
    %s16 = ssub.s32 %s11, 1
    %s17 = ssub.s32 %s11, 2
    %s18 = sadd.s32 %s11, 1
    %s19 = ssub.s32 %s11, %s18
    %p20 = scmp.eq.s32.totalorder %s19, 0
    %s22 = sadd.s32 %s21, 1
    %s23 = scalar_select %p20, %s21, %s22
    %p26 = pneg %p20
    %p27 = scmp.eq.s32.totalorder %s11, 3
    %p28 = por %p26, %p27
    %p29 = scmp.ne.s32.totalorder %s21, %s24
    %p30 = scmp.eq.s32.totalorder %s11, 0
    %p31 = por %p29, %p30
    %p32 = scmp.ne.s32.totalorder %s21, %s24
    %p33 = scmp.eq.s32.totalorder %s16, 3
    %p34 = por %p32, %p33
    %p35 = scmp.ne.s32.totalorder %s24, %s25
    %p36 = scmp.eq.s32.totalorder %s16, 0
    %p37 = por %p35, %p36
    %p38 = scmp.ne.s32.totalorder %s24, %s25
    %p39 = scmp.eq.s32.totalorder %s17, 3
    %p40 = por %p38, %p39
    %p42 = scmp.ne.s32.totalorder %s25, %s41
    %p43 = scmp.eq.s32.totalorder %s17, 0
    %p44 = por %p42, %p43
    %s46 = sadd.s32 %s45, 1
    %p49 = scmp.eq.s32.totalorder %s11, 3
    %p50 = scmp.ne.s32.totalorder %s45, %s47
    %p51 = scmp.eq.s32.totalorder %s11, 0
    %p52 = por %p50, %p51
    %p53 = scmp.ne.s32.totalorder %s45, %s47
    %p54 = scmp.eq.s32.totalorder %s16, 3
    %p55 = por %p53, %p54
    %p56 = scmp.ne.s32.totalorder %s47, %s48
    %p57 = scmp.eq.s32.totalorder %s16, 0
    %p58 = por %p56, %p57
    %p59 = scmp.ne.s32.totalorder %s47, %s48
    %p60 = scmp.eq.s32.totalorder %s17, 3
    %p61 = por %p59, %p60
    %p63 = scmp.ne.s32.totalorder %s48, %s62
    %p64 = scmp.eq.s32.totalorder %s17, 0
    %p65 = por %p63, %p64
    %s67 = sadd.s32 %s66, 1
    %p70 = scmp.eq.s32.totalorder %s11, 3
    %p71 = scmp.ne.s32.totalorder %s66, %s68
    %p72 = scmp.eq.s32.totalorder %s11, 0
    %p73 = por %p71, %p72
    %p74 = scmp.ne.s32.totalorder %s66, %s68
    %p75 = scmp.eq.s32.totalorder %s16, 3
    %p76 = por %p74, %p75
    %p77 = scmp.ne.s32.totalorder %s68, %s69
    %p78 = scmp.eq.s32.totalorder %s16, 0
    %p79 = por %p77, %p78
    %p80 = scmp.ne.s32.totalorder %s68, %s69
    %p81 = scmp.eq.s32.totalorder %s17, 3
    %p82 = por %p80, %p81
    %p84 = scmp.ne.s32.totalorder %s69, %s83
    %p85 = scmp.eq.s32.totalorder %s17, 0
    %p86 = por %p84, %p85
    %s88 = sadd.s32 %s87, 1
    %p91 = scmp.eq.s32.totalorder %s11, 3
    %p92 = scmp.ne.s32.totalorder %s87, %s89
    %p93 = scmp.eq.s32.totalorder %s11, 0
    %p94 = por %p92, %p93
    %p95 = scmp.ne.s32.totalorder %s87, %s89
    %p96 = scmp.eq.s32.totalorder %s16, 3
    %p97 = por %p95, %p96
    %p98 = scmp.ne.s32.totalorder %s89, %s90
    %p99 = scmp.eq.s32.totalorder %s16, 0
    %p100 = por %p98, %p99
    %p101 = scmp.ne.s32.totalorder %s89, %s90
    %p102 = scmp.eq.s32.totalorder %s17, 3
    %p103 = por %p101, %p102
    %p105 = scmp.ne.s32.totalorder %s90, %s104
    %p106 = scmp.eq.s32.totalorder %s17, 0
    %p107 = por %p105, %p106
    %s109 = sadd.s32 %s108, 1
    %p112 = scmp.eq.s32.totalorder %s11, 3
    %p113 = scmp.ne.s32.totalorder %s108, %s110
    %p114 = scmp.eq.s32.totalorder %s11, 0
    %p115 = por %p113, %p114
    %p116 = scmp.ne.s32.totalorder %s108, %s110
    %p117 = scmp.eq.s32.totalorder %s16, 3
    %p118 = por %p116, %p117
    %p119 = scmp.ne.s32.totalorder %s110, %s111
    %p120 = scmp.eq.s32.totalorder %s16, 0
    %p121 = por %p119, %p120
    %p122 = scmp.ne.s32.totalorder %s110, %s111
    %p123 = scmp.eq.s32.totalorder %s17, 3
    %p124 = por %p122, %p123
    %p126 = scmp.ne.s32.totalorder %s111, %s125
    %p127 = scmp.eq.s32.totalorder %s17, 0
    %p128 = por %p126, %p127
    %s129 = ssub.s32 %s11, %s18
    %p130 = scmp.eq.s32.totalorder %s129, 0
    %s132 = sadd.s32 %s131, 1
    %s133 = scalar_select %p130, %s131, %s132
    %p136 = pneg %p130
    %p137 = scmp.eq.s32.totalorder %s11, 3
    %p138 = por %p136, %p137
    %p139 = scmp.ne.s32.totalorder %s131, %s134
    %p140 = scmp.eq.s32.totalorder %s11, 0
    %p141 = por %p139, %p140
    %p142 = scmp.ne.s32.totalorder %s131, %s134
    %p143 = scmp.eq.s32.totalorder %s16, 3
    %p144 = por %p142, %p143
    %p145 = scmp.ne.s32.totalorder %s134, %s135
    %p146 = scmp.eq.s32.totalorder %s16, 0
    %p147 = por %p145, %p146
    %p148 = scmp.ne.s32.totalorder %s134, %s135
    %p149 = scmp.eq.s32.totalorder %s17, 3
    %p150 = por %p148, %p149
    %p152 = scmp.ne.s32.totalorder %s135, %s151
    %p153 = scmp.eq.s32.totalorder %s17, 0
    %p154 = por %p152, %p153
    %p155 = scmp.le.s32.totalorder 1, %s11
    %p156 = scmp.lt.s32.totalorder %s11, 5
    %p157 = pnand %p155, %p156
    %p158 = pneg %p157
    // Predicated region
    $region9: #{down_forward.1} parent=5 // pred_check
      _
    $region10: #{down_forward.1} parent=5 // pred_check_branch
      %160 = sbr.rel (%p157) target = $region12
    $region11: #{down_forward.1} parent=5 // pred_region
      %s161 = ssub.s32 %s11, 1
      // Predicated region
      $region13: #{down_forward.1} parent=11 // pred_check
        %p162 = pneg %p58
      $region14: #{down_forward.1} parent=11 // pred_check_branch
        %164 = sbr.rel (%p162) target = $region16
      $region15: #{down_forward.1} parent=11 // pred_region
        _
      $region16: #{down_forward.1} parent=11 // pred_fallthru
        _
      // Predicated region
      $region17: #{down_forward.1} parent=11 // pred_check
        %p165 = pneg %p79
      $region18: #{down_forward.1} parent=11 // pred_check_branch
        %167 = sbr.rel (%p165) target = $region20
      $region19: #{down_forward.1} parent=11 // pred_region
        _
      $region20: #{down_forward.1} parent=11 // pred_fallthru
        _
      // Predicated region
      $region21: #{down_forward.1} parent=11 // pred_check
        %p168 = pneg %p100
      $region22: #{down_forward.1} parent=11 // pred_check_branch
        %170 = sbr.rel (%p168) target = $region24
      $region23: #{down_forward.1} parent=11 // pred_region
        _
      $region24: #{down_forward.1} parent=11 // pred_fallthru
        _
      // Predicated region
      $region25: #{down_forward.1} parent=11 // pred_check
        %p171 = pneg %p121
      $region26: #{down_forward.1} parent=11 // pred_check_branch
        %173 = sbr.rel (%p171) target = $region28
      $region27: #{down_forward.1} parent=11 // pred_region
        _
      $region28: #{down_forward.1} parent=11 // pred_fallthru
        _
    $region12: #{down_forward.1} parent=5 // pred_fallthru
      _
    %p174 = scmp.lt.s32.totalorder %s11, 4
    // Predicated region
    $region29: #{down_forward.1} parent=5 // pred_check
      %p175 = pneg %p174
    $region30: #{down_forward.1} parent=5 // pred_check_branch
      %177 = sbr.rel (%p175) target = $region32
    $region31: #{down_forward.1} parent=5 // pred_region
      // Predicated region
      $region33: #{down_forward.1} parent=31 // pred_check
        %p178 = pneg %p31
      $region34: #{down_forward.1} parent=31 // pred_check_branch
        %180 = sbr.rel (%p178) target = $region36
      $region35: #{down_forward.1} parent=31 // pred_region
        %p181 = scmp.lt.s32.totalorder %s11, 3
        %s182 = scalar_select %p181, %s11, 3
        %s183 = smul.addr %s182, 48
        %s184 = smul.addr %s183, 4
        %s185 = scalar_lea.vmem %s0, %s184
      $region36: #{down_forward.1} parent=31 // pred_fallthru
        _
    $region32: #{down_forward.1} parent=5 // pred_fallthru
      _
    %p186 = scmp.le.s32.totalorder 1, %s11
    %p187 = scmp.lt.s32.totalorder %s11, 5
    %p188 = pnand %p186, %p187
    %p189 = pneg %p188
    // Predicated region
    $region37: #{down_forward.1} parent=5 // pred_check
      _
    $region38: #{down_forward.1} parent=5 // pred_check_branch
      %191 = sbr.rel (%p188) target = $region40
    $region39: #{down_forward.1} parent=5 // pred_region
      %s192 = ssub.s32 %s11, 1
      %p193 = scmp.lt.s32.totalorder %s16, 3
      %s194 = scalar_select %p193, %s16, 3
      %s195 = smul.addr %s194, 48
      %s196 = smul.addr %s195, 4
      %s197 = scalar_lea.vmem %s0, %s196
      %p198 = pneg %p37
      %p199 = pneg %p34
      %p200 = pneg %p58
      %p201 = pneg %p55
      %p202 = pneg %p79
      %p203 = pneg %p76
      %p204 = pneg %p100
      %p205 = pneg %p97
      %p206 = pneg %p121
      %p207 = pneg %p118
      %p208 = pneg %p147
      %p209 = pneg %p144
      %p210 = scmp.lt.s32.totalorder %s16, 3
      %s211 = scalar_select %p210, %s16, 3
      %s212 = smul.addr %s211, 16
      %s213 = smul.addr %s212, 8
      %s214 = scalar_lea.vmem %s5, %s213
      %p215 = scmp.lt.s32.totalorder %s16, 3
      %s216 = scalar_select %p215, %s16, 3
      %s217 = smul.addr %s216, 48
      %s218 = smul.addr %s217, 4
      %s219 = scalar_lea.vmem %s0, %s218
      %p220 = scmp.lt.s32.totalorder %s16, 3
      %s221 = scalar_select %p220, %s16, 3
      %s222 = smul.addr %s221, 16
      %s223 = smul.addr %s222, 8
      %s224 = scalar_lea.vmem %s5, %s223
      %p226 = scmp.lt.s32.totalorder %s16, 0
      %s227 = ssub.s32 0, %s16
      %s228 = scalar_select %p226, %s227, %s16
      %s229 = sand.u32 %s228, 1
      %s230 = ssub.s32 0, %s229
      %s231 = scalar_select %p226, %s230, %s229
      %p232 = scmp.ne.s32.totalorder %s231, 0
      %p233 = scmp.lt.s32.totalorder %s231, 0
      %p234 = pnand %p233, %p232
      %p235 = pneg %p234
      %s236 = sadd.s32 %s231, 2
      %s237 = scalar_select %p235, %s236, %s231
      %s238 = smul.u32 %s237, 8
      %v239 = vld [vmem:[%s219] sm:$0xf]
      %v240 = vld [vmem:[%s219 + $0x4] sm:$0xf]
      %v241 = vld [vmem:[%s219 + $0x8] sm:$0xf]
      %v242 = vld [vmem:[%s219 + $0x10] sm:$0xf]
      %v243 = vld [vmem:[%s219 + $0x14] sm:$0xf]
      %v244 = vld [vmem:[%s219 + $0x18] sm:$0xf]
      %v245 = vld [vmem:[%s219 + $0x20] sm:$0xf]
      %v246 = vld [vmem:[%s219 + $0x24] sm:$0xf]
      %v247 = vld [vmem:[%s219 + $0x28] sm:$0xf]
      %v248 = vld [vmem:[%s219 + $0x30] sm:$0xf]
      %v249 = vld [vmem:[%s219 + $0x34] sm:$0xf]
      %v250 = vld [vmem:[%s219 + $0x38] sm:$0xf]
      %v251 = vld [vmem:[%s219 + $0x40] sm:$0xf]
      %v252 = vld [vmem:[%s219 + $0x44] sm:$0xf]
      %v253 = vld [vmem:[%s219 + $0x48] sm:$0xf]
      %v254 = vld [vmem:[%s219 + $0x50] sm:$0xf]
      %v255 = vld [vmem:[%s219 + $0x54] sm:$0xf]
      %v256 = vld [vmem:[%s219 + $0x58] sm:$0xf]
      %v257 = vld [vmem:[%s219 + $0x60] sm:$0xf]
      %v258 = vld [vmem:[%s219 + $0x64] sm:$0xf]
      %v259 = vld [vmem:[%s219 + $0x68] sm:$0xf]
      %v260 = vld [vmem:[%s219 + $0x70] sm:$0xf]
      %v261 = vld [vmem:[%s219 + $0x74] sm:$0xf]
      %v262 = vld [vmem:[%s219 + $0x78] sm:$0xf]
      %v263 = vld [vmem:[%s219 + $0x80] sm:$0xf]
      %v264 = vld [vmem:[%s219 + $0x84] sm:$0xf]
      %v265 = vld [vmem:[%s219 + $0x88] sm:$0xf]
      %v266 = vld [vmem:[%s219 + $0x90] sm:$0xf]
      %v267 = vld [vmem:[%s219 + $0x94] sm:$0xf]
      %v268 = vld [vmem:[%s219 + $0x98] sm:$0xf]
      %v269 = vld [vmem:[%s1] sm:$0x3]
      %v270 = vld [vmem:[%s219 + $0xc] sm:$0x1]
      %v271 = vld [vmem:[%s219 + $0x1c] sm:$0x1]
      %v272 = vld [vmem:[%s219 + $0x2c] sm:$0x1]
      %v273 = vld [vmem:[%s219 + $0x3c] sm:$0x1]
      %v274 = vld [vmem:[%s219 + $0x4c] sm:$0x1]
      %v275 = vld [vmem:[%s219 + $0x5c] sm:$0x1]
      %v276 = vld [vmem:[%s219 + $0x6c] sm:$0x1]
      %v277 = vld [vmem:[%s219 + $0x7c] sm:$0x1]
      %v278 = vld [vmem:[%s219 + $0x8c] sm:$0x1]
      %v279 = vld [vmem:[%s219 + $0x9c] sm:$0x1]
      %vm280 = vsmask.f32 3328
      %vm281 = vsmask.f32 7440
      %vm282 = vmor %vm280, %vm281
      %v284 = vshrl.u32 %v239, 16
      %v286 = vrot.slane %v284, 4
      %v287 = vshll.u32 %v239, 16
      %v289 = vrot.slane %v287, 5
      %v290 = vor.u32 %v286, %v289
      %v291 = vrot.slane %v290, 4
      %v293 = vshll.u32 %v240, 16
      %v295 = vrot.slane %v293, 5
      %v296 = vsel %vm282, %v291, %v295
      %v297 = vshrl.u32 %v240, 16
      %v299 = vrot.slane %v297, 4
      %v300 = vor.u32 %v299, %v295
      %v301 = vrot.slane %v300, 4
      %v303 = vshll.u32 %v241, 16
      %v305 = vrot.slane %v303, 5
      %v306 = vsel %vm282, %v301, %v305
      %v307 = vshrl.u32 %v241, 16
      %v309 = vrot.slane %v307, 4
      %v310 = vor.u32 %v309, %v305
      %v311 = vrot.slane %v310, 4
      %v313 = vshll.u32 %v270, 16
      %v315 = vrot.slane %v313, 5
      %v316 = vsel %vm282, %v311, %v315
      %v318 = vshrl.u32 %v242, 16
      %v320 = vrot.slane %v318, 4
      %v321 = vshll.u32 %v242, 16
      %v323 = vrot.slane %v321, 5
      %v324 = vor.u32 %v320, %v323
      %v325 = vrot.slane %v324, 4
      %v327 = vshll.u32 %v243, 16
      %v329 = vrot.slane %v327, 5
      %v330 = vsel %vm282, %v325, %v329
      %v331 = vshrl.u32 %v243, 16
      %v333 = vrot.slane %v331, 4
      %v334 = vor.u32 %v333, %v329
      %v335 = vrot.slane %v334, 4
      %v337 = vshll.u32 %v244, 16
      %v339 = vrot.slane %v337, 5
      %v340 = vsel %vm282, %v335, %v339
      %v341 = vshrl.u32 %v244, 16
      %v343 = vrot.slane %v341, 4
      %v344 = vor.u32 %v343, %v339
      %v345 = vrot.slane %v344, 4
      %v347 = vshll.u32 %v271, 16
      %v349 = vrot.slane %v347, 5
      %v350 = vsel %vm282, %v345, %v349
      %v352 = vshrl.u32 %v245, 16
      %v354 = vrot.slane %v352, 4
      %v355 = vshll.u32 %v245, 16
      %v357 = vrot.slane %v355, 5
      %v358 = vor.u32 %v354, %v357
      %v359 = vrot.slane %v358, 4
      %v361 = vshll.u32 %v246, 16
      %v363 = vrot.slane %v361, 5
      %v364 = vsel %vm282, %v359, %v363
      %v365 = vshrl.u32 %v246, 16
      %v367 = vrot.slane %v365, 4
      %v368 = vor.u32 %v367, %v363
      %v369 = vrot.slane %v368, 4
      %v371 = vshll.u32 %v247, 16
      %v373 = vrot.slane %v371, 5
      %v374 = vsel %vm282, %v369, %v373
      %v375 = vshrl.u32 %v247, 16
      %v377 = vrot.slane %v375, 4
      %v378 = vor.u32 %v377, %v373
      %v379 = vrot.slane %v378, 4
      %v381 = vshll.u32 %v272, 16
      %v383 = vrot.slane %v381, 5
      %v384 = vsel %vm282, %v379, %v383
      %v386 = vshrl.u32 %v248, 16
      %v388 = vrot.slane %v386, 4
      %v389 = vshll.u32 %v248, 16
      %v391 = vrot.slane %v389, 5
      %v392 = vor.u32 %v388, %v391
      %v393 = vrot.slane %v392, 4
      %v395 = vshll.u32 %v249, 16
      %v397 = vrot.slane %v395, 5
      %v398 = vsel %vm282, %v393, %v397
      %v399 = vshrl.u32 %v249, 16
      %v401 = vrot.slane %v399, 4
      %v402 = vor.u32 %v401, %v397
      %v403 = vrot.slane %v402, 4
      %v405 = vshll.u32 %v250, 16
      %v407 = vrot.slane %v405, 5
      %v408 = vsel %vm282, %v403, %v407
      %v409 = vshrl.u32 %v250, 16
      %v411 = vrot.slane %v409, 4
      %v412 = vor.u32 %v411, %v407
      %v413 = vrot.slane %v412, 4
      %v415 = vshll.u32 %v273, 16
      %v417 = vrot.slane %v415, 5
      %v418 = vsel %vm282, %v413, %v417
      %v420 = vshrl.u32 %v251, 16
      %v422 = vrot.slane %v420, 4
      %v423 = vshll.u32 %v251, 16
      %v425 = vrot.slane %v423, 5
      %v426 = vor.u32 %v422, %v425
      %v427 = vrot.slane %v426, 4
      %v429 = vshll.u32 %v252, 16
      %v431 = vrot.slane %v429, 5
      %v432 = vsel %vm282, %v427, %v431
      %v433 = vshrl.u32 %v252, 16
      %v435 = vrot.slane %v433, 4
      %v436 = vor.u32 %v435, %v431
      %v437 = vrot.slane %v436, 4
      %v439 = vshll.u32 %v253, 16
      %v441 = vrot.slane %v439, 5
      %v442 = vsel %vm282, %v437, %v441
      %v443 = vshrl.u32 %v253, 16
      %v445 = vrot.slane %v443, 4
      %v446 = vor.u32 %v445, %v441
      %v447 = vrot.slane %v446, 4
      %v449 = vshll.u32 %v274, 16
      %v451 = vrot.slane %v449, 5
      %v452 = vsel %vm282, %v447, %v451
      %v454 = vshrl.u32 %v254, 16
      %v456 = vrot.slane %v454, 4
      %v457 = vshll.u32 %v254, 16
      %v459 = vrot.slane %v457, 5
      %v460 = vor.u32 %v456, %v459
      %v461 = vrot.slane %v460, 4
      %v463 = vshll.u32 %v255, 16
      %v465 = vrot.slane %v463, 5
      %v466 = vsel %vm282, %v461, %v465
      %v467 = vshrl.u32 %v255, 16
      %v469 = vrot.slane %v467, 4
      %v470 = vor.u32 %v469, %v465
      %v471 = vrot.slane %v470, 4
      %v473 = vshll.u32 %v256, 16
      %v475 = vrot.slane %v473, 5
      %v476 = vsel %vm282, %v471, %v475
      %v477 = vshrl.u32 %v256, 16
      %v479 = vrot.slane %v477, 4
      %v480 = vor.u32 %v479, %v475
      %v481 = vrot.slane %v480, 4
      %v483 = vshll.u32 %v275, 16
      %v485 = vrot.slane %v483, 5
      %v486 = vsel %vm282, %v481, %v485
      %v488 = vshrl.u32 %v257, 16
      %v490 = vrot.slane %v488, 4
      %v491 = vshll.u32 %v257, 16
      %v493 = vrot.slane %v491, 5
      %v494 = vor.u32 %v490, %v493
      %v495 = vrot.slane %v494, 4
      %v497 = vshll.u32 %v258, 16
      %v499 = vrot.slane %v497, 5
      %v500 = vsel %vm282, %v495, %v499
      %v501 = vshrl.u32 %v258, 16
      %v503 = vrot.slane %v501, 4
      %v504 = vor.u32 %v503, %v499
      %v505 = vrot.slane %v504, 4
      %v507 = vshll.u32 %v259, 16
      %v509 = vrot.slane %v507, 5
      %v510 = vsel %vm282, %v505, %v509
      %v511 = vshrl.u32 %v259, 16
      %v513 = vrot.slane %v511, 4
      %v514 = vor.u32 %v513, %v509
      %v515 = vrot.slane %v514, 4
      %v517 = vshll.u32 %v276, 16
      %v519 = vrot.slane %v517, 5
      %v520 = vsel %vm282, %v515, %v519
      %v522 = vshrl.u32 %v260, 16
      %v524 = vrot.slane %v522, 4
      %v525 = vshll.u32 %v260, 16
      %v527 = vrot.slane %v525, 5
      %v528 = vor.u32 %v524, %v527
      %v529 = vrot.slane %v528, 4
      %v531 = vshll.u32 %v261, 16
      %v533 = vrot.slane %v531, 5
      %v534 = vsel %vm282, %v529, %v533
      %v535 = vshrl.u32 %v261, 16
      %v537 = vrot.slane %v535, 4
      %v538 = vor.u32 %v537, %v533
      %v539 = vrot.slane %v538, 4
      %v541 = vshll.u32 %v262, 16
      %v543 = vrot.slane %v541, 5
      %v544 = vsel %vm282, %v539, %v543
      %v545 = vshrl.u32 %v262, 16
      %v547 = vrot.slane %v545, 4
      %v548 = vor.u32 %v547, %v543
      %v549 = vrot.slane %v548, 4
      %v551 = vshll.u32 %v277, 16
      %v553 = vrot.slane %v551, 5
      %v554 = vsel %vm282, %v549, %v553
      %v556 = vshrl.u32 %v263, 16
      %v558 = vrot.slane %v556, 4
      %v559 = vshll.u32 %v263, 16
      %v561 = vrot.slane %v559, 5
      %v562 = vor.u32 %v558, %v561
      %v563 = vrot.slane %v562, 4
      %v565 = vshll.u32 %v264, 16
      %v567 = vrot.slane %v565, 5
      %v568 = vsel %vm282, %v563, %v567
      %v569 = vshrl.u32 %v264, 16
      %v571 = vrot.slane %v569, 4
      %v572 = vor.u32 %v571, %v567
      %v573 = vrot.slane %v572, 4
      %v575 = vshll.u32 %v265, 16
      %v577 = vrot.slane %v575, 5
      %v578 = vsel %vm282, %v573, %v577
      %v579 = vshrl.u32 %v265, 16
      %v581 = vrot.slane %v579, 4
      %v582 = vor.u32 %v581, %v577
      %v583 = vrot.slane %v582, 4
      %v585 = vshll.u32 %v278, 16
      %v587 = vrot.slane %v585, 5
      %v588 = vsel %vm282, %v583, %v587
      %v590 = vshrl.u32 %v266, 16
      %v592 = vrot.slane %v590, 4
      %v593 = vshll.u32 %v266, 16
      %v595 = vrot.slane %v593, 5
      %v596 = vor.u32 %v592, %v595
      %v597 = vrot.slane %v596, 4
      %v599 = vshll.u32 %v267, 16
      %v601 = vrot.slane %v599, 5
      %v602 = vsel %vm282, %v597, %v601
      %v603 = vshrl.u32 %v267, 16
      %v605 = vrot.slane %v603, 4
      %v606 = vor.u32 %v605, %v601
      %v607 = vrot.slane %v606, 4
      %v609 = vshll.u32 %v268, 16
      %v611 = vrot.slane %v609, 5
      %v612 = vsel %vm282, %v607, %v611
      %v613 = vshrl.u32 %v268, 16
      %v615 = vrot.slane %v613, 4
      %v616 = vor.u32 %v615, %v611
      %v617 = vrot.slane %v616, 4
      %v619 = vshll.u32 %v279, 16
      %v621 = vrot.slane %v619, 5
      %v622 = vsel %vm282, %v617, %v621
      %s623 = scalar_lea.vmem %s1, 2
      %v624 = vld [vmem:[%s623] sm:$0x3]
      %v625 = vunpack.c.l.b16 %v296
      %v626 = vunpack.c.l.b16 %v306
      %v627 = vunpack.c.l.b16 %v316
      %v628 = vunpack.c.l.b16 %v330
      %v629 = vunpack.c.l.b16 %v340
      %v630 = vunpack.c.l.b16 %v350
      %v631 = vunpack.c.l.b16 %v364
      %v632 = vunpack.c.l.b16 %v374
      %v633 = vunpack.c.l.b16 %v384
      %v634 = vunpack.c.l.b16 %v398
      %v635 = vunpack.c.l.b16 %v408
      %v636 = vunpack.c.l.b16 %v418
      %v637 = vunpack.c.l.b16 %v432
      %v638 = vunpack.c.l.b16 %v442
      %v639 = vunpack.c.l.b16 %v452
      %v640 = vunpack.c.l.b16 %v466
      %v641 = vunpack.c.l.b16 %v476
      %v642 = vunpack.c.l.b16 %v486
      %v643 = vunpack.c.l.b16 %v500
      %v644 = vunpack.c.l.b16 %v510
      %v645 = vunpack.c.l.b16 %v520
      %v646 = vunpack.c.l.b16 %v534
      %v647 = vunpack.c.l.b16 %v544
      %v648 = vunpack.c.l.b16 %v554
      %v649 = vunpack.c.l.b16 %v568
      %v650 = vunpack.c.l.b16 %v578
      %v651 = vunpack.c.l.b16 %v588
      %v652 = vunpack.c.l.b16 %v602
      %v653 = vunpack.c.l.b16 %v612
      %v654 = vunpack.c.l.b16 %v622
      %v655 = vpack.c.b16 %v626, %v625
      %v656 = vpack.c.b16 %v628, %v627
      %v657 = vpack.c.b16 %v630, %v629
      %v658 = vpack.c.b16 %v632, %v631
      %v659 = vpack.c.b16 %v634, %v633
      %v660 = vpack.c.b16 %v636, %v635
      %v661 = vpack.c.b16 %v638, %v637
      %v662 = vpack.c.b16 %v640, %v639
      %v663 = vpack.c.b16 %v642, %v641
      %v664 = vpack.c.b16 %v644, %v643
      %v665 = vpack.c.b16 %v646, %v645
      %v666 = vpack.c.b16 %v648, %v647
      %v667 = vpack.c.b16 %v650, %v649
      %v668 = vpack.c.b16 %v652, %v651
      %v669 = vpack.c.b16 %v654, %v653
      %vm670 = vcmask 31744
      %v672 = vsel %vm670, %v655, 0
      %v675 = vsel %vm670, %v656, 0
      %v678 = vsel %vm670, %v657, 0
      %v681 = vsel %vm670, %v658, 0
      %v684 = vsel %vm670, %v659, 0
      %v687 = vsel %vm670, %v660, 0
      %v690 = vsel %vm670, %v661, 0
      %v693 = vsel %vm670, %v662, 0
      %v696 = vsel %vm670, %v663, 0
      %v699 = vsel %vm670, %v664, 0
      %v702 = vsel %vm670, %v665, 0
      %v705 = vsel %vm670, %v666, 0
      %v708 = vsel %vm670, %v667, 0
      %v711 = vsel %vm670, %v668, 0
      %v714 = vsel %vm670, %v669, 0
      %vm716 = vcmask 1041408
      %v718 = vsel %vm716, %v624, 0
      %720 = vmatprep.subr.bf16.mxu0 0
      %721 = vmatpush1.bf16.msra.mxu0 %v718
      %722 = vmatprep.subr.bf16.mxu0 0
      %723 = vmatpush1.bf16.msra.mxu0 0
      %724 = vmatprep.subr.bf16.mxu0 0
      %725 = vmatpush1.bf16.msra.mxu0 0
      %726 = vmatprep.subr.bf16.mxu0 0
      %727 = vmatpush1.bf16.msra.mxu0 0
      %728 = vmatprep.subr.bf16.mxu0 0
      %729 = vmatpush1.bf16.msra.mxu0 0
      %730 = vmatprep.subr.bf16.mxu0 0
      %731 = vmatpush1.bf16.msra.mxu0 0
      %732 = vmatprep.subr.bf16.mxu0 0
      %733 = vmatpush1.bf16.msra.mxu0 0
      %734 = vmatprep.subr.bf16.mxu0 0
      %735 = vmatpush1.bf16.msra.mxu0 0
      %736 = vmatprep.subr.bf16.mxu0 0
      %737 = vmatpush1.bf16.msra.mxu0 0
      %738 = vmatprep.subr.bf16.mxu0 0
      %739 = vmatpush1.bf16.msra.mxu0 0
      %740 = vmatprep.subr.bf16.mxu0 0
      %741 = vmatpush1.bf16.msra.mxu0 0
      %742 = vmatprep.subr.bf16.mxu0 0
      %743 = vmatpush1.bf16.msra.mxu0 0
      %744 = vmatprep.subr.bf16.mxu0 0
      %745 = vmatpush1.bf16.msra.mxu0 0
      %746 = vmatprep.subr.bf16.mxu0 0
      %747 = vmatpush1.bf16.msra.mxu0 0
      %748 = vmatprep.subr.bf16.mxu0 0
      %749 = vmatpush1.bf16.msra.mxu0 0
      %750 = vmatprep.subr.bf16.mxu0 0
      %751 = vmatpush1.bf16.msra.mxu0 0
      %752 = vmatprep.mubr.bf16.mxu0 0
      %753 = vmatmul.mubr.bf16.gmra.mrb[0].mxu0 %v672
      %v754 = vpop.f32.mrb[0].mxu0
      %v755 = vadd.f32 0.0, %v754
      %v756 = vpop.f32.mrb[0].mxu0
      %v757 = vpop.f32.mrb[0].mxu0
      %v758 = vadd.f32 0.0, %v757
      %v759 = vpop.f32.mrb[0].mxu0
      %760 = vmatprep.mubr.bf16.mxu0 0
      %761 = vmatmul.mubr.bf16.gmra.mrb[0].mxu0 %v675
      %v762 = vpop.f32.mrb[0].mxu0
      %v763 = vadd.f32 0.0, %v762
      %v764 = vpop.f32.mrb[0].mxu0
      %v765 = vpop.f32.mrb[0].mxu0
      %v766 = vadd.f32 0.0, %v765
      %v767 = vpop.f32.mrb[0].mxu0
      %768 = vmatprep.mubr.bf16.mxu0 0
      %769 = vmatmul.mubr.bf16.gmra.mrb[0].mxu0 %v678
      %v770 = vpop.f32.mrb[0].mxu0
      %v771 = vadd.f32 0.0, %v770
      %v772 = vpop.f32.mrb[0].mxu0
      %v773 = vpop.f32.mrb[0].mxu0
      %v774 = vadd.f32 0.0, %v773
      %v775 = vpop.f32.mrb[0].mxu0
      %776 = vmatprep.mubr.bf16.mxu0 0
      %777 = vmatmul.mubr.bf16.gmra.mrb[0].mxu0 %v681
      %v778 = vpop.f32.mrb[0].mxu0
      %v779 = vadd.f32 0.0, %v778
      %v780 = vpop.f32.mrb[0].mxu0
      %v781 = vpop.f32.mrb[0].mxu0
      %v782 = vadd.f32 0.0, %v781
      %v783 = vpop.f32.mrb[0].mxu0
      %784 = vmatprep.mubr.bf16.mxu0 0
      %785 = vmatmul.mubr.bf16.gmra.mrb[0].mxu0 %v684
      %v786 = vpop.f32.mrb[0].mxu0
      %v787 = vadd.f32 0.0, %v786
      %v788 = vpop.f32.mrb[0].mxu0
      %v789 = vpop.f32.mrb[0].mxu0
      %v790 = vadd.f32 0.0, %v789
      %v791 = vpop.f32.mrb[0].mxu0
      %792 = vmatprep.mubr.bf16.mxu0 0
      %793 = vmatmul.mubr.bf16.gmra.mrb[0].mxu0 %v687
      %v794 = vpop.f32.mrb[0].mxu0
      %v795 = vadd.f32 0.0, %v794
      %v796 = vpop.f32.mrb[0].mxu0
      %v797 = vpop.f32.mrb[0].mxu0
      %v798 = vadd.f32 0.0, %v797
      %v799 = vpop.f32.mrb[0].mxu0
      %800 = vmatprep.mubr.bf16.mxu0 0
      %801 = vmatmul.mubr.bf16.gmra.mrb[0].mxu0 %v690
      %v802 = vpop.f32.mrb[0].mxu0
      %v803 = vadd.f32 0.0, %v802
      %v804 = vpop.f32.mrb[0].mxu0
      %v805 = vpop.f32.mrb[0].mxu0
      %v806 = vadd.f32 0.0, %v805
      %v807 = vpop.f32.mrb[0].mxu0
      %808 = vmatprep.mubr.bf16.mxu0 0
      %809 = vmatmul.mubr.bf16.gmra.mrb[0].mxu0 %v693
      %v810 = vpop.f32.mrb[0].mxu0
      %v811 = vadd.f32 0.0, %v810
      %v812 = vpop.f32.mrb[0].mxu0
      %v813 = vpop.f32.mrb[0].mxu0
      %v814 = vadd.f32 0.0, %v813
      %v815 = vpop.f32.mrb[0].mxu0
      %816 = vmatprep.mubr.bf16.mxu0 0
      %817 = vmatmul.mubr.bf16.gmra.mrb[0].mxu0 %v696
      %v818 = vpop.f32.mrb[0].mxu0
      %v819 = vadd.f32 0.0, %v818
      %v820 = vpop.f32.mrb[0].mxu0
      %v821 = vpop.f32.mrb[0].mxu0
      %v822 = vadd.f32 0.0, %v821
      %v823 = vpop.f32.mrb[0].mxu0
      %824 = vmatprep.mubr.bf16.mxu0 0
      %825 = vmatmul.mubr.bf16.gmra.mrb[0].mxu0 %v699
      %v826 = vpop.f32.mrb[0].mxu0
      %v827 = vadd.f32 0.0, %v826
      %v828 = vpop.f32.mrb[0].mxu0
      %v829 = vpop.f32.mrb[0].mxu0
      %v830 = vadd.f32 0.0, %v829
      %v831 = vpop.f32.mrb[0].mxu0
      %832 = vmatprep.mubr.bf16.mxu0 0
      %833 = vmatmul.mubr.bf16.gmra.mrb[0].mxu0 %v702
      %v834 = vpop.f32.mrb[0].mxu0
      %v835 = vadd.f32 0.0, %v834
      %v836 = vpop.f32.mrb[0].mxu0
      %v837 = vpop.f32.mrb[0].mxu0
      %v838 = vadd.f32 0.0, %v837
      %v839 = vpop.f32.mrb[0].mxu0
      %840 = vmatprep.mubr.bf16.mxu0 0
      %841 = vmatmul.mubr.bf16.gmra.mrb[0].mxu0 %v705
      %v842 = vpop.f32.mrb[0].mxu0
      %v843 = vadd.f32 0.0, %v842
      %v844 = vpop.f32.mrb[0].mxu0
      %v845 = vpop.f32.mrb[0].mxu0
      %v846 = vadd.f32 0.0, %v845
      %v847 = vpop.f32.mrb[0].mxu0
      %848 = vmatprep.mubr.bf16.mxu0 0
      %849 = vmatmul.mubr.bf16.gmra.mrb[0].mxu0 %v708
      %v850 = vpop.f32.mrb[0].mxu0
      %v851 = vadd.f32 0.0, %v850
      %v852 = vpop.f32.mrb[0].mxu0
      %v853 = vpop.f32.mrb[0].mxu0
      %v854 = vadd.f32 0.0, %v853
      %v855 = vpop.f32.mrb[0].mxu0
      %856 = vmatprep.mubr.bf16.mxu0 0
      %857 = vmatmul.mubr.bf16.gmra.mrb[0].mxu0 %v711
      %v858 = vpop.f32.mrb[0].mxu0
      %v859 = vadd.f32 0.0, %v858
      %v860 = vpop.f32.mrb[0].mxu0
      %v861 = vpop.f32.mrb[0].mxu0
      %v862 = vadd.f32 0.0, %v861
      %v863 = vpop.f32.mrb[0].mxu0
      %864 = vmatprep.mubr.bf16.mxu0 0
      %865 = vmatmul.mubr.bf16.gmra.mrb[0].mxu0 %v714
      %v866 = vpop.f32.mrb[0].mxu0
      %v867 = vadd.f32 0.0, %v866
      %v868 = vpop.f32.mrb[0].mxu0
      %v869 = vpop.f32.mrb[0].mxu0
      %v870 = vadd.f32 0.0, %v869
      %v871 = vpop.f32.mrb[0].mxu0
      %872 = vdwg.mxu0
      %v903 = vunpack.c.l.b16 %v239
      %v904 = vunpack.c.l.b16 %v240
      %v905 = vunpack.c.l.b16 %v241
      %v906 = vunpack.c.l.b16 %v242
      %v907 = vunpack.c.l.b16 %v243
      %v908 = vunpack.c.l.b16 %v244
      %v909 = vunpack.c.l.b16 %v245
      %v910 = vunpack.c.l.b16 %v246
      %v911 = vunpack.c.l.b16 %v247
      %v912 = vunpack.c.l.b16 %v248
      %v913 = vunpack.c.l.b16 %v249
      %v914 = vunpack.c.l.b16 %v250
      %v915 = vunpack.c.l.b16 %v251
      %v916 = vunpack.c.l.b16 %v252
      %v917 = vunpack.c.l.b16 %v253
      %v918 = vunpack.c.l.b16 %v254
      %v919 = vunpack.c.l.b16 %v255
      %v920 = vunpack.c.l.b16 %v256
      %v921 = vunpack.c.l.b16 %v257
      %v922 = vunpack.c.l.b16 %v258
      %v923 = vunpack.c.l.b16 %v259
      %v924 = vunpack.c.l.b16 %v260
      %v925 = vunpack.c.l.b16 %v261
      %v926 = vunpack.c.l.b16 %v262
      %v927 = vunpack.c.l.b16 %v263
      %v928 = vunpack.c.l.b16 %v264
      %v929 = vunpack.c.l.b16 %v265
      %v930 = vunpack.c.l.b16 %v266
      %v931 = vunpack.c.l.b16 %v267
      %v932 = vunpack.c.l.b16 %v268
      %v933 = vpack.c.b16 %v904, %v903
      %v934 = vpack.c.b16 %v906, %v905
      %v935 = vpack.c.b16 %v908, %v907
      %v936 = vpack.c.b16 %v910, %v909
      %v937 = vpack.c.b16 %v912, %v911
      %v938 = vpack.c.b16 %v914, %v913
      %v939 = vpack.c.b16 %v916, %v915
      %v940 = vpack.c.b16 %v918, %v917
      %v941 = vpack.c.b16 %v920, %v919
      %v942 = vpack.c.b16 %v922, %v921
      %v943 = vpack.c.b16 %v924, %v923
      %v944 = vpack.c.b16 %v926, %v925
      %v945 = vpack.c.b16 %v928, %v927
      %v946 = vpack.c.b16 %v930, %v929
      %v947 = vpack.c.b16 %v932, %v931
      %v949 = vsel %vm670, %v933, 0
      %v952 = vsel %vm670, %v934, 0
      %v955 = vsel %vm670, %v935, 0
      %v958 = vsel %vm670, %v936, 0
      %v961 = vsel %vm670, %v937, 0
      %v964 = vsel %vm670, %v938, 0
      %v967 = vsel %vm670, %v939, 0
      %v970 = vsel %vm670, %v940, 0
      %v973 = vsel %vm670, %v941, 0
      %v976 = vsel %vm670, %v942, 0
      %v979 = vsel %vm670, %v943, 0
      %v982 = vsel %vm670, %v944, 0
      %v985 = vsel %vm670, %v945, 0
      %v988 = vsel %vm670, %v946, 0
      %v991 = vsel %vm670, %v947, 0
      %v994 = vsel %vm716, %v269, 0
      %996 = vmatprep.subr.bf16.mxu0 0
      %997 = vmatpush1.bf16.msra.mxu0 %v994
      %998 = vmatprep.subr.bf16.mxu0 0
      %999 = vmatpush1.bf16.msra.mxu0 0
      %1000 = vmatprep.subr.bf16.mxu0 0
      %1001 = vmatpush1.bf16.msra.mxu0 0
      %1002 = vmatprep.subr.bf16.mxu0 0
      %1003 = vmatpush1.bf16.msra.mxu0 0
      %1004 = vmatprep.subr.bf16.mxu0 0
      %1005 = vmatpush1.bf16.msra.mxu0 0
      %1006 = vmatprep.subr.bf16.mxu0 0
      %1007 = vmatpush1.bf16.msra.mxu0 0
      %1008 = vmatprep.subr.bf16.mxu0 0
      %1009 = vmatpush1.bf16.msra.mxu0 0
      %1010 = vmatprep.subr.bf16.mxu0 0
      %1011 = vmatpush1.bf16.msra.mxu0 0
      %1012 = vmatprep.subr.bf16.mxu0 0
      %1013 = vmatpush1.bf16.msra.mxu0 0
      %1014 = vmatprep.subr.bf16.mxu0 0
      %1015 = vmatpush1.bf16.msra.mxu0 0
      %1016 = vmatprep.subr.bf16.mxu0 0
      %1017 = vmatpush1.bf16.msra.mxu0 0
      %1018 = vmatprep.subr.bf16.mxu0 0
      %1019 = vmatpush1.bf16.msra.mxu0 0
      %1020 = vmatprep.subr.bf16.mxu0 0
      %1021 = vmatpush1.bf16.msra.mxu0 0
      %1022 = vmatprep.subr.bf16.mxu0 0
      %1023 = vmatpush1.bf16.msra.mxu0 0
      %1024 = vmatprep.subr.bf16.mxu0 0
      %1025 = vmatpush1.bf16.msra.mxu0 0
      %1026 = vmatprep.subr.bf16.mxu0 0
      %1027 = vmatpush1.bf16.msra.mxu0 0
      %1028 = vmatprep.mubr.bf16.mxu0 0
      %1029 = vmatmul.mubr.bf16.gmra.mrb[0].mxu0 %v949
      %v1030 = vpop.f32.mrb[0].mxu0
      %v1031 = vadd.f32 %v755, %v1030
      %v1032 = vpop.f32.mrb[0].mxu0
      %v1033 = vpop.f32.mrb[0].mxu0
      %v1034 = vadd.f32 %v758, %v1033
      %v1035 = vpop.f32.mrb[0].mxu0
      %1036 = vmatprep.mubr.bf16.mxu0 0
      %1037 = vmatmul.mubr.bf16.gmra.mrb[0].mxu0 %v952
      %v1038 = vpop.f32.mrb[0].mxu0
      %v1039 = vadd.f32 %v763, %v1038
      %v1040 = vpop.f32.mrb[0].mxu0
      %v1041 = vpop.f32.mrb[0].mxu0
      %v1042 = vadd.f32 %v766, %v1041
      %v1043 = vpop.f32.mrb[0].mxu0
      %1044 = vmatprep.mubr.bf16.mxu0 0
      %1045 = vmatmul.mubr.bf16.gmra.mrb[0].mxu0 %v955
      %v1046 = vpop.f32.mrb[0].mxu0
      %v1047 = vadd.f32 %v771, %v1046
      %v1048 = vpop.f32.mrb[0].mxu0
      %v1049 = vpop.f32.mrb[0].mxu0
      %v1050 = vadd.f32 %v774, %v1049
      %v1051 = vpop.f32.mrb[0].mxu0
      %1052 = vmatprep.mubr.bf16.mxu0 0
      %1053 = vmatmul.mubr.bf16.gmra.mrb[0].mxu0 %v958
      %v1054 = vpop.f32.mrb[0].mxu0
      %v1055 = vadd.f32 %v779, %v1054
      %v1056 = vpop.f32.mrb[0].mxu0
      %v1057 = vpop.f32.mrb[0].mxu0
      %v1058 = vadd.f32 %v782, %v1057
      %v1059 = vpop.f32.mrb[0].mxu0
      %1060 = vmatprep.mubr.bf16.mxu0 0
      %1061 = vmatmul.mubr.bf16.gmra.mrb[0].mxu0 %v961
      %v1062 = vpop.f32.mrb[0].mxu0
      %v1063 = vadd.f32 %v787, %v1062
      %v1064 = vpop.f32.mrb[0].mxu0
      %v1065 = vpop.f32.mrb[0].mxu0
      %v1066 = vadd.f32 %v790, %v1065
      %v1067 = vpop.f32.mrb[0].mxu0
      %1068 = vmatprep.mubr.bf16.mxu0 0
      %1069 = vmatmul.mubr.bf16.gmra.mrb[0].mxu0 %v964
      %v1070 = vpop.f32.mrb[0].mxu0
      %v1071 = vadd.f32 %v795, %v1070
      %v1072 = vpop.f32.mrb[0].mxu0
      %v1073 = vpop.f32.mrb[0].mxu0
      %v1074 = vadd.f32 %v798, %v1073
      %v1075 = vpop.f32.mrb[0].mxu0
      %1076 = vmatprep.mubr.bf16.mxu0 0
      %1077 = vmatmul.mubr.bf16.gmra.mrb[0].mxu0 %v967
      %v1078 = vpop.f32.mrb[0].mxu0
      %v1079 = vadd.f32 %v803, %v1078
      %v1080 = vpop.f32.mrb[0].mxu0
      %v1081 = vpop.f32.mrb[0].mxu0
      %v1082 = vadd.f32 %v806, %v1081
      %v1083 = vpop.f32.mrb[0].mxu0
      %1084 = vmatprep.mubr.bf16.mxu0 0
      %1085 = vmatmul.mubr.bf16.gmra.mrb[0].mxu0 %v970
      %v1086 = vpop.f32.mrb[0].mxu0
      %v1087 = vadd.f32 %v811, %v1086
      %v1088 = vpop.f32.mrb[0].mxu0
      %v1089 = vpop.f32.mrb[0].mxu0
      %v1090 = vadd.f32 %v814, %v1089
      %v1091 = vpop.f32.mrb[0].mxu0
      %1092 = vmatprep.mubr.bf16.mxu0 0
      %1093 = vmatmul.mubr.bf16.gmra.mrb[0].mxu0 %v973
      %v1094 = vpop.f32.mrb[0].mxu0
      %v1095 = vadd.f32 %v819, %v1094
      %v1096 = vpop.f32.mrb[0].mxu0
      %v1097 = vpop.f32.mrb[0].mxu0
      %v1098 = vadd.f32 %v822, %v1097
      %v1099 = vpop.f32.mrb[0].mxu0
      %1100 = vmatprep.mubr.bf16.mxu0 0
      %1101 = vmatmul.mubr.bf16.gmra.mrb[0].mxu0 %v976
      %v1102 = vpop.f32.mrb[0].mxu0
      %v1103 = vadd.f32 %v827, %v1102
      %v1104 = vpop.f32.mrb[0].mxu0
      %v1105 = vpop.f32.mrb[0].mxu0
      %v1106 = vadd.f32 %v830, %v1105
      %v1107 = vpop.f32.mrb[0].mxu0
      %1108 = vmatprep.mubr.bf16.mxu0 0
      %1109 = vmatmul.mubr.bf16.gmra.mrb[0].mxu0 %v979
      %v1110 = vpop.f32.mrb[0].mxu0
      %v1111 = vadd.f32 %v835, %v1110
      %v1112 = vpop.f32.mrb[0].mxu0
      %v1113 = vpop.f32.mrb[0].mxu0
      %v1114 = vadd.f32 %v838, %v1113
      %v1115 = vpop.f32.mrb[0].mxu0
      %1116 = vmatprep.mubr.bf16.mxu0 0
      %1117 = vmatmul.mubr.bf16.gmra.mrb[0].mxu0 %v982
      %v1118 = vpop.f32.mrb[0].mxu0
      %v1119 = vadd.f32 %v843, %v1118
      %v1120 = vpop.f32.mrb[0].mxu0
      %v1121 = vpop.f32.mrb[0].mxu0
      %v1122 = vadd.f32 %v846, %v1121
      %v1123 = vpop.f32.mrb[0].mxu0
      %1124 = vmatprep.mubr.bf16.mxu0 0
      %1125 = vmatmul.mubr.bf16.gmra.mrb[0].mxu0 %v985
      %v1126 = vpop.f32.mrb[0].mxu0
      %v1127 = vadd.f32 %v851, %v1126
      %v1128 = vpop.f32.mrb[0].mxu0
      %v1129 = vpop.f32.mrb[0].mxu0
      %v1130 = vadd.f32 %v854, %v1129
      %v1131 = vpop.f32.mrb[0].mxu0
      %1132 = vmatprep.mubr.bf16.mxu0 0
      %1133 = vmatmul.mubr.bf16.gmra.mrb[0].mxu0 %v988
      %v1134 = vpop.f32.mrb[0].mxu0
      %v1135 = vadd.f32 %v859, %v1134
      %v1136 = vpop.f32.mrb[0].mxu0
      %v1137 = vpop.f32.mrb[0].mxu0
      %v1138 = vadd.f32 %v862, %v1137
      %v1139 = vpop.f32.mrb[0].mxu0
      %1140 = vmatprep.mubr.bf16.mxu0 0
      %1141 = vmatmul.mubr.bf16.gmra.mrb[0].mxu0 %v991
      %v1142 = vpop.f32.mrb[0].mxu0
      %v1143 = vadd.f32 %v867, %v1142
      %v1144 = vpop.f32.mrb[0].mxu0
      %v1145 = vpop.f32.mrb[0].mxu0
      %v1146 = vadd.f32 %v870, %v1145
      %v1147 = vpop.f32.mrb[0].mxu0
      %1148 = vdwg.mxu0
      %v1149 = vld [vmem:[%s219] sm:$0xe]
      %v1150 = vld [vmem:[%s219 + $0x10] sm:$0xe]
      %v1151 = vld [vmem:[%s219 + $0x20] sm:$0xe]
      %v1152 = vld [vmem:[%s219 + $0x30] sm:$0xe]
      %v1153 = vld [vmem:[%s219 + $0x40] sm:$0xe]
      %v1154 = vld [vmem:[%s219 + $0x50] sm:$0xe]
      %v1155 = vld [vmem:[%s219 + $0x60] sm:$0xe]
      %v1156 = vld [vmem:[%s219 + $0x70] sm:$0xe]
      %v1157 = vld [vmem:[%s219 + $0x80] sm:$0xe]
      %v1158 = vld [vmem:[%s219 + $0x90] sm:$0xe]
      %vm1179 = vcmask 1042432
      %vm1180 = vcmask 1046532
      %vm1181 = vmor %vm1179, %vm1180
      %v1182 = vrot.slane %v1149, 5
      %v1183 = vrot.slane %v1182, 4
      %v1184 = vrot.slane %v240, 5
      %v1185 = vsel %vm1181, %v1183, %v1184
      %v1186 = vrot.slane %v1184, 4
      %v1187 = vrot.slane %v241, 5
      %v1188 = vsel %vm1181, %v1186, %v1187
      %v1189 = vrot.slane %v1187, 4
      %v1190 = vrot.slane %v270, 5
      %v1191 = vsel %vm1181, %v1189, %v1190
      %v1192 = vrot.slane %v1150, 5
      %v1193 = vrot.slane %v1192, 4
      %v1194 = vrot.slane %v243, 5
      %v1195 = vsel %vm1181, %v1193, %v1194
      %v1196 = vrot.slane %v1194, 4
      %v1197 = vrot.slane %v244, 5
      %v1198 = vsel %vm1181, %v1196, %v1197
      %v1199 = vrot.slane %v1197, 4
      %v1200 = vrot.slane %v271, 5
      %v1201 = vsel %vm1181, %v1199, %v1200
      %v1202 = vrot.slane %v1151, 5
      %v1203 = vrot.slane %v1202, 4
      %v1204 = vrot.slane %v246, 5
      %v1205 = vsel %vm1181, %v1203, %v1204
      %v1206 = vrot.slane %v1204, 4
      %v1207 = vrot.slane %v247, 5
      %v1208 = vsel %vm1181, %v1206, %v1207
      %v1209 = vrot.slane %v1207, 4
      %v1210 = vrot.slane %v272, 5
      %v1211 = vsel %vm1181, %v1209, %v1210
      %v1212 = vrot.slane %v1152, 5
      %v1213 = vrot.slane %v1212, 4
      %v1214 = vrot.slane %v249, 5
      %v1215 = vsel %vm1181, %v1213, %v1214
      %v1216 = vrot.slane %v1214, 4
      %v1217 = vrot.slane %v250, 5
      %v1218 = vsel %vm1181, %v1216, %v1217
      %v1219 = vrot.slane %v1217, 4
      %v1220 = vrot.slane %v273, 5
      %v1221 = vsel %vm1181, %v1219, %v1220
      %v1222 = vrot.slane %v1153, 5
      %v1223 = vrot.slane %v1222, 4
      %v1224 = vrot.slane %v252, 5
      %v1225 = vsel %vm1181, %v1223, %v1224
      %v1226 = vrot.slane %v1224, 4
      %v1227 = vrot.slane %v253, 5
      %v1228 = vsel %vm1181, %v1226, %v1227
      %v1229 = vrot.slane %v1227, 4
      %v1230 = vrot.slane %v274, 5
      %v1231 = vsel %vm1181, %v1229, %v1230
      %v1232 = vrot.slane %v1154, 5
      %v1233 = vrot.slane %v1232, 4
      %v1234 = vrot.slane %v255, 5
      %v1235 = vsel %vm1181, %v1233, %v1234
      %v1236 = vrot.slane %v1234, 4
      %v1237 = vrot.slane %v256, 5
      %v1238 = vsel %vm1181, %v1236, %v1237
      %v1239 = vrot.slane %v1237, 4
      %v1240 = vrot.slane %v275, 5
      %v1241 = vsel %vm1181, %v1239, %v1240
      %v1242 = vrot.slane %v1155, 5
      %v1243 = vrot.slane %v1242, 4
      %v1244 = vrot.slane %v258, 5
      %v1245 = vsel %vm1181, %v1243, %v1244
      %v1246 = vrot.slane %v1244, 4
      %v1247 = vrot.slane %v259, 5
      %v1248 = vsel %vm1181, %v1246, %v1247
      %v1249 = vrot.slane %v1247, 4
      %v1250 = vrot.slane %v276, 5
      %v1251 = vsel %vm1181, %v1249, %v1250
      %v1252 = vrot.slane %v1156, 5
      %v1253 = vrot.slane %v1252, 4
      %v1254 = vrot.slane %v261, 5
      %v1255 = vsel %vm1181, %v1253, %v1254
      %v1256 = vrot.slane %v1254, 4
      %v1257 = vrot.slane %v262, 5
      %v1258 = vsel %vm1181, %v1256, %v1257
      %v1259 = vrot.slane %v1257, 4
      %v1260 = vrot.slane %v277, 5
      %v1261 = vsel %vm1181, %v1259, %v1260
      %v1262 = vrot.slane %v1157, 5
      %v1263 = vrot.slane %v1262, 4
      %v1264 = vrot.slane %v264, 5
      %v1265 = vsel %vm1181, %v1263, %v1264
      %v1266 = vrot.slane %v1264, 4
      %v1267 = vrot.slane %v265, 5
      %v1268 = vsel %vm1181, %v1266, %v1267
      %v1269 = vrot.slane %v1267, 4
      %v1270 = vrot.slane %v278, 5
      %v1271 = vsel %vm1181, %v1269, %v1270
      %v1272 = vrot.slane %v1158, 5
      %v1273 = vrot.slane %v1272, 4
      %v1274 = vrot.slane %v267, 5
      %v1275 = vsel %vm1181, %v1273, %v1274
      %v1276 = vrot.slane %v1274, 4
      %v1277 = vrot.slane %v268, 5
      %v1278 = vsel %vm1181, %v1276, %v1277
      %v1279 = vrot.slane %v1277, 4
      %v1280 = vrot.slane %v279, 5
      %v1281 = vsel %vm1181, %v1279, %v1280
      %s1282 = scalar_lea.vmem %s1, 4
      %v1283 = vld [vmem:[%s1282] sm:$0x3]
      %v1284 = vunpack.c.l.b16 %v1185
      %v1285 = vunpack.c.l.b16 %v1188
      %v1286 = vunpack.c.l.b16 %v1191
      %v1287 = vunpack.c.l.b16 %v1195
      %v1288 = vunpack.c.l.b16 %v1198
      %v1289 = vunpack.c.l.b16 %v1201
      %v1290 = vunpack.c.l.b16 %v1205
      %v1291 = vunpack.c.l.b16 %v1208
      %v1292 = vunpack.c.l.b16 %v1211
      %v1293 = vunpack.c.l.b16 %v1215
      %v1294 = vunpack.c.l.b16 %v1218
      %v1295 = vunpack.c.l.b16 %v1221
      %v1296 = vunpack.c.l.b16 %v1225
      %v1297 = vunpack.c.l.b16 %v1228
      %v1298 = vunpack.c.l.b16 %v1231
      %v1299 = vunpack.c.l.b16 %v1235
      %v1300 = vunpack.c.l.b16 %v1238
      %v1301 = vunpack.c.l.b16 %v1241
      %v1302 = vunpack.c.l.b16 %v1245
      %v1303 = vunpack.c.l.b16 %v1248
      %v1304 = vunpack.c.l.b16 %v1251
      %v1305 = vunpack.c.l.b16 %v1255
      %v1306 = vunpack.c.l.b16 %v1258
      %v1307 = vunpack.c.l.b16 %v1261
      %v1308 = vunpack.c.l.b16 %v1265
      %v1309 = vunpack.c.l.b16 %v1268
      %v1310 = vunpack.c.l.b16 %v1271
      %v1311 = vunpack.c.l.b16 %v1275
      %v1312 = vunpack.c.l.b16 %v1278
      %v1313 = vunpack.c.l.b16 %v1281
      %v1314 = vpack.c.b16 %v1285, %v1284
      %v1315 = vpack.c.b16 %v1287, %v1286
      %v1316 = vpack.c.b16 %v1289, %v1288
      %v1317 = vpack.c.b16 %v1291, %v1290
      %v1318 = vpack.c.b16 %v1293, %v1292
      %v1319 = vpack.c.b16 %v1295, %v1294
      %v1320 = vpack.c.b16 %v1297, %v1296
      %v1321 = vpack.c.b16 %v1299, %v1298
      %v1322 = vpack.c.b16 %v1301, %v1300
      %v1323 = vpack.c.b16 %v1303, %v1302
      %v1324 = vpack.c.b16 %v1305, %v1304
      %v1325 = vpack.c.b16 %v1307, %v1306
      %v1326 = vpack.c.b16 %v1309, %v1308
      %v1327 = vpack.c.b16 %v1311, %v1310
      %v1328 = vpack.c.b16 %v1313, %v1312
      %v1330 = vsel %vm670, %v1314, 0
      %v1333 = vsel %vm670, %v1315, 0
      %v1336 = vsel %vm670, %v1316, 0
      %v1339 = vsel %vm670, %v1317, 0
      %v1342 = vsel %vm670, %v1318, 0
      %v1345 = vsel %vm670, %v1319, 0
      %v1348 = vsel %vm670, %v1320, 0
      %v1351 = vsel %vm670, %v1321, 0
      %v1354 = vsel %vm670, %v1322, 0
      %v1357 = vsel %vm670, %v1323, 0
      %v1360 = vsel %vm670, %v1324, 0
      %v1363 = vsel %vm670, %v1325, 0
      %v1366 = vsel %vm670, %v1326, 0
      %v1369 = vsel %vm670, %v1327, 0
      %v1372 = vsel %vm670, %v1328, 0
      %v1375 = vsel %vm716, %v1283, 0
      %1377 = vmatprep.subr.bf16.mxu0 0
      %1378 = vmatpush1.bf16.msra.mxu0 %v1375
      %1379 = vmatprep.subr.bf16.mxu0 0
      %1380 = vmatpush1.bf16.msra.mxu0 0
      %1381 = vmatprep.subr.bf16.mxu0 0
      %1382 = vmatpush1.bf16.msra.mxu0 0
      %1383 = vmatprep.subr.bf16.mxu0 0
      %1384 = vmatpush1.bf16.msra.mxu0 0
      %1385 = vmatprep.subr.bf16.mxu0 0
      %1386 = vmatpush1.bf16.msra.mxu0 0
      %1387 = vmatprep.subr.bf16.mxu0 0
      %1388 = vmatpush1.bf16.msra.mxu0 0
      %1389 = vmatprep.subr.bf16.mxu0 0
      %1390 = vmatpush1.bf16.msra.mxu0 0
      %1391 = vmatprep.subr.bf16.mxu0 0
      %1392 = vmatpush1.bf16.msra.mxu0 0
      %1393 = vmatprep.subr.bf16.mxu0 0
      %1394 = vmatpush1.bf16.msra.mxu0 0
      %1395 = vmatprep.subr.bf16.mxu0 0
      %1396 = vmatpush1.bf16.msra.mxu0 0
      %1397 = vmatprep.subr.bf16.mxu0 0
      %1398 = vmatpush1.bf16.msra.mxu0 0
      %1399 = vmatprep.subr.bf16.mxu0 0
      %1400 = vmatpush1.bf16.msra.mxu0 0
      %1401 = vmatprep.subr.bf16.mxu0 0
      %1402 = vmatpush1.bf16.msra.mxu0 0
      %1403 = vmatprep.subr.bf16.mxu0 0
      %1404 = vmatpush1.bf16.msra.mxu0 0
      %1405 = vmatprep.subr.bf16.mxu0 0
      %1406 = vmatpush1.bf16.msra.mxu0 0
      %1407 = vmatprep.subr.bf16.mxu0 0
      %1408 = vmatpush1.bf16.msra.mxu0 0
      %1409 = vmatprep.mubr.bf16.mxu0 0
      %1410 = vmatmul.mubr.bf16.gmra.mrb[0].mxu0 %v1330
      %v1411 = vpop.f32.mrb[0].mxu0
      %v1412 = vadd.f32 0.0, %v1411
      %v1413 = vpop.f32.mrb[0].mxu0
      %v1414 = vpop.f32.mrb[0].mxu0
      %v1415 = vadd.f32 0.0, %v1414
      %v1416 = vpop.f32.mrb[0].mxu0
      %1417 = vmatprep.mubr.bf16.mxu0 0
      %1418 = vmatmul.mubr.bf16.gmra.mrb[0].mxu0 %v1333
      %v1419 = vpop.f32.mrb[0].mxu0
      %v1420 = vadd.f32 0.0, %v1419
      %v1421 = vpop.f32.mrb[0].mxu0
      %v1422 = vpop.f32.mrb[0].mxu0
      %v1423 = vadd.f32 0.0, %v1422
      %v1424 = vpop.f32.mrb[0].mxu0
      %1425 = vmatprep.mubr.bf16.mxu0 0
      %1426 = vmatmul.mubr.bf16.gmra.mrb[0].mxu0 %v1336
      %v1427 = vpop.f32.mrb[0].mxu0
      %v1428 = vadd.f32 0.0, %v1427
      %v1429 = vpop.f32.mrb[0].mxu0
      %v1430 = vpop.f32.mrb[0].mxu0
      %v1431 = vadd.f32 0.0, %v1430
      %v1432 = vpop.f32.mrb[0].mxu0
      %1433 = vmatprep.mubr.bf16.mxu0 0
      %1434 = vmatmul.mubr.bf16.gmra.mrb[0].mxu0 %v1339
      %v1435 = vpop.f32.mrb[0].mxu0
      %v1436 = vadd.f32 0.0, %v1435
      %v1437 = vpop.f32.mrb[0].mxu0
      %v1438 = vpop.f32.mrb[0].mxu0
      %v1439 = vadd.f32 0.0, %v1438
      %v1440 = vpop.f32.mrb[0].mxu0
      %1441 = vmatprep.mubr.bf16.mxu0 0
      %1442 = vmatmul.mubr.bf16.gmra.mrb[0].mxu0 %v1342
      %v1443 = vpop.f32.mrb[0].mxu0
      %v1444 = vadd.f32 0.0, %v1443
      %v1445 = vpop.f32.mrb[0].mxu0
      %v1446 = vpop.f32.mrb[0].mxu0
      %v1447 = vadd.f32 0.0, %v1446
      %v1448 = vpop.f32.mrb[0].mxu0
      %1449 = vmatprep.mubr.bf16.mxu0 0
      %1450 = vmatmul.mubr.bf16.gmra.mrb[0].mxu0 %v1345
      %v1451 = vpop.f32.mrb[0].mxu0
      %v1452 = vadd.f32 0.0, %v1451
      %v1453 = vpop.f32.mrb[0].mxu0
      %v1454 = vpop.f32.mrb[0].mxu0
      %v1455 = vadd.f32 0.0, %v1454
      %v1456 = vpop.f32.mrb[0].mxu0
      %1457 = vmatprep.mubr.bf16.mxu0 0
      %1458 = vmatmul.mubr.bf16.gmra.mrb[0].mxu0 %v1348
      %v1459 = vpop.f32.mrb[0].mxu0
      %v1460 = vadd.f32 0.0, %v1459
      %v1461 = vpop.f32.mrb[0].mxu0
      %v1462 = vpop.f32.mrb[0].mxu0
      %v1463 = vadd.f32 0.0, %v1462
      %v1464 = vpop.f32.mrb[0].mxu0
      %1465 = vmatprep.mubr.bf16.mxu0 0
      %1466 = vmatmul.mubr.bf16.gmra.mrb[0].mxu0 %v1351
      %v1467 = vpop.f32.mrb[0].mxu0
      %v1468 = vadd.f32 0.0, %v1467
      %v1469 = vpop.f32.mrb[0].mxu0
      %v1470 = vpop.f32.mrb[0].mxu0
      %v1471 = vadd.f32 0.0, %v1470
      %v1472 = vpop.f32.mrb[0].mxu0
      %1473 = vmatprep.mubr.bf16.mxu0 0
      %1474 = vmatmul.mubr.bf16.gmra.mrb[0].mxu0 %v1354
      %v1475 = vpop.f32.mrb[0].mxu0
      %v1476 = vadd.f32 0.0, %v1475
      %v1477 = vpop.f32.mrb[0].mxu0
      %v1478 = vpop.f32.mrb[0].mxu0
      %v1479 = vadd.f32 0.0, %v1478
      %v1480 = vpop.f32.mrb[0].mxu0
      %1481 = vmatprep.mubr.bf16.mxu0 0
      %1482 = vmatmul.mubr.bf16.gmra.mrb[0].mxu0 %v1357
      %v1483 = vpop.f32.mrb[0].mxu0
      %v1484 = vadd.f32 0.0, %v1483
      %v1485 = vpop.f32.mrb[0].mxu0
      %v1486 = vpop.f32.mrb[0].mxu0
      %v1487 = vadd.f32 0.0, %v1486
      %v1488 = vpop.f32.mrb[0].mxu0
      %1489 = vmatprep.mubr.bf16.mxu0 0
      %1490 = vmatmul.mubr.bf16.gmra.mrb[0].mxu0 %v1360
      %v1491 = vpop.f32.mrb[0].mxu0
      %v1492 = vadd.f32 0.0, %v1491
      %v1493 = vpop.f32.mrb[0].mxu0
      %v1494 = vpop.f32.mrb[0].mxu0
      %v1495 = vadd.f32 0.0, %v1494
      %v1496 = vpop.f32.mrb[0].mxu0
      %1497 = vmatprep.mubr.bf16.mxu0 0
      %1498 = vmatmul.mubr.bf16.gmra.mrb[0].mxu0 %v1363
      %v1499 = vpop.f32.mrb[0].mxu0
      %v1500 = vadd.f32 0.0, %v1499
      %v1501 = vpop.f32.mrb[0].mxu0
      %v1502 = vpop.f32.mrb[0].mxu0
      %v1503 = vadd.f32 0.0, %v1502
      %v1504 = vpop.f32.mrb[0].mxu0
      %1505 = vmatprep.mubr.bf16.mxu0 0
      %1506 = vmatmul.mubr.bf16.gmra.mrb[0].mxu0 %v1366
      %v1507 = vpop.f32.mrb[0].mxu0
      %v1508 = vadd.f32 0.0, %v1507
      %v1509 = vpop.f32.mrb[0].mxu0
      %v1510 = vpop.f32.mrb[0].mxu0
      %v1511 = vadd.f32 0.0, %v1510
      %v1512 = vpop.f32.mrb[0].mxu0
      %1513 = vmatprep.mubr.bf16.mxu0 0
      %1514 = vmatmul.mubr.bf16.gmra.mrb[0].mxu0 %v1369
      %v1515 = vpop.f32.mrb[0].mxu0
      %v1516 = vadd.f32 0.0, %v1515
      %v1517 = vpop.f32.mrb[0].mxu0
      %v1518 = vpop.f32.mrb[0].mxu0
      %v1519 = vadd.f32 0.0, %v1518
      %v1520 = vpop.f32.mrb[0].mxu0
      %1521 = vmatprep.mubr.bf16.mxu0 0
      %1522 = vmatmul.mubr.bf16.gmra.mrb[0].mxu0 %v1372
      %v1523 = vpop.f32.mrb[0].mxu0
      %v1524 = vadd.f32 0.0, %v1523
      %v1525 = vpop.f32.mrb[0].mxu0
      %v1526 = vpop.f32.mrb[0].mxu0
      %v1527 = vadd.f32 0.0, %v1526
      %v1528 = vpop.f32.mrb[0].mxu0
      %1529 = vdwg.mxu0
      %v1530 = vadd.f32 %v1031, %v1412
      %v1531 = vadd.f32 %v1034, %v1415
      %v1532 = vadd.f32 %v1039, %v1420
      %v1533 = vadd.f32 %v1042, %v1423
      %v1534 = vadd.f32 %v1047, %v1428
      %v1535 = vadd.f32 %v1050, %v1431
      %v1536 = vadd.f32 %v1055, %v1436
      %v1537 = vadd.f32 %v1058, %v1439
      %v1538 = vadd.f32 %v1063, %v1444
      %v1539 = vadd.f32 %v1066, %v1447
      %v1540 = vadd.f32 %v1071, %v1452
      %v1541 = vadd.f32 %v1074, %v1455
      %v1542 = vadd.f32 %v1079, %v1460
      %v1543 = vadd.f32 %v1082, %v1463
      %v1544 = vadd.f32 %v1087, %v1468
      %v1545 = vadd.f32 %v1090, %v1471
      %v1546 = vadd.f32 %v1095, %v1476
      %v1547 = vadd.f32 %v1098, %v1479
      %v1548 = vadd.f32 %v1103, %v1484
      %v1549 = vadd.f32 %v1106, %v1487
      %v1550 = vadd.f32 %v1111, %v1492
      %v1551 = vadd.f32 %v1114, %v1495
      %v1552 = vadd.f32 %v1119, %v1500
      %v1553 = vadd.f32 %v1122, %v1503
      %v1554 = vadd.f32 %v1127, %v1508
      %v1555 = vadd.f32 %v1130, %v1511
      %v1556 = vadd.f32 %v1135, %v1516
      %v1557 = vadd.f32 %v1138, %v1519
      %v1558 = vadd.f32 %v1143, %v1524
      %v1559 = vadd.f32 %v1146, %v1527
      %s1560 = scalar_lea.vmem %s219, 16
      %v1561 = vld [vmem:[%s1560] sm:$0xf]
      %v1562 = vld [vmem:[%s1560 + $0x4] sm:$0xf]
      %v1563 = vld [vmem:[%s1560 + $0x8] sm:$0xf]
      %v1564 = vld [vmem:[%s1560 + $0x10] sm:$0xf]
      %v1565 = vld [vmem:[%s1560 + $0x14] sm:$0xf]
      %v1566 = vld [vmem:[%s1560 + $0x18] sm:$0xf]
      %v1567 = vld [vmem:[%s1560 + $0x20] sm:$0xf]
      %v1568 = vld [vmem:[%s1560 + $0x24] sm:$0xf]
      %v1569 = vld [vmem:[%s1560 + $0x28] sm:$0xf]
      %v1570 = vld [vmem:[%s1560 + $0x30] sm:$0xf]
      %v1571 = vld [vmem:[%s1560 + $0x34] sm:$0xf]
      %v1572 = vld [vmem:[%s1560 + $0x38] sm:$0xf]
      %v1573 = vld [vmem:[%s1560 + $0x40] sm:$0xf]
      %v1574 = vld [vmem:[%s1560 + $0x44] sm:$0xf]
      %v1575 = vld [vmem:[%s1560 + $0x48] sm:$0xf]
      %v1576 = vld [vmem:[%s1560 + $0x50] sm:$0xf]
      %v1577 = vld [vmem:[%s1560 + $0x54] sm:$0xf]
      %v1578 = vld [vmem:[%s1560 + $0x58] sm:$0xf]
      %v1579 = vld [vmem:[%s1560 + $0x60] sm:$0xf]
      %v1580 = vld [vmem:[%s1560 + $0x64] sm:$0xf]
      %v1581 = vld [vmem:[%s1560 + $0x68] sm:$0xf]
      %v1582 = vld [vmem:[%s1560 + $0x70] sm:$0xf]
      %v1583 = vld [vmem:[%s1560 + $0x74] sm:$0xf]
      %v1584 = vld [vmem:[%s1560 + $0x78] sm:$0xf]
      %v1585 = vld [vmem:[%s1560 + $0x80] sm:$0xf]
      %v1586 = vld [vmem:[%s1560 + $0x84] sm:$0xf]
      %v1587 = vld [vmem:[%s1560 + $0x88] sm:$0xf]
      %v1588 = vld [vmem:[%s1560 + $0x90] sm:$0xf]
      %v1589 = vld [vmem:[%s1560 + $0x94] sm:$0xf]
      %v1590 = vld [vmem:[%s1560 + $0x98] sm:$0xf]
      %s1591 = scalar_lea.vmem %s1, 6
      %v1592 = vld [vmem:[%s1591] sm:$0x3]
      %v1623 = vunpack.c.l.b16 %v1561
      %v1624 = vunpack.c.l.b16 %v1562
      %v1625 = vunpack.c.l.b16 %v1563
      %v1626 = vunpack.c.l.b16 %v1564
      %v1627 = vunpack.c.l.b16 %v1565
      %v1628 = vunpack.c.l.b16 %v1566
      %v1629 = vunpack.c.l.b16 %v1567
      %v1630 = vunpack.c.l.b16 %v1568
      %v1631 = vunpack.c.l.b16 %v1569
      %v1632 = vunpack.c.l.b16 %v1570
      %v1633 = vunpack.c.l.b16 %v1571
      %v1634 = vunpack.c.l.b16 %v1572
      %v1635 = vunpack.c.l.b16 %v1573
      %v1636 = vunpack.c.l.b16 %v1574
      %v1637 = vunpack.c.l.b16 %v1575
      %v1638 = vunpack.c.l.b16 %v1576
      %v1639 = vunpack.c.l.b16 %v1577
      %v1640 = vunpack.c.l.b16 %v1578
      %v1641 = vunpack.c.l.b16 %v1579
      %v1642 = vunpack.c.l.b16 %v1580
      %v1643 = vunpack.c.l.b16 %v1581
      %v1644 = vunpack.c.l.b16 %v1582
      %v1645 = vunpack.c.l.b16 %v1583
      %v1646 = vunpack.c.l.b16 %v1584
      %v1647 = vunpack.c.l.b16 %v1585
      %v1648 = vunpack.c.l.b16 %v1586
      %v1649 = vunpack.c.l.b16 %v1587
      %v1650 = vunpack.c.l.b16 %v1588
      %v1651 = vunpack.c.l.b16 %v1589
      %v1652 = vunpack.c.l.b16 %v1590
      %v1653 = vpack.c.b16 %v1624, %v1623
      %v1654 = vpack.c.b16 %v1626, %v1625
      %v1655 = vpack.c.b16 %v1628, %v1627
      %v1656 = vpack.c.b16 %v1630, %v1629
      %v1657 = vpack.c.b16 %v1632, %v1631
      %v1658 = vpack.c.b16 %v1634, %v1633
      %v1659 = vpack.c.b16 %v1636, %v1635
      %v1660 = vpack.c.b16 %v1638, %v1637
      %v1661 = vpack.c.b16 %v1640, %v1639
      %v1662 = vpack.c.b16 %v1642, %v1641
      %v1663 = vpack.c.b16 %v1644, %v1643
      %v1664 = vpack.c.b16 %v1646, %v1645
      %v1665 = vpack.c.b16 %v1648, %v1647
      %v1666 = vpack.c.b16 %v1650, %v1649
      %v1667 = vpack.c.b16 %v1652, %v1651
      %v1669 = vsel %vm670, %v1653, 0
      %v1672 = vsel %vm670, %v1654, 0
      %v1675 = vsel %vm670, %v1655, 0
      %v1678 = vsel %vm670, %v1656, 0
      %v1681 = vsel %vm670, %v1657, 0
      %v1684 = vsel %vm670, %v1658, 0
      %v1687 = vsel %vm670, %v1659, 0
      %v1690 = vsel %vm670, %v1660, 0
      %v1693 = vsel %vm670, %v1661, 0
      %v1696 = vsel %vm670, %v1662, 0
      %v1699 = vsel %vm670, %v1663, 0
      %v1702 = vsel %vm670, %v1664, 0
      %v1705 = vsel %vm670, %v1665, 0
      %v1708 = vsel %vm670, %v1666, 0
      %v1711 = vsel %vm670, %v1667, 0
      %v1714 = vsel %vm716, %v1592, 0
      %1716 = vmatprep.subr.bf16.mxu0 0
      %1717 = vmatpush1.bf16.msra.mxu0 %v1714
      %1718 = vmatprep.subr.bf16.mxu0 0
      %1719 = vmatpush1.bf16.msra.mxu0 0
      %1720 = vmatprep.subr.bf16.mxu0 0
      %1721 = vmatpush1.bf16.msra.mxu0 0
      %1722 = vmatprep.subr.bf16.mxu0 0
      %1723 = vmatpush1.bf16.msra.mxu0 0
      %1724 = vmatprep.subr.bf16.mxu0 0
      %1725 = vmatpush1.bf16.msra.mxu0 0
      %1726 = vmatprep.subr.bf16.mxu0 0
      %1727 = vmatpush1.bf16.msra.mxu0 0
      %1728 = vmatprep.subr.bf16.mxu0 0
      %1729 = vmatpush1.bf16.msra.mxu0 0
      %1730 = vmatprep.subr.bf16.mxu0 0
      %1731 = vmatpush1.bf16.msra.mxu0 0
      %1732 = vmatprep.subr.bf16.mxu0 0
      %1733 = vmatpush1.bf16.msra.mxu0 0
      %1734 = vmatprep.subr.bf16.mxu0 0
      %1735 = vmatpush1.bf16.msra.mxu0 0
      %1736 = vmatprep.subr.bf16.mxu0 0
      %1737 = vmatpush1.bf16.msra.mxu0 0
      %1738 = vmatprep.subr.bf16.mxu0 0
      %1739 = vmatpush1.bf16.msra.mxu0 0
      %1740 = vmatprep.subr.bf16.mxu0 0
      %1741 = vmatpush1.bf16.msra.mxu0 0
      %1742 = vmatprep.subr.bf16.mxu0 0
      %1743 = vmatpush1.bf16.msra.mxu0 0
      %1744 = vmatprep.subr.bf16.mxu0 0
      %1745 = vmatpush1.bf16.msra.mxu0 0
      %1746 = vmatprep.subr.bf16.mxu0 0
      %1747 = vmatpush1.bf16.msra.mxu0 0
      %1748 = vmatprep.mubr.bf16.mxu0 0
      %1749 = vmatmul.mubr.bf16.gmra.mrb[0].mxu0 %v1669
      %v1750 = vpop.f32.mrb[0].mxu0
      %v1751 = vadd.f32 0.0, %v1750
      %v1752 = vpop.f32.mrb[0].mxu0
      %v1753 = vpop.f32.mrb[0].mxu0
      %v1754 = vadd.f32 0.0, %v1753
      %v1755 = vpop.f32.mrb[0].mxu0
      %1756 = vmatprep.mubr.bf16.mxu0 0
      %1757 = vmatmul.mubr.bf16.gmra.mrb[0].mxu0 %v1672
      %v1758 = vpop.f32.mrb[0].mxu0
      %v1759 = vadd.f32 0.0, %v1758
      %v1760 = vpop.f32.mrb[0].mxu0
      %v1761 = vpop.f32.mrb[0].mxu0
      %v1762 = vadd.f32 0.0, %v1761
      %v1763 = vpop.f32.mrb[0].mxu0
      %1764 = vmatprep.mubr.bf16.mxu0 0
      %1765 = vmatmul.mubr.bf16.gmra.mrb[0].mxu0 %v1675
      %v1766 = vpop.f32.mrb[0].mxu0
      %v1767 = vadd.f32 0.0, %v1766
      %v1768 = vpop.f32.mrb[0].mxu0
      %v1769 = vpop.f32.mrb[0].mxu0
      %v1770 = vadd.f32 0.0, %v1769
      %v1771 = vpop.f32.mrb[0].mxu0
      %1772 = vmatprep.mubr.bf16.mxu0 0
      %1773 = vmatmul.mubr.bf16.gmra.mrb[0].mxu0 %v1678
      %v1774 = vpop.f32.mrb[0].mxu0
      %v1775 = vadd.f32 0.0, %v1774
      %v1776 = vpop.f32.mrb[0].mxu0
      %v1777 = vpop.f32.mrb[0].mxu0
      %v1778 = vadd.f32 0.0, %v1777
      %v1779 = vpop.f32.mrb[0].mxu0
      %1780 = vmatprep.mubr.bf16.mxu0 0
      %1781 = vmatmul.mubr.bf16.gmra.mrb[0].mxu0 %v1681
      %v1782 = vpop.f32.mrb[0].mxu0
      %v1783 = vadd.f32 0.0, %v1782
      %v1784 = vpop.f32.mrb[0].mxu0
      %v1785 = vpop.f32.mrb[0].mxu0
      %v1786 = vadd.f32 0.0, %v1785
      %v1787 = vpop.f32.mrb[0].mxu0
      %1788 = vmatprep.mubr.bf16.mxu0 0
      %1789 = vmatmul.mubr.bf16.gmra.mrb[0].mxu0 %v1684
      %v1790 = vpop.f32.mrb[0].mxu0
      %v1791 = vadd.f32 0.0, %v1790
      %v1792 = vpop.f32.mrb[0].mxu0
      %v1793 = vpop.f32.mrb[0].mxu0
      %v1794 = vadd.f32 0.0, %v1793
      %v1795 = vpop.f32.mrb[0].mxu0
      %1796 = vmatprep.mubr.bf16.mxu0 0
      %1797 = vmatmul.mubr.bf16.gmra.mrb[0].mxu0 %v1687
      %v1798 = vpop.f32.mrb[0].mxu0
      %v1799 = vadd.f32 0.0, %v1798
      %v1800 = vpop.f32.mrb[0].mxu0
      %v1801 = vpop.f32.mrb[0].mxu0
      %v1802 = vadd.f32 0.0, %v1801
      %v1803 = vpop.f32.mrb[0].mxu0
      %1804 = vmatprep.mubr.bf16.mxu0 0
      %1805 = vmatmul.mubr.bf16.gmra.mrb[0].mxu0 %v1690
      %v1806 = vpop.f32.mrb[0].mxu0
      %v1807 = vadd.f32 0.0, %v1806
      %v1808 = vpop.f32.mrb[0].mxu0
      %v1809 = vpop.f32.mrb[0].mxu0
      %v1810 = vadd.f32 0.0, %v1809
      %v1811 = vpop.f32.mrb[0].mxu0
      %1812 = vmatprep.mubr.bf16.mxu0 0
      %1813 = vmatmul.mubr.bf16.gmra.mrb[0].mxu0 %v1693
      %v1814 = vpop.f32.mrb[0].mxu0
      %v1815 = vadd.f32 0.0, %v1814
      %v1816 = vpop.f32.mrb[0].mxu0
      %v1817 = vpop.f32.mrb[0].mxu0
      %v1818 = vadd.f32 0.0, %v1817
      %v1819 = vpop.f32.mrb[0].mxu0
      %1820 = vmatprep.mubr.bf16.mxu0 0
      %1821 = vmatmul.mubr.bf16.gmra.mrb[0].mxu0 %v1696
      %v1822 = vpop.f32.mrb[0].mxu0
      %v1823 = vadd.f32 0.0, %v1822
      %v1824 = vpop.f32.mrb[0].mxu0
      %v1825 = vpop.f32.mrb[0].mxu0
      %v1826 = vadd.f32 0.0, %v1825
      %v1827 = vpop.f32.mrb[0].mxu0
      %1828 = vmatprep.mubr.bf16.mxu0 0
      %1829 = vmatmul.mubr.bf16.gmra.mrb[0].mxu0 %v1699
      %v1830 = vpop.f32.mrb[0].mxu0
      %v1831 = vadd.f32 0.0, %v1830
      %v1832 = vpop.f32.mrb[0].mxu0
      %v1833 = vpop.f32.mrb[0].mxu0
      %v1834 = vadd.f32 0.0, %v1833
      %v1835 = vpop.f32.mrb[0].mxu0
      %1836 = vmatprep.mubr.bf16.mxu0 0
      %1837 = vmatmul.mubr.bf16.gmra.mrb[0].mxu0 %v1702
      %v1838 = vpop.f32.mrb[0].mxu0
      %v1839 = vadd.f32 0.0, %v1838
      %v1840 = vpop.f32.mrb[0].mxu0
      %v1841 = vpop.f32.mrb[0].mxu0
      %v1842 = vadd.f32 0.0, %v1841
      %v1843 = vpop.f32.mrb[0].mxu0
      %1844 = vmatprep.mubr.bf16.mxu0 0
      %1845 = vmatmul.mubr.bf16.gmra.mrb[0].mxu0 %v1705
      %v1846 = vpop.f32.mrb[0].mxu0
      %v1847 = vadd.f32 0.0, %v1846
      %v1848 = vpop.f32.mrb[0].mxu0
      %v1849 = vpop.f32.mrb[0].mxu0
      %v1850 = vadd.f32 0.0, %v1849
      %v1851 = vpop.f32.mrb[0].mxu0
      %1852 = vmatprep.mubr.bf16.mxu0 0
      %1853 = vmatmul.mubr.bf16.gmra.mrb[0].mxu0 %v1708
      %v1854 = vpop.f32.mrb[0].mxu0
      %v1855 = vadd.f32 0.0, %v1854
      %v1856 = vpop.f32.mrb[0].mxu0
      %v1857 = vpop.f32.mrb[0].mxu0
      %v1858 = vadd.f32 0.0, %v1857
      %v1859 = vpop.f32.mrb[0].mxu0
      %1860 = vmatprep.mubr.bf16.mxu0 0
      %1861 = vmatmul.mubr.bf16.gmra.mrb[0].mxu0 %v1711
      %v1862 = vpop.f32.mrb[0].mxu0
      %v1863 = vadd.f32 0.0, %v1862
      %v1864 = vpop.f32.mrb[0].mxu0
      %v1865 = vpop.f32.mrb[0].mxu0
      %v1866 = vadd.f32 0.0, %v1865
      %v1867 = vpop.f32.mrb[0].mxu0
      %1868 = vdwg.mxu0
      %v1869 = vadd.f32 %v1530, %v1751
      %v1870 = vadd.f32 %v1531, %v1754
      %v1871 = vadd.f32 %v1532, %v1759
      %v1872 = vadd.f32 %v1533, %v1762
      %v1873 = vadd.f32 %v1534, %v1767
      %v1874 = vadd.f32 %v1535, %v1770
      %v1875 = vadd.f32 %v1536, %v1775
      %v1876 = vadd.f32 %v1537, %v1778
      %v1877 = vadd.f32 %v1538, %v1783
      %v1878 = vadd.f32 %v1539, %v1786
      %v1879 = vadd.f32 %v1540, %v1791
      %v1880 = vadd.f32 %v1541, %v1794
      %v1881 = vadd.f32 %v1542, %v1799
      %v1882 = vadd.f32 %v1543, %v1802
      %v1883 = vadd.f32 %v1544, %v1807
      %v1884 = vadd.f32 %v1545, %v1810
      %v1885 = vadd.f32 %v1546, %v1815
      %v1886 = vadd.f32 %v1547, %v1818
      %v1887 = vadd.f32 %v1548, %v1823
      %v1888 = vadd.f32 %v1549, %v1826
      %v1889 = vadd.f32 %v1550, %v1831
      %v1890 = vadd.f32 %v1551, %v1834
      %v1891 = vadd.f32 %v1552, %v1839
      %v1892 = vadd.f32 %v1553, %v1842
      %v1893 = vadd.f32 %v1554, %v1847
      %v1894 = vadd.f32 %v1555, %v1850
      %v1895 = vadd.f32 %v1556, %v1855
      %v1896 = vadd.f32 %v1557, %v1858
      %v1897 = vadd.f32 %v1558, %v1863
      %v1898 = vadd.f32 %v1559, %v1866
      %v1899 = vld [vmem:[%s1560] sm:$0xf]
      %v1900 = vld [vmem:[%s1560 + $0x4] sm:$0xf]
      %v1901 = vld [vmem:[%s1560 + $0x8] sm:$0xf]
      %v1902 = vld [vmem:[%s1560 + $0xc] sm:$0x1]
      %v1903 = vld [vmem:[%s1560 + $0x10] sm:$0xf]
      %v1904 = vld [vmem:[%s1560 + $0x14] sm:$0xf]
      %v1905 = vld [vmem:[%s1560 + $0x18] sm:$0xf]
      %v1906 = vld [vmem:[%s1560 + $0x1c] sm:$0x1]
      %v1907 = vld [vmem:[%s1560 + $0x20] sm:$0xf]
      %v1908 = vld [vmem:[%s1560 + $0x24] sm:$0xf]
      %v1909 = vld [vmem:[%s1560 + $0x28] sm:$0xf]
      %v1910 = vld [vmem:[%s1560 + $0x2c] sm:$0x1]
      %v1911 = vld [vmem:[%s1560 + $0x30] sm:$0xf]
      %v1912 = vld [vmem:[%s1560 + $0x34] sm:$0xf]
      %v1913 = vld [vmem:[%s1560 + $0x38] sm:$0xf]
      %v1914 = vld [vmem:[%s1560 + $0x3c] sm:$0x1]
      %v1915 = vld [vmem:[%s1560 + $0x40] sm:$0xf]
      %v1916 = vld [vmem:[%s1560 + $0x44] sm:$0xf]
      %v1917 = vld [vmem:[%s1560 + $0x48] sm:$0xf]
      %v1918 = vld [vmem:[%s1560 + $0x4c] sm:$0x1]
      %v1919 = vld [vmem:[%s1560 + $0x50] sm:$0xf]
      %v1920 = vld [vmem:[%s1560 + $0x54] sm:$0xf]
      %v1921 = vld [vmem:[%s1560 + $0x58] sm:$0xf]
      %v1922 = vld [vmem:[%s1560 + $0x5c] sm:$0x1]
      %v1923 = vld [vmem:[%s1560 + $0x60] sm:$0xf]
      %v1924 = vld [vmem:[%s1560 + $0x64] sm:$0xf]
      %v1925 = vld [vmem:[%s1560 + $0x68] sm:$0xf]
      %v1926 = vld [vmem:[%s1560 + $0x6c] sm:$0x1]
      %v1927 = vld [vmem:[%s1560 + $0x70] sm:$0xf]
      %v1928 = vld [vmem:[%s1560 + $0x74] sm:$0xf]
      %v1929 = vld [vmem:[%s1560 + $0x78] sm:$0xf]
      %v1930 = vld [vmem:[%s1560 + $0x7c] sm:$0x1]
      %v1931 = vld [vmem:[%s1560 + $0x80] sm:$0xf]
      %v1932 = vld [vmem:[%s1560 + $0x84] sm:$0xf]
      %v1933 = vld [vmem:[%s1560 + $0x88] sm:$0xf]
      %v1934 = vld [vmem:[%s1560 + $0x8c] sm:$0x1]
      %v1935 = vld [vmem:[%s1560 + $0x90] sm:$0xf]
      %v1936 = vld [vmem:[%s1560 + $0x94] sm:$0xf]
      %v1937 = vld [vmem:[%s1560 + $0x98] sm:$0xf]
      %v1938 = vld [vmem:[%s1560 + $0x9c] sm:$0x1]
      %v1940 = vshrl.u32 %v1899, 16
      %v1942 = vrot.slane %v1940, 4
      %v1943 = vshll.u32 %v1899, 16
      %v1945 = vrot.slane %v1943, 5
      %v1946 = vor.u32 %v1942, %v1945
      %v1947 = vrot.slane %v1946, 4
      %v1949 = vshll.u32 %v1900, 16
      %v1951 = vrot.slane %v1949, 5
      %v1952 = vsel %vm282, %v1947, %v1951
      %v1953 = vshrl.u32 %v1900, 16
      %v1955 = vrot.slane %v1953, 4
      %v1956 = vor.u32 %v1955, %v1951
      %v1957 = vrot.slane %v1956, 4
      %v1959 = vshll.u32 %v1901, 16
      %v1961 = vrot.slane %v1959, 5
      %v1962 = vsel %vm282, %v1957, %v1961
      %v1963 = vshrl.u32 %v1901, 16
      %v1965 = vrot.slane %v1963, 4
      %v1966 = vor.u32 %v1965, %v1961
      %v1967 = vrot.slane %v1966, 4
      %v1969 = vshll.u32 %v1902, 16
      %v1971 = vrot.slane %v1969, 5
      %v1972 = vsel %vm282, %v1967, %v1971
      %v1974 = vshrl.u32 %v1903, 16
      %v1976 = vrot.slane %v1974, 4
      %v1977 = vshll.u32 %v1903, 16
      %v1979 = vrot.slane %v1977, 5
      %v1980 = vor.u32 %v1976, %v1979
      %v1981 = vrot.slane %v1980, 4
      %v1983 = vshll.u32 %v1904, 16
      %v1985 = vrot.slane %v1983, 5
      %v1986 = vsel %vm282, %v1981, %v1985
      %v1987 = vshrl.u32 %v1904, 16
      %v1989 = vrot.slane %v1987, 4
      %v1990 = vor.u32 %v1989, %v1985
      %v1991 = vrot.slane %v1990, 4
      %v1993 = vshll.u32 %v1905, 16
      %v1995 = vrot.slane %v1993, 5
      %v1996 = vsel %vm282, %v1991, %v1995
      %v1997 = vshrl.u32 %v1905, 16
      %v1999 = vrot.slane %v1997, 4
      %v2000 = vor.u32 %v1999, %v1995
      %v2001 = vrot.slane %v2000, 4
      %v2003 = vshll.u32 %v1906, 16
      %v2005 = vrot.slane %v2003, 5
      %v2006 = vsel %vm282, %v2001, %v2005
      %v2008 = vshrl.u32 %v1907, 16
      %v2010 = vrot.slane %v2008, 4
      %v2011 = vshll.u32 %v1907, 16
      %v2013 = vrot.slane %v2011, 5
      %v2014 = vor.u32 %v2010, %v2013
      %v2015 = vrot.slane %v2014, 4
      %v2017 = vshll.u32 %v1908, 16
      %v2019 = vrot.slane %v2017, 5
      %v2020 = vsel %vm282, %v2015, %v2019
      %v2021 = vshrl.u32 %v1908, 16
      %v2023 = vrot.slane %v2021, 4
      %v2024 = vor.u32 %v2023, %v2019
      %v2025 = vrot.slane %v2024, 4
      %v2027 = vshll.u32 %v1909, 16
      %v2029 = vrot.slane %v2027, 5
      %v2030 = vsel %vm282, %v2025, %v2029
      %v2031 = vshrl.u32 %v1909, 16
      %v2033 = vrot.slane %v2031, 4
      %v2034 = vor.u32 %v2033, %v2029
      %v2035 = vrot.slane %v2034, 4
      %v2037 = vshll.u32 %v1910, 16
      %v2039 = vrot.slane %v2037, 5
      %v2040 = vsel %vm282, %v2035, %v2039
      %v2042 = vshrl.u32 %v1911, 16
      %v2044 = vrot.slane %v2042, 4
      %v2045 = vshll.u32 %v1911, 16
      %v2047 = vrot.slane %v2045, 5
      %v2048 = vor.u32 %v2044, %v2047
      %v2049 = vrot.slane %v2048, 4
      %v2051 = vshll.u32 %v1912, 16
      %v2053 = vrot.slane %v2051, 5
      %v2054 = vsel %vm282, %v2049, %v2053
      %v2055 = vshrl.u32 %v1912, 16
      %v2057 = vrot.slane %v2055, 4
      %v2058 = vor.u32 %v2057, %v2053
      %v2059 = vrot.slane %v2058, 4
      %v2061 = vshll.u32 %v1913, 16
      %v2063 = vrot.slane %v2061, 5
      %v2064 = vsel %vm282, %v2059, %v2063
      %v2065 = vshrl.u32 %v1913, 16
      %v2067 = vrot.slane %v2065, 4
      %v2068 = vor.u32 %v2067, %v2063
      %v2069 = vrot.slane %v2068, 4
      %v2071 = vshll.u32 %v1914, 16
      %v2073 = vrot.slane %v2071, 5
      %v2074 = vsel %vm282, %v2069, %v2073
      %v2076 = vshrl.u32 %v1915, 16
      %v2078 = vrot.slane %v2076, 4
      %v2079 = vshll.u32 %v1915, 16
      %v2081 = vrot.slane %v2079, 5
      %v2082 = vor.u32 %v2078, %v2081
      %v2083 = vrot.slane %v2082, 4
      %v2085 = vshll.u32 %v1916, 16
      %v2087 = vrot.slane %v2085, 5
      %v2088 = vsel %vm282, %v2083, %v2087
      %v2089 = vshrl.u32 %v1916, 16
      %v2091 = vrot.slane %v2089, 4
      %v2092 = vor.u32 %v2091, %v2087
      %v2093 = vrot.slane %v2092, 4
      %v2095 = vshll.u32 %v1917, 16
      %v2097 = vrot.slane %v2095, 5
      %v2098 = vsel %vm282, %v2093, %v2097
      %v2099 = vshrl.u32 %v1917, 16
      %v2101 = vrot.slane %v2099, 4
      %v2102 = vor.u32 %v2101, %v2097
      %v2103 = vrot.slane %v2102, 4
      %v2105 = vshll.u32 %v1918, 16
      %v2107 = vrot.slane %v2105, 5
      %v2108 = vsel %vm282, %v2103, %v2107
      %v2110 = vshrl.u32 %v1919, 16
      %v2112 = vrot.slane %v2110, 4
      %v2113 = vshll.u32 %v1919, 16
      %v2115 = vrot.slane %v2113, 5
      %v2116 = vor.u32 %v2112, %v2115
      %v2117 = vrot.slane %v2116, 4
      %v2119 = vshll.u32 %v1920, 16
      %v2121 = vrot.slane %v2119, 5
      %v2122 = vsel %vm282, %v2117, %v2121
      %v2123 = vshrl.u32 %v1920, 16
      %v2125 = vrot.slane %v2123, 4
      %v2126 = vor.u32 %v2125, %v2121
      %v2127 = vrot.slane %v2126, 4
      %v2129 = vshll.u32 %v1921, 16
      %v2131 = vrot.slane %v2129, 5
      %v2132 = vsel %vm282, %v2127, %v2131
      %v2133 = vshrl.u32 %v1921, 16
      %v2135 = vrot.slane %v2133, 4
      %v2136 = vor.u32 %v2135, %v2131
      %v2137 = vrot.slane %v2136, 4
      %v2139 = vshll.u32 %v1922, 16
      %v2141 = vrot.slane %v2139, 5
      %v2142 = vsel %vm282, %v2137, %v2141
      %v2144 = vshrl.u32 %v1923, 16
      %v2146 = vrot.slane %v2144, 4
      %v2147 = vshll.u32 %v1923, 16
      %v2149 = vrot.slane %v2147, 5
      %v2150 = vor.u32 %v2146, %v2149
      %v2151 = vrot.slane %v2150, 4
      %v2153 = vshll.u32 %v1924, 16
      %v2155 = vrot.slane %v2153, 5
      %v2156 = vsel %vm282, %v2151, %v2155
      %v2157 = vshrl.u32 %v1924, 16
      %v2159 = vrot.slane %v2157, 4
      %v2160 = vor.u32 %v2159, %v2155
      %v2161 = vrot.slane %v2160, 4
      %v2163 = vshll.u32 %v1925, 16
      %v2165 = vrot.slane %v2163, 5
      %v2166 = vsel %vm282, %v2161, %v2165
      %v2167 = vshrl.u32 %v1925, 16
      %v2169 = vrot.slane %v2167, 4
      %v2170 = vor.u32 %v2169, %v2165
      %v2171 = vrot.slane %v2170, 4
      %v2173 = vshll.u32 %v1926, 16
      %v2175 = vrot.slane %v2173, 5
      %v2176 = vsel %vm282, %v2171, %v2175
      %v2178 = vshrl.u32 %v1927, 16
      %v2180 = vrot.slane %v2178, 4
      %v2181 = vshll.u32 %v1927, 16
      %v2183 = vrot.slane %v2181, 5
      %v2184 = vor.u32 %v2180, %v2183
      %v2185 = vrot.slane %v2184, 4
      %v2187 = vshll.u32 %v1928, 16
      %v2189 = vrot.slane %v2187, 5
      %v2190 = vsel %vm282, %v2185, %v2189
      %v2191 = vshrl.u32 %v1928, 16
      %v2193 = vrot.slane %v2191, 4
      %v2194 = vor.u32 %v2193, %v2189
      %v2195 = vrot.slane %v2194, 4
      %v2197 = vshll.u32 %v1929, 16
      %v2199 = vrot.slane %v2197, 5
      %v2200 = vsel %vm282, %v2195, %v2199
      %v2201 = vshrl.u32 %v1929, 16
      %v2203 = vrot.slane %v2201, 4
      %v2204 = vor.u32 %v2203, %v2199
      %v2205 = vrot.slane %v2204, 4
      %v2207 = vshll.u32 %v1930, 16
      %v2209 = vrot.slane %v2207, 5
      %v2210 = vsel %vm282, %v2205, %v2209
      %v2212 = vshrl.u32 %v1931, 16
      %v2214 = vrot.slane %v2212, 4
      %v2215 = vshll.u32 %v1931, 16
      %v2217 = vrot.slane %v2215, 5
      %v2218 = vor.u32 %v2214, %v2217
      %v2219 = vrot.slane %v2218, 4
      %v2221 = vshll.u32 %v1932, 16
      %v2223 = vrot.slane %v2221, 5
      %v2224 = vsel %vm282, %v2219, %v2223
      %v2225 = vshrl.u32 %v1932, 16
      %v2227 = vrot.slane %v2225, 4
      %v2228 = vor.u32 %v2227, %v2223
      %v2229 = vrot.slane %v2228, 4
      %v2231 = vshll.u32 %v1933, 16
      %v2233 = vrot.slane %v2231, 5
      %v2234 = vsel %vm282, %v2229, %v2233
      %v2235 = vshrl.u32 %v1933, 16
      %v2237 = vrot.slane %v2235, 4
      %v2238 = vor.u32 %v2237, %v2233
      %v2239 = vrot.slane %v2238, 4
      %v2241 = vshll.u32 %v1934, 16
      %v2243 = vrot.slane %v2241, 5
      %v2244 = vsel %vm282, %v2239, %v2243
      %v2246 = vshrl.u32 %v1935, 16
      %v2248 = vrot.slane %v2246, 4
      %v2249 = vshll.u32 %v1935, 16
      %v2251 = vrot.slane %v2249, 5
      %v2252 = vor.u32 %v2248, %v2251
      %v2253 = vrot.slane %v2252, 4
      %v2255 = vshll.u32 %v1936, 16
      %v2257 = vrot.slane %v2255, 5
      %v2258 = vsel %vm282, %v2253, %v2257
      %v2259 = vshrl.u32 %v1936, 16
      %v2261 = vrot.slane %v2259, 4
      %v2262 = vor.u32 %v2261, %v2257
      %v2263 = vrot.slane %v2262, 4
      %v2265 = vshll.u32 %v1937, 16
      %v2267 = vrot.slane %v2265, 5
      %v2268 = vsel %vm282, %v2263, %v2267
      %v2269 = vshrl.u32 %v1937, 16
      %v2271 = vrot.slane %v2269, 4
      %v2272 = vor.u32 %v2271, %v2267
      %v2273 = vrot.slane %v2272, 4
      %v2275 = vshll.u32 %v1938, 16
      %v2277 = vrot.slane %v2275, 5
      %v2278 = vsel %vm282, %v2273, %v2277
      %s2279 = scalar_lea.vmem %s1, 8
      %v2280 = vld [vmem:[%s2279] sm:$0x3]
      %v2281 = vunpack.c.l.b16 %v1952
      %v2282 = vunpack.c.l.b16 %v1962
      %v2283 = vunpack.c.l.b16 %v1972
      %v2284 = vunpack.c.l.b16 %v1986
      %v2285 = vunpack.c.l.b16 %v1996
      %v2286 = vunpack.c.l.b16 %v2006
      %v2287 = vunpack.c.l.b16 %v2020
      %v2288 = vunpack.c.l.b16 %v2030
      %v2289 = vunpack.c.l.b16 %v2040
      %v2290 = vunpack.c.l.b16 %v2054
      %v2291 = vunpack.c.l.b16 %v2064
      %v2292 = vunpack.c.l.b16 %v2074
      %v2293 = vunpack.c.l.b16 %v2088
      %v2294 = vunpack.c.l.b16 %v2098
      %v2295 = vunpack.c.l.b16 %v2108
      %v2296 = vunpack.c.l.b16 %v2122
      %v2297 = vunpack.c.l.b16 %v2132
      %v2298 = vunpack.c.l.b16 %v2142
      %v2299 = vunpack.c.l.b16 %v2156
      %v2300 = vunpack.c.l.b16 %v2166
      %v2301 = vunpack.c.l.b16 %v2176
      %v2302 = vunpack.c.l.b16 %v2190
      %v2303 = vunpack.c.l.b16 %v2200
      %v2304 = vunpack.c.l.b16 %v2210
      %v2305 = vunpack.c.l.b16 %v2224
      %v2306 = vunpack.c.l.b16 %v2234
      %v2307 = vunpack.c.l.b16 %v2244
      %v2308 = vunpack.c.l.b16 %v2258
      %v2309 = vunpack.c.l.b16 %v2268
      %v2310 = vunpack.c.l.b16 %v2278
      %v2311 = vpack.c.b16 %v2282, %v2281
      %v2312 = vpack.c.b16 %v2284, %v2283
      %v2313 = vpack.c.b16 %v2286, %v2285
      %v2314 = vpack.c.b16 %v2288, %v2287
      %v2315 = vpack.c.b16 %v2290, %v2289
      %v2316 = vpack.c.b16 %v2292, %v2291
      %v2317 = vpack.c.b16 %v2294, %v2293
      %v2318 = vpack.c.b16 %v2296, %v2295
      %v2319 = vpack.c.b16 %v2298, %v2297
      %v2320 = vpack.c.b16 %v2300, %v2299
      %v2321 = vpack.c.b16 %v2302, %v2301
      %v2322 = vpack.c.b16 %v2304, %v2303
      %v2323 = vpack.c.b16 %v2306, %v2305
      %v2324 = vpack.c.b16 %v2308, %v2307
      %v2325 = vpack.c.b16 %v2310, %v2309
      %v2327 = vsel %vm670, %v2311, 0
      %v2330 = vsel %vm670, %v2312, 0
      %v2333 = vsel %vm670, %v2313, 0
      %v2336 = vsel %vm670, %v2314, 0
      %v2339 = vsel %vm670, %v2315, 0
      %v2342 = vsel %vm670, %v2316, 0
      %v2345 = vsel %vm670, %v2317, 0
      %v2348 = vsel %vm670, %v2318, 0
      %v2351 = vsel %vm670, %v2319, 0
      %v2354 = vsel %vm670, %v2320, 0
      %v2357 = vsel %vm670, %v2321, 0
      %v2360 = vsel %vm670, %v2322, 0
      %v2363 = vsel %vm670, %v2323, 0
      %v2366 = vsel %vm670, %v2324, 0
      %v2369 = vsel %vm670, %v2325, 0
      %v2372 = vsel %vm716, %v2280, 0
      %2374 = vmatprep.subr.bf16.mxu0 0
      %2375 = vmatpush1.bf16.msra.mxu0 %v2372
      %2376 = vmatprep.subr.bf16.mxu0 0
      %2377 = vmatpush1.bf16.msra.mxu0 0
      %2378 = vmatprep.subr.bf16.mxu0 0
      %2379 = vmatpush1.bf16.msra.mxu0 0
      %2380 = vmatprep.subr.bf16.mxu0 0
      %2381 = vmatpush1.bf16.msra.mxu0 0
      %2382 = vmatprep.subr.bf16.mxu0 0
      %2383 = vmatpush1.bf16.msra.mxu0 0
      %2384 = vmatprep.subr.bf16.mxu0 0
      %2385 = vmatpush1.bf16.msra.mxu0 0
      %2386 = vmatprep.subr.bf16.mxu0 0
      %2387 = vmatpush1.bf16.msra.mxu0 0
      %2388 = vmatprep.subr.bf16.mxu0 0
      %2389 = vmatpush1.bf16.msra.mxu0 0
      %2390 = vmatprep.subr.bf16.mxu0 0
      %2391 = vmatpush1.bf16.msra.mxu0 0
      %2392 = vmatprep.subr.bf16.mxu0 0
      %2393 = vmatpush1.bf16.msra.mxu0 0
      %2394 = vmatprep.subr.bf16.mxu0 0
      %2395 = vmatpush1.bf16.msra.mxu0 0
      %2396 = vmatprep.subr.bf16.mxu0 0
      %2397 = vmatpush1.bf16.msra.mxu0 0
      %2398 = vmatprep.subr.bf16.mxu0 0
      %2399 = vmatpush1.bf16.msra.mxu0 0
      %2400 = vmatprep.subr.bf16.mxu0 0
      %2401 = vmatpush1.bf16.msra.mxu0 0
      %2402 = vmatprep.subr.bf16.mxu0 0
      %2403 = vmatpush1.bf16.msra.mxu0 0
      %2404 = vmatprep.subr.bf16.mxu0 0
      %2405 = vmatpush1.bf16.msra.mxu0 0
      %2406 = vmatprep.mubr.bf16.mxu0 0
      %2407 = vmatmul.mubr.bf16.gmra.mrb[0].mxu0 %v2327
      %v2408 = vpop.f32.mrb[0].mxu0
      %v2409 = vadd.f32 0.0, %v2408
      %v2410 = vpop.f32.mrb[0].mxu0
      %v2411 = vpop.f32.mrb[0].mxu0
      %v2412 = vadd.f32 0.0, %v2411
      %v2413 = vpop.f32.mrb[0].mxu0
      %2414 = vmatprep.mubr.bf16.mxu0 0
      %2415 = vmatmul.mubr.bf16.gmra.mrb[0].mxu0 %v2330
      %v2416 = vpop.f32.mrb[0].mxu0
      %v2417 = vadd.f32 0.0, %v2416
      %v2418 = vpop.f32.mrb[0].mxu0
      %v2419 = vpop.f32.mrb[0].mxu0
      %v2420 = vadd.f32 0.0, %v2419
      %v2421 = vpop.f32.mrb[0].mxu0
      %2422 = vmatprep.mubr.bf16.mxu0 0
      %2423 = vmatmul.mubr.bf16.gmra.mrb[0].mxu0 %v2333
      %v2424 = vpop.f32.mrb[0].mxu0
      %v2425 = vadd.f32 0.0, %v2424
      %v2426 = vpop.f32.mrb[0].mxu0
      %v2427 = vpop.f32.mrb[0].mxu0
      %v2428 = vadd.f32 0.0, %v2427
      %v2429 = vpop.f32.mrb[0].mxu0
      %2430 = vmatprep.mubr.bf16.mxu0 0
      %2431 = vmatmul.mubr.bf16.gmra.mrb[0].mxu0 %v2336
      %v2432 = vpop.f32.mrb[0].mxu0
      %v2433 = vadd.f32 0.0, %v2432
      %v2434 = vpop.f32.mrb[0].mxu0
      %v2435 = vpop.f32.mrb[0].mxu0
      %v2436 = vadd.f32 0.0, %v2435
      %v2437 = vpop.f32.mrb[0].mxu0
      %2438 = vmatprep.mubr.bf16.mxu0 0
      %2439 = vmatmul.mubr.bf16.gmra.mrb[0].mxu0 %v2339
      %v2440 = vpop.f32.mrb[0].mxu0
      %v2441 = vadd.f32 0.0, %v2440
      %v2442 = vpop.f32.mrb[0].mxu0
      %v2443 = vpop.f32.mrb[0].mxu0
      %v2444 = vadd.f32 0.0, %v2443
      %v2445 = vpop.f32.mrb[0].mxu0
      %2446 = vmatprep.mubr.bf16.mxu0 0
      %2447 = vmatmul.mubr.bf16.gmra.mrb[0].mxu0 %v2342
      %v2448 = vpop.f32.mrb[0].mxu0
      %v2449 = vadd.f32 0.0, %v2448
      %v2450 = vpop.f32.mrb[0].mxu0
      %v2451 = vpop.f32.mrb[0].mxu0
      %v2452 = vadd.f32 0.0, %v2451
      %v2453 = vpop.f32.mrb[0].mxu0
      %2454 = vmatprep.mubr.bf16.mxu0 0
      %2455 = vmatmul.mubr.bf16.gmra.mrb[0].mxu0 %v2345
      %v2456 = vpop.f32.mrb[0].mxu0
      %v2457 = vadd.f32 0.0, %v2456
      %v2458 = vpop.f32.mrb[0].mxu0
      %v2459 = vpop.f32.mrb[0].mxu0
      %v2460 = vadd.f32 0.0, %v2459
      %v2461 = vpop.f32.mrb[0].mxu0
      %2462 = vmatprep.mubr.bf16.mxu0 0
      %2463 = vmatmul.mubr.bf16.gmra.mrb[0].mxu0 %v2348
      %v2464 = vpop.f32.mrb[0].mxu0
      %v2465 = vadd.f32 0.0, %v2464
      %v2466 = vpop.f32.mrb[0].mxu0
      %v2467 = vpop.f32.mrb[0].mxu0
      %v2468 = vadd.f32 0.0, %v2467
      %v2469 = vpop.f32.mrb[0].mxu0
      %2470 = vmatprep.mubr.bf16.mxu0 0
      %2471 = vmatmul.mubr.bf16.gmra.mrb[0].mxu0 %v2351
      %v2472 = vpop.f32.mrb[0].mxu0
      %v2473 = vadd.f32 0.0, %v2472
      %v2474 = vpop.f32.mrb[0].mxu0
      %v2475 = vpop.f32.mrb[0].mxu0
      %v2476 = vadd.f32 0.0, %v2475
      %v2477 = vpop.f32.mrb[0].mxu0
      %2478 = vmatprep.mubr.bf16.mxu0 0
      %2479 = vmatmul.mubr.bf16.gmra.mrb[0].mxu0 %v2354
      %v2480 = vpop.f32.mrb[0].mxu0
      %v2481 = vadd.f32 0.0, %v2480
      %v2482 = vpop.f32.mrb[0].mxu0
      %v2483 = vpop.f32.mrb[0].mxu0
      %v2484 = vadd.f32 0.0, %v2483
      %v2485 = vpop.f32.mrb[0].mxu0
      %2486 = vmatprep.mubr.bf16.mxu0 0
      %2487 = vmatmul.mubr.bf16.gmra.mrb[0].mxu0 %v2357
      %v2488 = vpop.f32.mrb[0].mxu0
      %v2489 = vadd.f32 0.0, %v2488
      %v2490 = vpop.f32.mrb[0].mxu0
      %v2491 = vpop.f32.mrb[0].mxu0
      %v2492 = vadd.f32 0.0, %v2491
      %v2493 = vpop.f32.mrb[0].mxu0
      %2494 = vmatprep.mubr.bf16.mxu0 0
      %2495 = vmatmul.mubr.bf16.gmra.mrb[0].mxu0 %v2360
      %v2496 = vpop.f32.mrb[0].mxu0
      %v2497 = vadd.f32 0.0, %v2496
      %v2498 = vpop.f32.mrb[0].mxu0
      %v2499 = vpop.f32.mrb[0].mxu0
      %v2500 = vadd.f32 0.0, %v2499
      %v2501 = vpop.f32.mrb[0].mxu0
      %2502 = vmatprep.mubr.bf16.mxu0 0
      %2503 = vmatmul.mubr.bf16.gmra.mrb[0].mxu0 %v2363
      %v2504 = vpop.f32.mrb[0].mxu0
      %v2505 = vadd.f32 0.0, %v2504
      %v2506 = vpop.f32.mrb[0].mxu0
      %v2507 = vpop.f32.mrb[0].mxu0
      %v2508 = vadd.f32 0.0, %v2507
      %v2509 = vpop.f32.mrb[0].mxu0
      %2510 = vmatprep.mubr.bf16.mxu0 0
      %2511 = vmatmul.mubr.bf16.gmra.mrb[0].mxu0 %v2366
      %v2512 = vpop.f32.mrb[0].mxu0
      %v2513 = vadd.f32 0.0, %v2512
      %v2514 = vpop.f32.mrb[0].mxu0
      %v2515 = vpop.f32.mrb[0].mxu0
      %v2516 = vadd.f32 0.0, %v2515
      %v2517 = vpop.f32.mrb[0].mxu0
      %2518 = vmatprep.mubr.bf16.mxu0 0
      %2519 = vmatmul.mubr.bf16.gmra.mrb[0].mxu0 %v2369
      %v2520 = vpop.f32.mrb[0].mxu0
      %v2521 = vadd.f32 0.0, %v2520
      %v2522 = vpop.f32.mrb[0].mxu0
      %v2523 = vpop.f32.mrb[0].mxu0
      %v2524 = vadd.f32 0.0, %v2523
      %v2525 = vpop.f32.mrb[0].mxu0
      %2526 = vdwg.mxu0
      %v2527 = vadd.f32 %v1869, %v2409
      %v2528 = vadd.f32 %v1870, %v2412
      %v2529 = vadd.f32 %v1871, %v2417
      %v2530 = vadd.f32 %v1872, %v2420
      %v2531 = vadd.f32 %v1873, %v2425
      %v2532 = vadd.f32 %v1874, %v2428
      %v2533 = vadd.f32 %v1875, %v2433
      %v2534 = vadd.f32 %v1876, %v2436
      %v2535 = vadd.f32 %v1877, %v2441
      %v2536 = vadd.f32 %v1878, %v2444
      %v2537 = vadd.f32 %v1879, %v2449
      %v2538 = vadd.f32 %v1880, %v2452
      %v2539 = vadd.f32 %v1881, %v2457
      %v2540 = vadd.f32 %v1882, %v2460
      %v2541 = vadd.f32 %v1883, %v2465
      %v2542 = vadd.f32 %v1884, %v2468
      %v2543 = vadd.f32 %v1885, %v2473
      %v2544 = vadd.f32 %v1886, %v2476
      %v2545 = vadd.f32 %v1887, %v2481
      %v2546 = vadd.f32 %v1888, %v2484
      %v2547 = vadd.f32 %v1889, %v2489
      %v2548 = vadd.f32 %v1890, %v2492
      %v2549 = vadd.f32 %v1891, %v2497
      %v2550 = vadd.f32 %v1892, %v2500
      %v2551 = vadd.f32 %v1893, %v2505
      %v2552 = vadd.f32 %v1894, %v2508
      %v2553 = vadd.f32 %v1895, %v2513
      %v2554 = vadd.f32 %v1896, %v2516
      %v2555 = vadd.f32 %v1897, %v2521
      %v2556 = vadd.f32 %v1898, %v2524
      %v2557 = vld [vmem:[%s1560] sm:$0xe]
      %v2558 = vld [vmem:[%s1560 + $0x10] sm:$0xe]
      %v2559 = vld [vmem:[%s1560 + $0x20] sm:$0xe]
      %v2560 = vld [vmem:[%s1560 + $0x30] sm:$0xe]
      %v2561 = vld [vmem:[%s1560 + $0x40] sm:$0xe]
      %v2562 = vld [vmem:[%s1560 + $0x50] sm:$0xe]
      %v2563 = vld [vmem:[%s1560 + $0x60] sm:$0xe]
      %v2564 = vld [vmem:[%s1560 + $0x70] sm:$0xe]
      %v2565 = vld [vmem:[%s1560 + $0x80] sm:$0xe]
      %v2566 = vld [vmem:[%s1560 + $0x90] sm:$0xe]
      %v2607 = vrot.slane %v2557, 5
      %v2608 = vrot.slane %v2607, 4
      %v2609 = vrot.slane %v1900, 5
      %v2610 = vsel %vm1181, %v2608, %v2609
      %v2611 = vrot.slane %v2609, 4
      %v2612 = vrot.slane %v1901, 5
      %v2613 = vsel %vm1181, %v2611, %v2612
      %v2614 = vrot.slane %v2612, 4
      %v2615 = vrot.slane %v1902, 5
      %v2616 = vsel %vm1181, %v2614, %v2615
      %v2617 = vrot.slane %v2558, 5
      %v2618 = vrot.slane %v2617, 4
      %v2619 = vrot.slane %v1904, 5
      %v2620 = vsel %vm1181, %v2618, %v2619
      %v2621 = vrot.slane %v2619, 4
      %v2622 = vrot.slane %v1905, 5
      %v2623 = vsel %vm1181, %v2621, %v2622
      %v2624 = vrot.slane %v2622, 4
      %v2625 = vrot.slane %v1906, 5
      %v2626 = vsel %vm1181, %v2624, %v2625
      %v2627 = vrot.slane %v2559, 5
      %v2628 = vrot.slane %v2627, 4
      %v2629 = vrot.slane %v1908, 5
      %v2630 = vsel %vm1181, %v2628, %v2629
      %v2631 = vrot.slane %v2629, 4
      %v2632 = vrot.slane %v1909, 5
      %v2633 = vsel %vm1181, %v2631, %v2632
      %v2634 = vrot.slane %v2632, 4
      %v2635 = vrot.slane %v1910, 5
      %v2636 = vsel %vm1181, %v2634, %v2635
      %v2637 = vrot.slane %v2560, 5
      %v2638 = vrot.slane %v2637, 4
      %v2639 = vrot.slane %v1912, 5
      %v2640 = vsel %vm1181, %v2638, %v2639
      %v2641 = vrot.slane %v2639, 4
      %v2642 = vrot.slane %v1913, 5
      %v2643 = vsel %vm1181, %v2641, %v2642
      %v2644 = vrot.slane %v2642, 4
      %v2645 = vrot.slane %v1914, 5
      %v2646 = vsel %vm1181, %v2644, %v2645
      %v2647 = vrot.slane %v2561, 5
      %v2648 = vrot.slane %v2647, 4
      %v2649 = vrot.slane %v1916, 5
      %v2650 = vsel %vm1181, %v2648, %v2649
      %v2651 = vrot.slane %v2649, 4
      %v2652 = vrot.slane %v1917, 5
      %v2653 = vsel %vm1181, %v2651, %v2652
      %v2654 = vrot.slane %v2652, 4
      %v2655 = vrot.slane %v1918, 5
      %v2656 = vsel %vm1181, %v2654, %v2655
      %v2657 = vrot.slane %v2562, 5
      %v2658 = vrot.slane %v2657, 4
      %v2659 = vrot.slane %v1920, 5
      %v2660 = vsel %vm1181, %v2658, %v2659
      %v2661 = vrot.slane %v2659, 4
      %v2662 = vrot.slane %v1921, 5
      %v2663 = vsel %vm1181, %v2661, %v2662
      %v2664 = vrot.slane %v2662, 4
      %v2665 = vrot.slane %v1922, 5
      %v2666 = vsel %vm1181, %v2664, %v2665
      %v2667 = vrot.slane %v2563, 5
      %v2668 = vrot.slane %v2667, 4
      %v2669 = vrot.slane %v1924, 5
      %v2670 = vsel %vm1181, %v2668, %v2669
      %v2671 = vrot.slane %v2669, 4
      %v2672 = vrot.slane %v1925, 5
      %v2673 = vsel %vm1181, %v2671, %v2672
      %v2674 = vrot.slane %v2672, 4
      %v2675 = vrot.slane %v1926, 5
      %v2676 = vsel %vm1181, %v2674, %v2675
      %v2677 = vrot.slane %v2564, 5
      %v2678 = vrot.slane %v2677, 4
      %v2679 = vrot.slane %v1928, 5
      %v2680 = vsel %vm1181, %v2678, %v2679
      %v2681 = vrot.slane %v2679, 4
      %v2682 = vrot.slane %v1929, 5
      %v2683 = vsel %vm1181, %v2681, %v2682
      %v2684 = vrot.slane %v2682, 4
      %v2685 = vrot.slane %v1930, 5
      %v2686 = vsel %vm1181, %v2684, %v2685
      %v2687 = vrot.slane %v2565, 5
      %v2688 = vrot.slane %v2687, 4
      %v2689 = vrot.slane %v1932, 5
      %v2690 = vsel %vm1181, %v2688, %v2689
      %v2691 = vrot.slane %v2689, 4
      %v2692 = vrot.slane %v1933, 5
      %v2693 = vsel %vm1181, %v2691, %v2692
      %v2694 = vrot.slane %v2692, 4
      %v2695 = vrot.slane %v1934, 5
      %v2696 = vsel %vm1181, %v2694, %v2695
      %v2697 = vrot.slane %v2566, 5
      %v2698 = vrot.slane %v2697, 4
      %v2699 = vrot.slane %v1936, 5
      %v2700 = vsel %vm1181, %v2698, %v2699
      %v2701 = vrot.slane %v2699, 4
      %v2702 = vrot.slane %v1937, 5
      %v2703 = vsel %vm1181, %v2701, %v2702
      %v2704 = vrot.slane %v2702, 4
      %v2705 = vrot.slane %v1938, 5
      %v2706 = vsel %vm1181, %v2704, %v2705
      %s2707 = scalar_lea.vmem %s1, 10
      %v2708 = vld [vmem:[%s2707] sm:$0x3]
      %v2709 = vunpack.c.l.b16 %v2610
      %v2710 = vunpack.c.l.b16 %v2613
      %v2711 = vunpack.c.l.b16 %v2616
      %v2712 = vunpack.c.l.b16 %v2620
      %v2713 = vunpack.c.l.b16 %v2623
      %v2714 = vunpack.c.l.b16 %v2626
      %v2715 = vunpack.c.l.b16 %v2630
      %v2716 = vunpack.c.l.b16 %v2633
      %v2717 = vunpack.c.l.b16 %v2636
      %v2718 = vunpack.c.l.b16 %v2640
      %v2719 = vunpack.c.l.b16 %v2643
      %v2720 = vunpack.c.l.b16 %v2646
      %v2721 = vunpack.c.l.b16 %v2650
      %v2722 = vunpack.c.l.b16 %v2653
      %v2723 = vunpack.c.l.b16 %v2656
      %v2724 = vunpack.c.l.b16 %v2660
      %v2725 = vunpack.c.l.b16 %v2663
      %v2726 = vunpack.c.l.b16 %v2666
      %v2727 = vunpack.c.l.b16 %v2670
      %v2728 = vunpack.c.l.b16 %v2673
      %v2729 = vunpack.c.l.b16 %v2676
      %v2730 = vunpack.c.l.b16 %v2680
      %v2731 = vunpack.c.l.b16 %v2683
      %v2732 = vunpack.c.l.b16 %v2686
      %v2733 = vunpack.c.l.b16 %v2690
      %v2734 = vunpack.c.l.b16 %v2693
      %v2735 = vunpack.c.l.b16 %v2696
      %v2736 = vunpack.c.l.b16 %v2700
      %v2737 = vunpack.c.l.b16 %v2703
      %v2738 = vunpack.c.l.b16 %v2706
      %v2739 = vpack.c.b16 %v2710, %v2709
      %v2740 = vpack.c.b16 %v2712, %v2711
      %v2741 = vpack.c.b16 %v2714, %v2713
      %v2742 = vpack.c.b16 %v2716, %v2715
      %v2743 = vpack.c.b16 %v2718, %v2717
      %v2744 = vpack.c.b16 %v2720, %v2719
      %v2745 = vpack.c.b16 %v2722, %v2721
      %v2746 = vpack.c.b16 %v2724, %v2723
      %v2747 = vpack.c.b16 %v2726, %v2725
      %v2748 = vpack.c.b16 %v2728, %v2727
      %v2749 = vpack.c.b16 %v2730, %v2729
      %v2750 = vpack.c.b16 %v2732, %v2731
      %v2751 = vpack.c.b16 %v2734, %v2733
      %v2752 = vpack.c.b16 %v2736, %v2735
      %v2753 = vpack.c.b16 %v2738, %v2737
      %v2755 = vsel %vm670, %v2739, 0
      %v2758 = vsel %vm670, %v2740, 0
      %v2761 = vsel %vm670, %v2741, 0
      %v2764 = vsel %vm670, %v2742, 0
      %v2767 = vsel %vm670, %v2743, 0
      %v2770 = vsel %vm670, %v2744, 0
      %v2773 = vsel %vm670, %v2745, 0
      %v2776 = vsel %vm670, %v2746, 0
      %v2779 = vsel %vm670, %v2747, 0
      %v2782 = vsel %vm670, %v2748, 0
      %v2785 = vsel %vm670, %v2749, 0
      %v2788 = vsel %vm670, %v2750, 0
      %v2791 = vsel %vm670, %v2751, 0
      %v2794 = vsel %vm670, %v2752, 0
      %v2797 = vsel %vm670, %v2753, 0
      %v2800 = vsel %vm716, %v2708, 0
      %2802 = vmatprep.subr.bf16.mxu0 0
      %2803 = vmatpush1.bf16.msra.mxu0 %v2800
      %2804 = vmatprep.subr.bf16.mxu0 0
      %2805 = vmatpush1.bf16.msra.mxu0 0
      %2806 = vmatprep.subr.bf16.mxu0 0
      %2807 = vmatpush1.bf16.msra.mxu0 0
      %2808 = vmatprep.subr.bf16.mxu0 0
      %2809 = vmatpush1.bf16.msra.mxu0 0
      %2810 = vmatprep.subr.bf16.mxu0 0
      %2811 = vmatpush1.bf16.msra.mxu0 0
      %2812 = vmatprep.subr.bf16.mxu0 0
      %2813 = vmatpush1.bf16.msra.mxu0 0
      %2814 = vmatprep.subr.bf16.mxu0 0
      %2815 = vmatpush1.bf16.msra.mxu0 0
      %2816 = vmatprep.subr.bf16.mxu0 0
      %2817 = vmatpush1.bf16.msra.mxu0 0
      %2818 = vmatprep.subr.bf16.mxu0 0
      %2819 = vmatpush1.bf16.msra.mxu0 0
      %2820 = vmatprep.subr.bf16.mxu0 0
      %2821 = vmatpush1.bf16.msra.mxu0 0
      %2822 = vmatprep.subr.bf16.mxu0 0
      %2823 = vmatpush1.bf16.msra.mxu0 0
      %2824 = vmatprep.subr.bf16.mxu0 0
      %2825 = vmatpush1.bf16.msra.mxu0 0
      %2826 = vmatprep.subr.bf16.mxu0 0
      %2827 = vmatpush1.bf16.msra.mxu0 0
      %2828 = vmatprep.subr.bf16.mxu0 0
      %2829 = vmatpush1.bf16.msra.mxu0 0
      %2830 = vmatprep.subr.bf16.mxu0 0
      %2831 = vmatpush1.bf16.msra.mxu0 0
      %2832 = vmatprep.subr.bf16.mxu0 0
      %2833 = vmatpush1.bf16.msra.mxu0 0
      %2834 = vmatprep.mubr.bf16.mxu0 0
      %2835 = vmatmul.mubr.bf16.gmra.mrb[0].mxu0 %v2755
      %v2836 = vpop.f32.mrb[0].mxu0
      %v2837 = vadd.f32 0.0, %v2836
      %v2838 = vpop.f32.mrb[0].mxu0
      %v2839 = vpop.f32.mrb[0].mxu0
      %v2840 = vadd.f32 0.0, %v2839
      %v2841 = vpop.f32.mrb[0].mxu0
      %2842 = vmatprep.mubr.bf16.mxu0 0
      %2843 = vmatmul.mubr.bf16.gmra.mrb[0].mxu0 %v2758
      %v2844 = vpop.f32.mrb[0].mxu0
      %v2845 = vadd.f32 0.0, %v2844
      %v2846 = vpop.f32.mrb[0].mxu0
      %v2847 = vpop.f32.mrb[0].mxu0
      %v2848 = vadd.f32 0.0, %v2847
      %v2849 = vpop.f32.mrb[0].mxu0
      %2850 = vmatprep.mubr.bf16.mxu0 0
      %2851 = vmatmul.mubr.bf16.gmra.mrb[0].mxu0 %v2761
      %v2852 = vpop.f32.mrb[0].mxu0
      %v2853 = vadd.f32 0.0, %v2852
      %v2854 = vpop.f32.mrb[0].mxu0
      %v2855 = vpop.f32.mrb[0].mxu0
      %v2856 = vadd.f32 0.0, %v2855
      %v2857 = vpop.f32.mrb[0].mxu0
      %2858 = vmatprep.mubr.bf16.mxu0 0
      %2859 = vmatmul.mubr.bf16.gmra.mrb[0].mxu0 %v2764
      %v2860 = vpop.f32.mrb[0].mxu0
      %v2861 = vadd.f32 0.0, %v2860
      %v2862 = vpop.f32.mrb[0].mxu0
      %v2863 = vpop.f32.mrb[0].mxu0
      %v2864 = vadd.f32 0.0, %v2863
      %v2865 = vpop.f32.mrb[0].mxu0
      %2866 = vmatprep.mubr.bf16.mxu0 0
      %2867 = vmatmul.mubr.bf16.gmra.mrb[0].mxu0 %v2767
      %v2868 = vpop.f32.mrb[0].mxu0
      %v2869 = vadd.f32 0.0, %v2868
      %v2870 = vpop.f32.mrb[0].mxu0
      %v2871 = vpop.f32.mrb[0].mxu0
      %v2872 = vadd.f32 0.0, %v2871
      %v2873 = vpop.f32.mrb[0].mxu0
      %2874 = vmatprep.mubr.bf16.mxu0 0
      %2875 = vmatmul.mubr.bf16.gmra.mrb[0].mxu0 %v2770
      %v2876 = vpop.f32.mrb[0].mxu0
      %v2877 = vadd.f32 0.0, %v2876
      %v2878 = vpop.f32.mrb[0].mxu0
      %v2879 = vpop.f32.mrb[0].mxu0
      %v2880 = vadd.f32 0.0, %v2879
      %v2881 = vpop.f32.mrb[0].mxu0
      %2882 = vmatprep.mubr.bf16.mxu0 0
      %2883 = vmatmul.mubr.bf16.gmra.mrb[0].mxu0 %v2773
      %v2884 = vpop.f32.mrb[0].mxu0
      %v2885 = vadd.f32 0.0, %v2884
      %v2886 = vpop.f32.mrb[0].mxu0
      %v2887 = vpop.f32.mrb[0].mxu0
      %v2888 = vadd.f32 0.0, %v2887
      %v2889 = vpop.f32.mrb[0].mxu0
      %2890 = vmatprep.mubr.bf16.mxu0 0
      %2891 = vmatmul.mubr.bf16.gmra.mrb[0].mxu0 %v2776
      %v2892 = vpop.f32.mrb[0].mxu0
      %v2893 = vadd.f32 0.0, %v2892
      %v2894 = vpop.f32.mrb[0].mxu0
      %v2895 = vpop.f32.mrb[0].mxu0
      %v2896 = vadd.f32 0.0, %v2895
      %v2897 = vpop.f32.mrb[0].mxu0
      %2898 = vmatprep.mubr.bf16.mxu0 0
      %2899 = vmatmul.mubr.bf16.gmra.mrb[0].mxu0 %v2779
      %v2900 = vpop.f32.mrb[0].mxu0
      %v2901 = vadd.f32 0.0, %v2900
      %v2902 = vpop.f32.mrb[0].mxu0
      %v2903 = vpop.f32.mrb[0].mxu0
      %v2904 = vadd.f32 0.0, %v2903
      %v2905 = vpop.f32.mrb[0].mxu0
      %2906 = vmatprep.mubr.bf16.mxu0 0
      %2907 = vmatmul.mubr.bf16.gmra.mrb[0].mxu0 %v2782
      %v2908 = vpop.f32.mrb[0].mxu0
      %v2909 = vadd.f32 0.0, %v2908
      %v2910 = vpop.f32.mrb[0].mxu0
      %v2911 = vpop.f32.mrb[0].mxu0
      %v2912 = vadd.f32 0.0, %v2911
      %v2913 = vpop.f32.mrb[0].mxu0
      %2914 = vmatprep.mubr.bf16.mxu0 0
      %2915 = vmatmul.mubr.bf16.gmra.mrb[0].mxu0 %v2785
      %v2916 = vpop.f32.mrb[0].mxu0
      %v2917 = vadd.f32 0.0, %v2916
      %v2918 = vpop.f32.mrb[0].mxu0
      %v2919 = vpop.f32.mrb[0].mxu0
      %v2920 = vadd.f32 0.0, %v2919
      %v2921 = vpop.f32.mrb[0].mxu0
      %2922 = vmatprep.mubr.bf16.mxu0 0
      %2923 = vmatmul.mubr.bf16.gmra.mrb[0].mxu0 %v2788
      %v2924 = vpop.f32.mrb[0].mxu0
      %v2925 = vadd.f32 0.0, %v2924
      %v2926 = vpop.f32.mrb[0].mxu0
      %v2927 = vpop.f32.mrb[0].mxu0
      %v2928 = vadd.f32 0.0, %v2927
      %v2929 = vpop.f32.mrb[0].mxu0
      %2930 = vmatprep.mubr.bf16.mxu0 0
      %2931 = vmatmul.mubr.bf16.gmra.mrb[0].mxu0 %v2791
      %v2932 = vpop.f32.mrb[0].mxu0
      %v2933 = vadd.f32 0.0, %v2932
      %v2934 = vpop.f32.mrb[0].mxu0
      %v2935 = vpop.f32.mrb[0].mxu0
      %v2936 = vadd.f32 0.0, %v2935
      %v2937 = vpop.f32.mrb[0].mxu0
      %2938 = vmatprep.mubr.bf16.mxu0 0
      %2939 = vmatmul.mubr.bf16.gmra.mrb[0].mxu0 %v2794
      %v2940 = vpop.f32.mrb[0].mxu0
      %v2941 = vadd.f32 0.0, %v2940
      %v2942 = vpop.f32.mrb[0].mxu0
      %v2943 = vpop.f32.mrb[0].mxu0
      %v2944 = vadd.f32 0.0, %v2943
      %v2945 = vpop.f32.mrb[0].mxu0
      %2946 = vmatprep.mubr.bf16.mxu0 0
      %2947 = vmatmul.mubr.bf16.gmra.mrb[0].mxu0 %v2797
      %v2948 = vpop.f32.mrb[0].mxu0
      %v2949 = vadd.f32 0.0, %v2948
      %v2950 = vpop.f32.mrb[0].mxu0
      %v2951 = vpop.f32.mrb[0].mxu0
      %v2952 = vadd.f32 0.0, %v2951
      %v2953 = vpop.f32.mrb[0].mxu0
      %2954 = vdwg.mxu0
      %v2955 = vadd.f32 %v2527, %v2837
      %v2956 = vadd.f32 %v2528, %v2840
      %v2957 = vadd.f32 %v2529, %v2845
      %v2958 = vadd.f32 %v2530, %v2848
      %v2959 = vadd.f32 %v2531, %v2853
      %v2960 = vadd.f32 %v2532, %v2856
      %v2961 = vadd.f32 %v2533, %v2861
      %v2962 = vadd.f32 %v2534, %v2864
      %v2963 = vadd.f32 %v2535, %v2869
      %v2964 = vadd.f32 %v2536, %v2872
      %v2965 = vadd.f32 %v2537, %v2877
      %v2966 = vadd.f32 %v2538, %v2880
      %v2967 = vadd.f32 %v2539, %v2885
      %v2968 = vadd.f32 %v2540, %v2888
      %v2969 = vadd.f32 %v2541, %v2893
      %v2970 = vadd.f32 %v2542, %v2896
      %v2971 = vadd.f32 %v2543, %v2901
      %v2972 = vadd.f32 %v2544, %v2904
      %v2973 = vadd.f32 %v2545, %v2909
      %v2974 = vadd.f32 %v2546, %v2912
      %v2975 = vadd.f32 %v2547, %v2917
      %v2976 = vadd.f32 %v2548, %v2920
      %v2977 = vadd.f32 %v2549, %v2925
      %v2978 = vadd.f32 %v2550, %v2928
      %v2979 = vadd.f32 %v2551, %v2933
      %v2980 = vadd.f32 %v2552, %v2936
      %v2981 = vadd.f32 %v2553, %v2941
      %v2982 = vadd.f32 %v2554, %v2944
      %v2983 = vadd.f32 %v2555, %v2949
      %v2984 = vadd.f32 %v2556, %v2952
      %s2985 = scalar_lea.vmem %s219, 32
      %v2986 = vld [vmem:[%s2985] sm:$0xf]
      %v2987 = vld [vmem:[%s2985 + $0x4] sm:$0xf]
      %v2988 = vld [vmem:[%s2985 + $0x8] sm:$0xf]
      %v2989 = vld [vmem:[%s2985 + $0x10] sm:$0xf]
      %v2990 = vld [vmem:[%s2985 + $0x14] sm:$0xf]
      %v2991 = vld [vmem:[%s2985 + $0x18] sm:$0xf]
      %v2992 = vld [vmem:[%s2985 + $0x20] sm:$0xf]
      %v2993 = vld [vmem:[%s2985 + $0x24] sm:$0xf]
      %v2994 = vld [vmem:[%s2985 + $0x28] sm:$0xf]
      %v2995 = vld [vmem:[%s2985 + $0x30] sm:$0xf]
      %v2996 = vld [vmem:[%s2985 + $0x34] sm:$0xf]
      %v2997 = vld [vmem:[%s2985 + $0x38] sm:$0xf]
      %v2998 = vld [vmem:[%s2985 + $0x40] sm:$0xf]
      %v2999 = vld [vmem:[%s2985 + $0x44] sm:$0xf]
      %v3000 = vld [vmem:[%s2985 + $0x48] sm:$0xf]
      %v3001 = vld [vmem:[%s2985 + $0x50] sm:$0xf]
      %v3002 = vld [vmem:[%s2985 + $0x54] sm:$0xf]
      %v3003 = vld [vmem:[%s2985 + $0x58] sm:$0xf]
      %v3004 = vld [vmem:[%s2985 + $0x60] sm:$0xf]
      %v3005 = vld [vmem:[%s2985 + $0x64] sm:$0xf]
      %v3006 = vld [vmem:[%s2985 + $0x68] sm:$0xf]
      %v3007 = vld [vmem:[%s2985 + $0x70] sm:$0xf]
      %v3008 = vld [vmem:[%s2985 + $0x74] sm:$0xf]
      %v3009 = vld [vmem:[%s2985 + $0x78] sm:$0xf]
      %v3010 = vld [vmem:[%s2985 + $0x80] sm:$0xf]
      %v3011 = vld [vmem:[%s2985 + $0x84] sm:$0xf]
      %v3012 = vld [vmem:[%s2985 + $0x88] sm:$0xf]
      %v3013 = vld [vmem:[%s2985 + $0x90] sm:$0xf]
      %v3014 = vld [vmem:[%s2985 + $0x94] sm:$0xf]
      %v3015 = vld [vmem:[%s2985 + $0x98] sm:$0xf]
      %s3016 = scalar_lea.vmem %s1, 12
      %v3017 = vld [vmem:[%s3016] sm:$0x3]
      %v3048 = vunpack.c.l.b16 %v2986
      %v3049 = vunpack.c.l.b16 %v2987
      %v3050 = vunpack.c.l.b16 %v2988
      %v3051 = vunpack.c.l.b16 %v2989
      %v3052 = vunpack.c.l.b16 %v2990
      %v3053 = vunpack.c.l.b16 %v2991
      %v3054 = vunpack.c.l.b16 %v2992
      %v3055 = vunpack.c.l.b16 %v2993
      %v3056 = vunpack.c.l.b16 %v2994
      %v3057 = vunpack.c.l.b16 %v2995
      %v3058 = vunpack.c.l.b16 %v2996
      %v3059 = vunpack.c.l.b16 %v2997
      %v3060 = vunpack.c.l.b16 %v2998
      %v3061 = vunpack.c.l.b16 %v2999
      %v3062 = vunpack.c.l.b16 %v3000
      %v3063 = vunpack.c.l.b16 %v3001
      %v3064 = vunpack.c.l.b16 %v3002
      %v3065 = vunpack.c.l.b16 %v3003
      %v3066 = vunpack.c.l.b16 %v3004
      %v3067 = vunpack.c.l.b16 %v3005
      %v3068 = vunpack.c.l.b16 %v3006
      %v3069 = vunpack.c.l.b16 %v3007
      %v3070 = vunpack.c.l.b16 %v3008
      %v3071 = vunpack.c.l.b16 %v3009
      %v3072 = vunpack.c.l.b16 %v3010
      %v3073 = vunpack.c.l.b16 %v3011
      %v3074 = vunpack.c.l.b16 %v3012
      %v3075 = vunpack.c.l.b16 %v3013
      %v3076 = vunpack.c.l.b16 %v3014
      %v3077 = vunpack.c.l.b16 %v3015
      %v3078 = vpack.c.b16 %v3049, %v3048
      %v3079 = vpack.c.b16 %v3051, %v3050
      %v3080 = vpack.c.b16 %v3053, %v3052
      %v3081 = vpack.c.b16 %v3055, %v3054
      %v3082 = vpack.c.b16 %v3057, %v3056
      %v3083 = vpack.c.b16 %v3059, %v3058
      %v3084 = vpack.c.b16 %v3061, %v3060
      %v3085 = vpack.c.b16 %v3063, %v3062
      %v3086 = vpack.c.b16 %v3065, %v3064
      %v3087 = vpack.c.b16 %v3067, %v3066
      %v3088 = vpack.c.b16 %v3069, %v3068
      %v3089 = vpack.c.b16 %v3071, %v3070
      %v3090 = vpack.c.b16 %v3073, %v3072
      %v3091 = vpack.c.b16 %v3075, %v3074
      %v3092 = vpack.c.b16 %v3077, %v3076
      %v3094 = vsel %vm670, %v3078, 0
      %v3097 = vsel %vm670, %v3079, 0
      %v3100 = vsel %vm670, %v3080, 0
      %v3103 = vsel %vm670, %v3081, 0
      %v3106 = vsel %vm670, %v3082, 0
      %v3109 = vsel %vm670, %v3083, 0
      %v3112 = vsel %vm670, %v3084, 0
      %v3115 = vsel %vm670, %v3085, 0
      %v3118 = vsel %vm670, %v3086, 0
      %v3121 = vsel %vm670, %v3087, 0
      %v3124 = vsel %vm670, %v3088, 0
      %v3127 = vsel %vm670, %v3089, 0
      %v3130 = vsel %vm670, %v3090, 0
      %v3133 = vsel %vm670, %v3091, 0
      %v3136 = vsel %vm670, %v3092, 0
      %v3139 = vsel %vm716, %v3017, 0
      %3141 = vmatprep.subr.bf16.mxu0 0
      %3142 = vmatpush1.bf16.msra.mxu0 %v3139
      %3143 = vmatprep.subr.bf16.mxu0 0
      %3144 = vmatpush1.bf16.msra.mxu0 0
      %3145 = vmatprep.subr.bf16.mxu0 0
      %3146 = vmatpush1.bf16.msra.mxu0 0
      %3147 = vmatprep.subr.bf16.mxu0 0
      %3148 = vmatpush1.bf16.msra.mxu0 0
      %3149 = vmatprep.subr.bf16.mxu0 0
      %3150 = vmatpush1.bf16.msra.mxu0 0
      %3151 = vmatprep.subr.bf16.mxu0 0
      %3152 = vmatpush1.bf16.msra.mxu0 0
      %3153 = vmatprep.subr.bf16.mxu0 0
      %3154 = vmatpush1.bf16.msra.mxu0 0
      %3155 = vmatprep.subr.bf16.mxu0 0
      %3156 = vmatpush1.bf16.msra.mxu0 0
      %3157 = vmatprep.subr.bf16.mxu0 0
      %3158 = vmatpush1.bf16.msra.mxu0 0
      %3159 = vmatprep.subr.bf16.mxu0 0
      %3160 = vmatpush1.bf16.msra.mxu0 0
      %3161 = vmatprep.subr.bf16.mxu0 0
      %3162 = vmatpush1.bf16.msra.mxu0 0
      %3163 = vmatprep.subr.bf16.mxu0 0
      %3164 = vmatpush1.bf16.msra.mxu0 0
      %3165 = vmatprep.subr.bf16.mxu0 0
      %3166 = vmatpush1.bf16.msra.mxu0 0
      %3167 = vmatprep.subr.bf16.mxu0 0
      %3168 = vmatpush1.bf16.msra.mxu0 0
      %3169 = vmatprep.subr.bf16.mxu0 0
      %3170 = vmatpush1.bf16.msra.mxu0 0
      %3171 = vmatprep.subr.bf16.mxu0 0
      %3172 = vmatpush1.bf16.msra.mxu0 0
      %3173 = vmatprep.mubr.bf16.mxu0 0
      %3174 = vmatmul.mubr.bf16.gmra.mrb[0].mxu0 %v3094
      %v3175 = vpop.f32.mrb[0].mxu0
      %v3176 = vadd.f32 0.0, %v3175
      %v3177 = vpop.f32.mrb[0].mxu0
      %v3178 = vpop.f32.mrb[0].mxu0
      %v3179 = vadd.f32 0.0, %v3178
      %v3180 = vpop.f32.mrb[0].mxu0
      %3181 = vmatprep.mubr.bf16.mxu0 0
      %3182 = vmatmul.mubr.bf16.gmra.mrb[0].mxu0 %v3097
      %v3183 = vpop.f32.mrb[0].mxu0
      %v3184 = vadd.f32 0.0, %v3183
      %v3185 = vpop.f32.mrb[0].mxu0
      %v3186 = vpop.f32.mrb[0].mxu0
      %v3187 = vadd.f32 0.0, %v3186
      %v3188 = vpop.f32.mrb[0].mxu0
      %3189 = vmatprep.mubr.bf16.mxu0 0
      %3190 = vmatmul.mubr.bf16.gmra.mrb[0].mxu0 %v3100
      %v3191 = vpop.f32.mrb[0].mxu0
      %v3192 = vadd.f32 0.0, %v3191
      %v3193 = vpop.f32.mrb[0].mxu0
      %v3194 = vpop.f32.mrb[0].mxu0
      %v3195 = vadd.f32 0.0, %v3194
      %v3196 = vpop.f32.mrb[0].mxu0
      %3197 = vmatprep.mubr.bf16.mxu0 0
      %3198 = vmatmul.mubr.bf16.gmra.mrb[0].mxu0 %v3103
      %v3199 = vpop.f32.mrb[0].mxu0
      %v3200 = vadd.f32 0.0, %v3199
      %v3201 = vpop.f32.mrb[0].mxu0
      %v3202 = vpop.f32.mrb[0].mxu0
      %v3203 = vadd.f32 0.0, %v3202
      %v3204 = vpop.f32.mrb[0].mxu0
      %3205 = vmatprep.mubr.bf16.mxu0 0
      %3206 = vmatmul.mubr.bf16.gmra.mrb[0].mxu0 %v3106
      %v3207 = vpop.f32.mrb[0].mxu0
      %v3208 = vadd.f32 0.0, %v3207
      %v3209 = vpop.f32.mrb[0].mxu0
      %v3210 = vpop.f32.mrb[0].mxu0
      %v3211 = vadd.f32 0.0, %v3210
      %v3212 = vpop.f32.mrb[0].mxu0
      %3213 = vmatprep.mubr.bf16.mxu0 0
      %3214 = vmatmul.mubr.bf16.gmra.mrb[0].mxu0 %v3109
      %v3215 = vpop.f32.mrb[0].mxu0
      %v3216 = vadd.f32 0.0, %v3215
      %v3217 = vpop.f32.mrb[0].mxu0
      %v3218 = vpop.f32.mrb[0].mxu0
      %v3219 = vadd.f32 0.0, %v3218
      %v3220 = vpop.f32.mrb[0].mxu0
      %3221 = vmatprep.mubr.bf16.mxu0 0
      %3222 = vmatmul.mubr.bf16.gmra.mrb[0].mxu0 %v3112
      %v3223 = vpop.f32.mrb[0].mxu0
      %v3224 = vadd.f32 0.0, %v3223
      %v3225 = vpop.f32.mrb[0].mxu0
      %v3226 = vpop.f32.mrb[0].mxu0
      %v3227 = vadd.f32 0.0, %v3226
      %v3228 = vpop.f32.mrb[0].mxu0
      %3229 = vmatprep.mubr.bf16.mxu0 0
      %3230 = vmatmul.mubr.bf16.gmra.mrb[0].mxu0 %v3115
      %v3231 = vpop.f32.mrb[0].mxu0
      %v3232 = vadd.f32 0.0, %v3231
      %v3233 = vpop.f32.mrb[0].mxu0
      %v3234 = vpop.f32.mrb[0].mxu0
      %v3235 = vadd.f32 0.0, %v3234
      %v3236 = vpop.f32.mrb[0].mxu0
      %3237 = vmatprep.mubr.bf16.mxu0 0
      %3238 = vmatmul.mubr.bf16.gmra.mrb[0].mxu0 %v3118
      %v3239 = vpop.f32.mrb[0].mxu0
      %v3240 = vadd.f32 0.0, %v3239
      %v3241 = vpop.f32.mrb[0].mxu0
      %v3242 = vpop.f32.mrb[0].mxu0
      %v3243 = vadd.f32 0.0, %v3242
      %v3244 = vpop.f32.mrb[0].mxu0
      %3245 = vmatprep.mubr.bf16.mxu0 0
      %3246 = vmatmul.mubr.bf16.gmra.mrb[0].mxu0 %v3121
      %v3247 = vpop.f32.mrb[0].mxu0
      %v3248 = vadd.f32 0.0, %v3247
      %v3249 = vpop.f32.mrb[0].mxu0
      %v3250 = vpop.f32.mrb[0].mxu0
      %v3251 = vadd.f32 0.0, %v3250
      %v3252 = vpop.f32.mrb[0].mxu0
      %3253 = vmatprep.mubr.bf16.mxu0 0
      %3254 = vmatmul.mubr.bf16.gmra.mrb[0].mxu0 %v3124
      %v3255 = vpop.f32.mrb[0].mxu0
      %v3256 = vadd.f32 0.0, %v3255
      %v3257 = vpop.f32.mrb[0].mxu0
      %v3258 = vpop.f32.mrb[0].mxu0
      %v3259 = vadd.f32 0.0, %v3258
      %v3260 = vpop.f32.mrb[0].mxu0
      %3261 = vmatprep.mubr.bf16.mxu0 0
      %3262 = vmatmul.mubr.bf16.gmra.mrb[0].mxu0 %v3127
      %v3263 = vpop.f32.mrb[0].mxu0
      %v3264 = vadd.f32 0.0, %v3263
      %v3265 = vpop.f32.mrb[0].mxu0
      %v3266 = vpop.f32.mrb[0].mxu0
      %v3267 = vadd.f32 0.0, %v3266
      %v3268 = vpop.f32.mrb[0].mxu0
      %3269 = vmatprep.mubr.bf16.mxu0 0
      %3270 = vmatmul.mubr.bf16.gmra.mrb[0].mxu0 %v3130
      %v3271 = vpop.f32.mrb[0].mxu0
      %v3272 = vadd.f32 0.0, %v3271
      %v3273 = vpop.f32.mrb[0].mxu0
      %v3274 = vpop.f32.mrb[0].mxu0
      %v3275 = vadd.f32 0.0, %v3274
      %v3276 = vpop.f32.mrb[0].mxu0
      %3277 = vmatprep.mubr.bf16.mxu0 0
      %3278 = vmatmul.mubr.bf16.gmra.mrb[0].mxu0 %v3133
      %v3279 = vpop.f32.mrb[0].mxu0
      %v3280 = vadd.f32 0.0, %v3279
      %v3281 = vpop.f32.mrb[0].mxu0
      %v3282 = vpop.f32.mrb[0].mxu0
      %v3283 = vadd.f32 0.0, %v3282
      %v3284 = vpop.f32.mrb[0].mxu0
      %3285 = vmatprep.mubr.bf16.mxu0 0
      %3286 = vmatmul.mubr.bf16.gmra.mrb[0].mxu0 %v3136
      %v3287 = vpop.f32.mrb[0].mxu0
      %v3288 = vadd.f32 0.0, %v3287
      %v3289 = vpop.f32.mrb[0].mxu0
      %v3290 = vpop.f32.mrb[0].mxu0
      %v3291 = vadd.f32 0.0, %v3290
      %v3292 = vpop.f32.mrb[0].mxu0
      %3293 = vdwg.mxu0
      %v3294 = vadd.f32 %v2955, %v3176
      %v3295 = vadd.f32 %v2956, %v3179
      %v3296 = vadd.f32 %v2957, %v3184
      %v3297 = vadd.f32 %v2958, %v3187
      %v3298 = vadd.f32 %v2959, %v3192
      %v3299 = vadd.f32 %v2960, %v3195
      %v3300 = vadd.f32 %v2961, %v3200
      %v3301 = vadd.f32 %v2962, %v3203
      %v3302 = vadd.f32 %v2963, %v3208
      %v3303 = vadd.f32 %v2964, %v3211
      %v3304 = vadd.f32 %v2965, %v3216
      %v3305 = vadd.f32 %v2966, %v3219
      %v3306 = vadd.f32 %v2967, %v3224
      %v3307 = vadd.f32 %v2968, %v3227
      %v3308 = vadd.f32 %v2969, %v3232
      %v3309 = vadd.f32 %v2970, %v3235
      %v3310 = vadd.f32 %v2971, %v3240
      %v3311 = vadd.f32 %v2972, %v3243
      %v3312 = vadd.f32 %v2973, %v3248
      %v3313 = vadd.f32 %v2974, %v3251
      %v3314 = vadd.f32 %v2975, %v3256
      %v3315 = vadd.f32 %v2976, %v3259
      %v3316 = vadd.f32 %v2977, %v3264
      %v3317 = vadd.f32 %v2978, %v3267
      %v3318 = vadd.f32 %v2979, %v3272
      %v3319 = vadd.f32 %v2980, %v3275
      %v3320 = vadd.f32 %v2981, %v3280
      %v3321 = vadd.f32 %v2982, %v3283
      %v3322 = vadd.f32 %v2983, %v3288
      %v3323 = vadd.f32 %v2984, %v3291
      %v3324 = vld [vmem:[%s2985] sm:$0xf]
      %v3325 = vld [vmem:[%s2985 + $0x4] sm:$0xf]
      %v3326 = vld [vmem:[%s2985 + $0x8] sm:$0xf]
      %v3327 = vld [vmem:[%s2985 + $0xc] sm:$0x1]
      %v3328 = vld [vmem:[%s2985 + $0x10] sm:$0xf]
      %v3329 = vld [vmem:[%s2985 + $0x14] sm:$0xf]
      %v3330 = vld [vmem:[%s2985 + $0x18] sm:$0xf]
      %v3331 = vld [vmem:[%s2985 + $0x1c] sm:$0x1]
      %v3332 = vld [vmem:[%s2985 + $0x20] sm:$0xf]
      %v3333 = vld [vmem:[%s2985 + $0x24] sm:$0xf]
      %v3334 = vld [vmem:[%s2985 + $0x28] sm:$0xf]
      %v3335 = vld [vmem:[%s2985 + $0x2c] sm:$0x1]
      %v3336 = vld [vmem:[%s2985 + $0x30] sm:$0xf]
      %v3337 = vld [vmem:[%s2985 + $0x34] sm:$0xf]
      %v3338 = vld [vmem:[%s2985 + $0x38] sm:$0xf]
      %v3339 = vld [vmem:[%s2985 + $0x3c] sm:$0x1]
      %v3340 = vld [vmem:[%s2985 + $0x40] sm:$0xf]
      %v3341 = vld [vmem:[%s2985 + $0x44] sm:$0xf]
      %v3342 = vld [vmem:[%s2985 + $0x48] sm:$0xf]
      %v3343 = vld [vmem:[%s2985 + $0x4c] sm:$0x1]
      %v3344 = vld [vmem:[%s2985 + $0x50] sm:$0xf]
      %v3345 = vld [vmem:[%s2985 + $0x54] sm:$0xf]
      %v3346 = vld [vmem:[%s2985 + $0x58] sm:$0xf]
      %v3347 = vld [vmem:[%s2985 + $0x5c] sm:$0x1]
      %v3348 = vld [vmem:[%s2985 + $0x60] sm:$0xf]
      %v3349 = vld [vmem:[%s2985 + $0x64] sm:$0xf]
      %v3350 = vld [vmem:[%s2985 + $0x68] sm:$0xf]
      %v3351 = vld [vmem:[%s2985 + $0x6c] sm:$0x1]
      %v3352 = vld [vmem:[%s2985 + $0x70] sm:$0xf]
      %v3353 = vld [vmem:[%s2985 + $0x74] sm:$0xf]
      %v3354 = vld [vmem:[%s2985 + $0x78] sm:$0xf]
      %v3355 = vld [vmem:[%s2985 + $0x7c] sm:$0x1]
      %v3356 = vld [vmem:[%s2985 + $0x80] sm:$0xf]
      %v3357 = vld [vmem:[%s2985 + $0x84] sm:$0xf]
      %v3358 = vld [vmem:[%s2985 + $0x88] sm:$0xf]
      %v3359 = vld [vmem:[%s2985 + $0x8c] sm:$0x1]
      %v3360 = vld [vmem:[%s2985 + $0x90] sm:$0xf]
      %v3361 = vld [vmem:[%s2985 + $0x94] sm:$0xf]
      %v3362 = vld [vmem:[%s2985 + $0x98] sm:$0xf]
      %v3363 = vld [vmem:[%s2985 + $0x9c] sm:$0x1]
      %v3365 = vshrl.u32 %v3324, 16
      %v3367 = vrot.slane %v3365, 4
      %v3368 = vshll.u32 %v3324, 16
      %v3370 = vrot.slane %v3368, 5
      %v3371 = vor.u32 %v3367, %v3370
      %v3372 = vrot.slane %v3371, 4
      %v3374 = vshll.u32 %v3325, 16
      %v3376 = vrot.slane %v3374, 5
      %v3377 = vsel %vm282, %v3372, %v3376
      %v3378 = vshrl.u32 %v3325, 16
      %v3380 = vrot.slane %v3378, 4
      %v3381 = vor.u32 %v3380, %v3376
      %v3382 = vrot.slane %v3381, 4
      %v3384 = vshll.u32 %v3326, 16
      %v3386 = vrot.slane %v3384, 5
      %v3387 = vsel %vm282, %v3382, %v3386
      %v3388 = vshrl.u32 %v3326, 16
      %v3390 = vrot.slane %v3388, 4
      %v3391 = vor.u32 %v3390, %v3386
      %v3392 = vrot.slane %v3391, 4
      %v3394 = vshll.u32 %v3327, 16
      %v3396 = vrot.slane %v3394, 5
      %v3397 = vsel %vm282, %v3392, %v3396
      %v3399 = vshrl.u32 %v3328, 16
      %v3401 = vrot.slane %v3399, 4
      %v3402 = vshll.u32 %v3328, 16
      %v3404 = vrot.slane %v3402, 5
      %v3405 = vor.u32 %v3401, %v3404
      %v3406 = vrot.slane %v3405, 4
      %v3408 = vshll.u32 %v3329, 16
      %v3410 = vrot.slane %v3408, 5
      %v3411 = vsel %vm282, %v3406, %v3410
      %v3412 = vshrl.u32 %v3329, 16
      %v3414 = vrot.slane %v3412, 4
      %v3415 = vor.u32 %v3414, %v3410
      %v3416 = vrot.slane %v3415, 4
      %v3418 = vshll.u32 %v3330, 16
      %v3420 = vrot.slane %v3418, 5
      %v3421 = vsel %vm282, %v3416, %v3420
      %v3422 = vshrl.u32 %v3330, 16
      %v3424 = vrot.slane %v3422, 4
      %v3425 = vor.u32 %v3424, %v3420
      %v3426 = vrot.slane %v3425, 4
      %v3428 = vshll.u32 %v3331, 16
      %v3430 = vrot.slane %v3428, 5
      %v3431 = vsel %vm282, %v3426, %v3430
      %v3433 = vshrl.u32 %v3332, 16
      %v3435 = vrot.slane %v3433, 4
      %v3436 = vshll.u32 %v3332, 16
      %v3438 = vrot.slane %v3436, 5
      %v3439 = vor.u32 %v3435, %v3438
      %v3440 = vrot.slane %v3439, 4
      %v3442 = vshll.u32 %v3333, 16
      %v3444 = vrot.slane %v3442, 5
      %v3445 = vsel %vm282, %v3440, %v3444
      %v3446 = vshrl.u32 %v3333, 16
      %v3448 = vrot.slane %v3446, 4
      %v3449 = vor.u32 %v3448, %v3444
      %v3450 = vrot.slane %v3449, 4
      %v3452 = vshll.u32 %v3334, 16
      %v3454 = vrot.slane %v3452, 5
      %v3455 = vsel %vm282, %v3450, %v3454
      %v3456 = vshrl.u32 %v3334, 16
      %v3458 = vrot.slane %v3456, 4
      %v3459 = vor.u32 %v3458, %v3454
      %v3460 = vrot.slane %v3459, 4
      %v3462 = vshll.u32 %v3335, 16
      %v3464 = vrot.slane %v3462, 5
      %v3465 = vsel %vm282, %v3460, %v3464
      %v3467 = vshrl.u32 %v3336, 16
      %v3469 = vrot.slane %v3467, 4
      %v3470 = vshll.u32 %v3336, 16
      %v3472 = vrot.slane %v3470, 5
      %v3473 = vor.u32 %v3469, %v3472
      %v3474 = vrot.slane %v3473, 4
      %v3476 = vshll.u32 %v3337, 16
      %v3478 = vrot.slane %v3476, 5
      %v3479 = vsel %vm282, %v3474, %v3478
      %v3480 = vshrl.u32 %v3337, 16
      %v3482 = vrot.slane %v3480, 4
      %v3483 = vor.u32 %v3482, %v3478
      %v3484 = vrot.slane %v3483, 4
      %v3486 = vshll.u32 %v3338, 16
      %v3488 = vrot.slane %v3486, 5
      %v3489 = vsel %vm282, %v3484, %v3488
      %v3490 = vshrl.u32 %v3338, 16
      %v3492 = vrot.slane %v3490, 4
      %v3493 = vor.u32 %v3492, %v3488
      %v3494 = vrot.slane %v3493, 4
      %v3496 = vshll.u32 %v3339, 16
      %v3498 = vrot.slane %v3496, 5
      %v3499 = vsel %vm282, %v3494, %v3498
      %v3501 = vshrl.u32 %v3340, 16
      %v3503 = vrot.slane %v3501, 4
      %v3504 = vshll.u32 %v3340, 16
      %v3506 = vrot.slane %v3504, 5
      %v3507 = vor.u32 %v3503, %v3506
      %v3508 = vrot.slane %v3507, 4
      %v3510 = vshll.u32 %v3341, 16
      %v3512 = vrot.slane %v3510, 5
      %v3513 = vsel %vm282, %v3508, %v3512
      %v3514 = vshrl.u32 %v3341, 16
      %v3516 = vrot.slane %v3514, 4
      %v3517 = vor.u32 %v3516, %v3512
      %v3518 = vrot.slane %v3517, 4
      %v3520 = vshll.u32 %v3342, 16
      %v3522 = vrot.slane %v3520, 5
      %v3523 = vsel %vm282, %v3518, %v3522
      %v3524 = vshrl.u32 %v3342, 16
      %v3526 = vrot.slane %v3524, 4
      %v3527 = vor.u32 %v3526, %v3522
      %v3528 = vrot.slane %v3527, 4
      %v3530 = vshll.u32 %v3343, 16
      %v3532 = vrot.slane %v3530, 5
      %v3533 = vsel %vm282, %v3528, %v3532
      %v3535 = vshrl.u32 %v3344, 16
      %v3537 = vrot.slane %v3535, 4
      %v3538 = vshll.u32 %v3344, 16
      %v3540 = vrot.slane %v3538, 5
      %v3541 = vor.u32 %v3537, %v3540
      %v3542 = vrot.slane %v3541, 4
      %v3544 = vshll.u32 %v3345, 16
      %v3546 = vrot.slane %v3544, 5
      %v3547 = vsel %vm282, %v3542, %v3546
      %v3548 = vshrl.u32 %v3345, 16
      %v3550 = vrot.slane %v3548, 4
      %v3551 = vor.u32 %v3550, %v3546
      %v3552 = vrot.slane %v3551, 4
      %v3554 = vshll.u32 %v3346, 16
      %v3556 = vrot.slane %v3554, 5
      %v3557 = vsel %vm282, %v3552, %v3556
      %v3558 = vshrl.u32 %v3346, 16
      %v3560 = vrot.slane %v3558, 4
      %v3561 = vor.u32 %v3560, %v3556
      %v3562 = vrot.slane %v3561, 4
      %v3564 = vshll.u32 %v3347, 16
      %v3566 = vrot.slane %v3564, 5
      %v3567 = vsel %vm282, %v3562, %v3566
      %v3569 = vshrl.u32 %v3348, 16
      %v3571 = vrot.slane %v3569, 4
      %v3572 = vshll.u32 %v3348, 16
      %v3574 = vrot.slane %v3572, 5
      %v3575 = vor.u32 %v3571, %v3574
      %v3576 = vrot.slane %v3575, 4
      %v3578 = vshll.u32 %v3349, 16
      %v3580 = vrot.slane %v3578, 5
      %v3581 = vsel %vm282, %v3576, %v3580
      %v3582 = vshrl.u32 %v3349, 16
      %v3584 = vrot.slane %v3582, 4
      %v3585 = vor.u32 %v3584, %v3580
      %v3586 = vrot.slane %v3585, 4
      %v3588 = vshll.u32 %v3350, 16
      %v3590 = vrot.slane %v3588, 5
      %v3591 = vsel %vm282, %v3586, %v3590
      %v3592 = vshrl.u32 %v3350, 16
      %v3594 = vrot.slane %v3592, 4
      %v3595 = vor.u32 %v3594, %v3590
      %v3596 = vrot.slane %v3595, 4
      %v3598 = vshll.u32 %v3351, 16
      %v3600 = vrot.slane %v3598, 5
      %v3601 = vsel %vm282, %v3596, %v3600
      %v3603 = vshrl.u32 %v3352, 16
      %v3605 = vrot.slane %v3603, 4
      %v3606 = vshll.u32 %v3352, 16
      %v3608 = vrot.slane %v3606, 5
      %v3609 = vor.u32 %v3605, %v3608
      %v3610 = vrot.slane %v3609, 4
      %v3612 = vshll.u32 %v3353, 16
      %v3614 = vrot.slane %v3612, 5
      %v3615 = vsel %vm282, %v3610, %v3614
      %v3616 = vshrl.u32 %v3353, 16
      %v3618 = vrot.slane %v3616, 4
      %v3619 = vor.u32 %v3618, %v3614
      %v3620 = vrot.slane %v3619, 4
      %v3622 = vshll.u32 %v3354, 16
      %v3624 = vrot.slane %v3622, 5
      %v3625 = vsel %vm282, %v3620, %v3624
      %v3626 = vshrl.u32 %v3354, 16
      %v3628 = vrot.slane %v3626, 4
      %v3629 = vor.u32 %v3628, %v3624
      %v3630 = vrot.slane %v3629, 4
      %v3632 = vshll.u32 %v3355, 16
      %v3634 = vrot.slane %v3632, 5
      %v3635 = vsel %vm282, %v3630, %v3634
      %v3637 = vshrl.u32 %v3356, 16
      %v3639 = vrot.slane %v3637, 4
      %v3640 = vshll.u32 %v3356, 16
      %v3642 = vrot.slane %v3640, 5
      %v3643 = vor.u32 %v3639, %v3642
      %v3644 = vrot.slane %v3643, 4
      %v3646 = vshll.u32 %v3357, 16
      %v3648 = vrot.slane %v3646, 5
      %v3649 = vsel %vm282, %v3644, %v3648
      %v3650 = vshrl.u32 %v3357, 16
      %v3652 = vrot.slane %v3650, 4
      %v3653 = vor.u32 %v3652, %v3648
      %v3654 = vrot.slane %v3653, 4
      %v3656 = vshll.u32 %v3358, 16
      %v3658 = vrot.slane %v3656, 5
      %v3659 = vsel %vm282, %v3654, %v3658
      %v3660 = vshrl.u32 %v3358, 16
      %v3662 = vrot.slane %v3660, 4
      %v3663 = vor.u32 %v3662, %v3658
      %v3664 = vrot.slane %v3663, 4
      %v3666 = vshll.u32 %v3359, 16
      %v3668 = vrot.slane %v3666, 5
      %v3669 = vsel %vm282, %v3664, %v3668
      %v3671 = vshrl.u32 %v3360, 16
      %v3673 = vrot.slane %v3671, 4
      %v3674 = vshll.u32 %v3360, 16
      %v3676 = vrot.slane %v3674, 5
      %v3677 = vor.u32 %v3673, %v3676
      %v3678 = vrot.slane %v3677, 4
      %v3680 = vshll.u32 %v3361, 16
      %v3682 = vrot.slane %v3680, 5
      %v3683 = vsel %vm282, %v3678, %v3682
      %v3684 = vshrl.u32 %v3361, 16
      %v3686 = vrot.slane %v3684, 4
      %v3687 = vor.u32 %v3686, %v3682
      %v3688 = vrot.slane %v3687, 4
      %v3690 = vshll.u32 %v3362, 16
      %v3692 = vrot.slane %v3690, 5
      %v3693 = vsel %vm282, %v3688, %v3692
      %v3694 = vshrl.u32 %v3362, 16
      %v3696 = vrot.slane %v3694, 4
      %v3697 = vor.u32 %v3696, %v3692
      %v3698 = vrot.slane %v3697, 4
      %v3700 = vshll.u32 %v3363, 16
      %v3702 = vrot.slane %v3700, 5
      %v3703 = vsel %vm282, %v3698, %v3702
      %s3704 = scalar_lea.vmem %s1, 14
      %v3705 = vld [vmem:[%s3704] sm:$0x3]
      %v3706 = vunpack.c.l.b16 %v3377
      %v3707 = vunpack.c.l.b16 %v3387
      %v3708 = vunpack.c.l.b16 %v3397
      %v3709 = vunpack.c.l.b16 %v3411
      %v3710 = vunpack.c.l.b16 %v3421
      %v3711 = vunpack.c.l.b16 %v3431
      %v3712 = vunpack.c.l.b16 %v3445
      %v3713 = vunpack.c.l.b16 %v3455
      %v3714 = vunpack.c.l.b16 %v3465
      %v3715 = vunpack.c.l.b16 %v3479
      %v3716 = vunpack.c.l.b16 %v3489
      %v3717 = vunpack.c.l.b16 %v3499
      %v3718 = vunpack.c.l.b16 %v3513
      %v3719 = vunpack.c.l.b16 %v3523
      %v3720 = vunpack.c.l.b16 %v3533
      %v3721 = vunpack.c.l.b16 %v3547
      %v3722 = vunpack.c.l.b16 %v3557
      %v3723 = vunpack.c.l.b16 %v3567
      %v3724 = vunpack.c.l.b16 %v3581
      %v3725 = vunpack.c.l.b16 %v3591
      %v3726 = vunpack.c.l.b16 %v3601
      %v3727 = vunpack.c.l.b16 %v3615
      %v3728 = vunpack.c.l.b16 %v3625
      %v3729 = vunpack.c.l.b16 %v3635
      %v3730 = vunpack.c.l.b16 %v3649
      %v3731 = vunpack.c.l.b16 %v3659
      %v3732 = vunpack.c.l.b16 %v3669
      %v3733 = vunpack.c.l.b16 %v3683
      %v3734 = vunpack.c.l.b16 %v3693
      %v3735 = vunpack.c.l.b16 %v3703
      %v3736 = vpack.c.b16 %v3707, %v3706
      %v3737 = vpack.c.b16 %v3709, %v3708
      %v3738 = vpack.c.b16 %v3711, %v3710
      %v3739 = vpack.c.b16 %v3713, %v3712
      %v3740 = vpack.c.b16 %v3715, %v3714
      %v3741 = vpack.c.b16 %v3717, %v3716
      %v3742 = vpack.c.b16 %v3719, %v3718
      %v3743 = vpack.c.b16 %v3721, %v3720
      %v3744 = vpack.c.b16 %v3723, %v3722
      %v3745 = vpack.c.b16 %v3725, %v3724
      %v3746 = vpack.c.b16 %v3727, %v3726
      %v3747 = vpack.c.b16 %v3729, %v3728
      %v3748 = vpack.c.b16 %v3731, %v3730
      %v3749 = vpack.c.b16 %v3733, %v3732
      %v3750 = vpack.c.b16 %v3735, %v3734
      %v3752 = vsel %vm670, %v3736, 0
      %v3755 = vsel %vm670, %v3737, 0
      %v3758 = vsel %vm670, %v3738, 0
      %v3761 = vsel %vm670, %v3739, 0
      %v3764 = vsel %vm670, %v3740, 0
      %v3767 = vsel %vm670, %v3741, 0
      %v3770 = vsel %vm670, %v3742, 0
      %v3773 = vsel %vm670, %v3743, 0
      %v3776 = vsel %vm670, %v3744, 0
      %v3779 = vsel %vm670, %v3745, 0
      %v3782 = vsel %vm670, %v3746, 0
      %v3785 = vsel %vm670, %v3747, 0
      %v3788 = vsel %vm670, %v3748, 0
      %v3791 = vsel %vm670, %v3749, 0
      %v3794 = vsel %vm670, %v3750, 0
      %v3797 = vsel %vm716, %v3705, 0
      %3799 = vmatprep.subr.bf16.mxu0 0
      %3800 = vmatpush1.bf16.msra.mxu0 %v3797
      %3801 = vmatprep.subr.bf16.mxu0 0
      %3802 = vmatpush1.bf16.msra.mxu0 0
      %3803 = vmatprep.subr.bf16.mxu0 0
      %3804 = vmatpush1.bf16.msra.mxu0 0
      %3805 = vmatprep.subr.bf16.mxu0 0
      %3806 = vmatpush1.bf16.msra.mxu0 0
      %3807 = vmatprep.subr.bf16.mxu0 0
      %3808 = vmatpush1.bf16.msra.mxu0 0
      %3809 = vmatprep.subr.bf16.mxu0 0
      %3810 = vmatpush1.bf16.msra.mxu0 0
      %3811 = vmatprep.subr.bf16.mxu0 0
      %3812 = vmatpush1.bf16.msra.mxu0 0
      %3813 = vmatprep.subr.bf16.mxu0 0
      %3814 = vmatpush1.bf16.msra.mxu0 0
      %3815 = vmatprep.subr.bf16.mxu0 0
      %3816 = vmatpush1.bf16.msra.mxu0 0
      %3817 = vmatprep.subr.bf16.mxu0 0
      %3818 = vmatpush1.bf16.msra.mxu0 0
      %3819 = vmatprep.subr.bf16.mxu0 0
      %3820 = vmatpush1.bf16.msra.mxu0 0
      %3821 = vmatprep.subr.bf16.mxu0 0
      %3822 = vmatpush1.bf16.msra.mxu0 0
      %3823 = vmatprep.subr.bf16.mxu0 0
      %3824 = vmatpush1.bf16.msra.mxu0 0
      %3825 = vmatprep.subr.bf16.mxu0 0
      %3826 = vmatpush1.bf16.msra.mxu0 0
      %3827 = vmatprep.subr.bf16.mxu0 0
      %3828 = vmatpush1.bf16.msra.mxu0 0
      %3829 = vmatprep.subr.bf16.mxu0 0
      %3830 = vmatpush1.bf16.msra.mxu0 0
      %3831 = vmatprep.mubr.bf16.mxu0 0
      %3832 = vmatmul.mubr.bf16.gmra.mrb[0].mxu0 %v3752
      %v3833 = vpop.f32.mrb[0].mxu0
      %v3834 = vadd.f32 0.0, %v3833
      %v3835 = vpop.f32.mrb[0].mxu0
      %v3836 = vpop.f32.mrb[0].mxu0
      %v3837 = vadd.f32 0.0, %v3836
      %v3838 = vpop.f32.mrb[0].mxu0
      %3839 = vmatprep.mubr.bf16.mxu0 0
      %3840 = vmatmul.mubr.bf16.gmra.mrb[0].mxu0 %v3755
      %v3841 = vpop.f32.mrb[0].mxu0
      %v3842 = vadd.f32 0.0, %v3841
      %v3843 = vpop.f32.mrb[0].mxu0
      %v3844 = vpop.f32.mrb[0].mxu0
      %v3845 = vadd.f32 0.0, %v3844
      %v3846 = vpop.f32.mrb[0].mxu0
      %3847 = vmatprep.mubr.bf16.mxu0 0
      %3848 = vmatmul.mubr.bf16.gmra.mrb[0].mxu0 %v3758
      %v3849 = vpop.f32.mrb[0].mxu0
      %v3850 = vadd.f32 0.0, %v3849
      %v3851 = vpop.f32.mrb[0].mxu0
      %v3852 = vpop.f32.mrb[0].mxu0
      %v3853 = vadd.f32 0.0, %v3852
      %v3854 = vpop.f32.mrb[0].mxu0
      %3855 = vmatprep.mubr.bf16.mxu0 0
      %3856 = vmatmul.mubr.bf16.gmra.mrb[0].mxu0 %v3761
      %v3857 = vpop.f32.mrb[0].mxu0
      %v3858 = vadd.f32 0.0, %v3857
      %v3859 = vpop.f32.mrb[0].mxu0
      %v3860 = vpop.f32.mrb[0].mxu0
      %v3861 = vadd.f32 0.0, %v3860
      %v3862 = vpop.f32.mrb[0].mxu0
      %3863 = vmatprep.mubr.bf16.mxu0 0
      %3864 = vmatmul.mubr.bf16.gmra.mrb[0].mxu0 %v3764
      %v3865 = vpop.f32.mrb[0].mxu0
      %v3866 = vadd.f32 0.0, %v3865
      %v3867 = vpop.f32.mrb[0].mxu0
      %v3868 = vpop.f32.mrb[0].mxu0
      %v3869 = vadd.f32 0.0, %v3868
      %v3870 = vpop.f32.mrb[0].mxu0
      %3871 = vmatprep.mubr.bf16.mxu0 0
      %3872 = vmatmul.mubr.bf16.gmra.mrb[0].mxu0 %v3767
      %v3873 = vpop.f32.mrb[0].mxu0
      %v3874 = vadd.f32 0.0, %v3873
      %v3875 = vpop.f32.mrb[0].mxu0
      %v3876 = vpop.f32.mrb[0].mxu0
      %v3877 = vadd.f32 0.0, %v3876
      %v3878 = vpop.f32.mrb[0].mxu0
      %3879 = vmatprep.mubr.bf16.mxu0 0
      %3880 = vmatmul.mubr.bf16.gmra.mrb[0].mxu0 %v3770
      %v3881 = vpop.f32.mrb[0].mxu0
      %v3882 = vadd.f32 0.0, %v3881
      %v3883 = vpop.f32.mrb[0].mxu0
      %v3884 = vpop.f32.mrb[0].mxu0
      %v3885 = vadd.f32 0.0, %v3884
      %v3886 = vpop.f32.mrb[0].mxu0
      %3887 = vmatprep.mubr.bf16.mxu0 0
      %3888 = vmatmul.mubr.bf16.gmra.mrb[0].mxu0 %v3773
      %v3889 = vpop.f32.mrb[0].mxu0
      %v3890 = vadd.f32 0.0, %v3889
      %v3891 = vpop.f32.mrb[0].mxu0
      %v3892 = vpop.f32.mrb[0].mxu0
      %v3893 = vadd.f32 0.0, %v3892
      %v3894 = vpop.f32.mrb[0].mxu0
      %3895 = vmatprep.mubr.bf16.mxu0 0
      %3896 = vmatmul.mubr.bf16.gmra.mrb[0].mxu0 %v3776
      %v3897 = vpop.f32.mrb[0].mxu0
      %v3898 = vadd.f32 0.0, %v3897
      %v3899 = vpop.f32.mrb[0].mxu0
      %v3900 = vpop.f32.mrb[0].mxu0
      %v3901 = vadd.f32 0.0, %v3900
      %v3902 = vpop.f32.mrb[0].mxu0
      %3903 = vmatprep.mubr.bf16.mxu0 0
      %3904 = vmatmul.mubr.bf16.gmra.mrb[0].mxu0 %v3779
      %v3905 = vpop.f32.mrb[0].mxu0
      %v3906 = vadd.f32 0.0, %v3905
      %v3907 = vpop.f32.mrb[0].mxu0
      %v3908 = vpop.f32.mrb[0].mxu0
      %v3909 = vadd.f32 0.0, %v3908
      %v3910 = vpop.f32.mrb[0].mxu0
      %3911 = vmatprep.mubr.bf16.mxu0 0
      %3912 = vmatmul.mubr.bf16.gmra.mrb[0].mxu0 %v3782
      %v3913 = vpop.f32.mrb[0].mxu0
      %v3914 = vadd.f32 0.0, %v3913
      %v3915 = vpop.f32.mrb[0].mxu0
      %v3916 = vpop.f32.mrb[0].mxu0
      %v3917 = vadd.f32 0.0, %v3916
      %v3918 = vpop.f32.mrb[0].mxu0
      %3919 = vmatprep.mubr.bf16.mxu0 0
      %3920 = vmatmul.mubr.bf16.gmra.mrb[0].mxu0 %v3785
      %v3921 = vpop.f32.mrb[0].mxu0
      %v3922 = vadd.f32 0.0, %v3921
      %v3923 = vpop.f32.mrb[0].mxu0
      %v3924 = vpop.f32.mrb[0].mxu0
      %v3925 = vadd.f32 0.0, %v3924
      %v3926 = vpop.f32.mrb[0].mxu0
      %3927 = vmatprep.mubr.bf16.mxu0 0
      %3928 = vmatmul.mubr.bf16.gmra.mrb[0].mxu0 %v3788
      %v3929 = vpop.f32.mrb[0].mxu0
      %v3930 = vadd.f32 0.0, %v3929
      %v3931 = vpop.f32.mrb[0].mxu0
      %v3932 = vpop.f32.mrb[0].mxu0
      %v3933 = vadd.f32 0.0, %v3932
      %v3934 = vpop.f32.mrb[0].mxu0
      %3935 = vmatprep.mubr.bf16.mxu0 0
      %3936 = vmatmul.mubr.bf16.gmra.mrb[0].mxu0 %v3791
      %v3937 = vpop.f32.mrb[0].mxu0
      %v3938 = vadd.f32 0.0, %v3937
      %v3939 = vpop.f32.mrb[0].mxu0
      %v3940 = vpop.f32.mrb[0].mxu0
      %v3941 = vadd.f32 0.0, %v3940
      %v3942 = vpop.f32.mrb[0].mxu0
      %3943 = vmatprep.mubr.bf16.mxu0 0
      %3944 = vmatmul.mubr.bf16.gmra.mrb[0].mxu0 %v3794
      %v3945 = vpop.f32.mrb[0].mxu0
      %v3946 = vadd.f32 0.0, %v3945
      %v3947 = vpop.f32.mrb[0].mxu0
      %v3948 = vpop.f32.mrb[0].mxu0
      %v3949 = vadd.f32 0.0, %v3948
      %v3950 = vpop.f32.mrb[0].mxu0
      %3951 = vdwg.mxu0
      %v3952 = vadd.f32 %v3294, %v3834
      %v3953 = vadd.f32 %v3295, %v3837
      %v3954 = vadd.f32 %v3296, %v3842
      %v3955 = vadd.f32 %v3297, %v3845
      %v3956 = vadd.f32 %v3298, %v3850
      %v3957 = vadd.f32 %v3299, %v3853
      %v3958 = vadd.f32 %v3300, %v3858
      %v3959 = vadd.f32 %v3301, %v3861
      %v3960 = vadd.f32 %v3302, %v3866
      %v3961 = vadd.f32 %v3303, %v3869
      %v3962 = vadd.f32 %v3304, %v3874
      %v3963 = vadd.f32 %v3305, %v3877
      %v3964 = vadd.f32 %v3306, %v3882
      %v3965 = vadd.f32 %v3307, %v3885
      %v3966 = vadd.f32 %v3308, %v3890
      %v3967 = vadd.f32 %v3309, %v3893
      %v3968 = vadd.f32 %v3310, %v3898
      %v3969 = vadd.f32 %v3311, %v3901
      %v3970 = vadd.f32 %v3312, %v3906
      %v3971 = vadd.f32 %v3313, %v3909
      %v3972 = vadd.f32 %v3314, %v3914
      %v3973 = vadd.f32 %v3315, %v3917
      %v3974 = vadd.f32 %v3316, %v3922
      %v3975 = vadd.f32 %v3317, %v3925
      %v3976 = vadd.f32 %v3318, %v3930
      %v3977 = vadd.f32 %v3319, %v3933
      %v3978 = vadd.f32 %v3320, %v3938
      %v3979 = vadd.f32 %v3321, %v3941
      %v3980 = vadd.f32 %v3322, %v3946
      %v3981 = vadd.f32 %v3323, %v3949
      %v3982 = vld [vmem:[%s2985] sm:$0xe]
      %v3983 = vld [vmem:[%s2985 + $0x10] sm:$0xe]
      %v3984 = vld [vmem:[%s2985 + $0x20] sm:$0xe]
      %v3985 = vld [vmem:[%s2985 + $0x30] sm:$0xe]
      %v3986 = vld [vmem:[%s2985 + $0x40] sm:$0xe]
      %v3987 = vld [vmem:[%s2985 + $0x50] sm:$0xe]
      %v3988 = vld [vmem:[%s2985 + $0x60] sm:$0xe]
      %v3989 = vld [vmem:[%s2985 + $0x70] sm:$0xe]
      %v3990 = vld [vmem:[%s2985 + $0x80] sm:$0xe]
      %v3991 = vld [vmem:[%s2985 + $0x90] sm:$0xe]
      %v4032 = vrot.slane %v3982, 5
      %v4033 = vrot.slane %v4032, 4
      %v4034 = vrot.slane %v3325, 5
      %v4035 = vsel %vm1181, %v4033, %v4034
      %v4036 = vrot.slane %v4034, 4
      %v4037 = vrot.slane %v3326, 5
      %v4038 = vsel %vm1181, %v4036, %v4037
      %v4039 = vrot.slane %v4037, 4
      %v4040 = vrot.slane %v3327, 5
      %v4041 = vsel %vm1181, %v4039, %v4040
      %v4042 = vrot.slane %v3983, 5
      %v4043 = vrot.slane %v4042, 4
      %v4044 = vrot.slane %v3329, 5
      %v4045 = vsel %vm1181, %v4043, %v4044
      %v4046 = vrot.slane %v4044, 4
      %v4047 = vrot.slane %v3330, 5
      %v4048 = vsel %vm1181, %v4046, %v4047
      %v4049 = vrot.slane %v4047, 4
      %v4050 = vrot.slane %v3331, 5
      %v4051 = vsel %vm1181, %v4049, %v4050
      %v4052 = vrot.slane %v3984, 5
      %v4053 = vrot.slane %v4052, 4
      %v4054 = vrot.slane %v3333, 5
      %v4055 = vsel %vm1181, %v4053, %v4054
      %v4056 = vrot.slane %v4054, 4
      %v4057 = vrot.slane %v3334, 5
      %v4058 = vsel %vm1181, %v4056, %v4057
      %v4059 = vrot.slane %v4057, 4
      %v4060 = vrot.slane %v3335, 5
      %v4061 = vsel %vm1181, %v4059, %v4060
      %v4062 = vrot.slane %v3985, 5
      %v4063 = vrot.slane %v4062, 4
      %v4064 = vrot.slane %v3337, 5
      %v4065 = vsel %vm1181, %v4063, %v4064
      %v4066 = vrot.slane %v4064, 4
      %v4067 = vrot.slane %v3338, 5
      %v4068 = vsel %vm1181, %v4066, %v4067
      %v4069 = vrot.slane %v4067, 4
      %v4070 = vrot.slane %v3339, 5
      %v4071 = vsel %vm1181, %v4069, %v4070
      %v4072 = vrot.slane %v3986, 5
      %v4073 = vrot.slane %v4072, 4
      %v4074 = vrot.slane %v3341, 5
      %v4075 = vsel %vm1181, %v4073, %v4074
      %v4076 = vrot.slane %v4074, 4
      %v4077 = vrot.slane %v3342, 5
      %v4078 = vsel %vm1181, %v4076, %v4077
      %v4079 = vrot.slane %v4077, 4
      %v4080 = vrot.slane %v3343, 5
      %v4081 = vsel %vm1181, %v4079, %v4080
      %v4082 = vrot.slane %v3987, 5
      %v4083 = vrot.slane %v4082, 4
      %v4084 = vrot.slane %v3345, 5
      %v4085 = vsel %vm1181, %v4083, %v4084
      %v4086 = vrot.slane %v4084, 4
      %v4087 = vrot.slane %v3346, 5
      %v4088 = vsel %vm1181, %v4086, %v4087
      %v4089 = vrot.slane %v4087, 4
      %v4090 = vrot.slane %v3347, 5
      %v4091 = vsel %vm1181, %v4089, %v4090
      %v4092 = vrot.slane %v3988, 5
      %v4093 = vrot.slane %v4092, 4
      %v4094 = vrot.slane %v3349, 5
      %v4095 = vsel %vm1181, %v4093, %v4094
      %v4096 = vrot.slane %v4094, 4
      %v4097 = vrot.slane %v3350, 5
      %v4098 = vsel %vm1181, %v4096, %v4097
      %v4099 = vrot.slane %v4097, 4
      %v4100 = vrot.slane %v3351, 5
      %v4101 = vsel %vm1181, %v4099, %v4100
      %v4102 = vrot.slane %v3989, 5
      %v4103 = vrot.slane %v4102, 4
      %v4104 = vrot.slane %v3353, 5
      %v4105 = vsel %vm1181, %v4103, %v4104
      %v4106 = vrot.slane %v4104, 4
      %v4107 = vrot.slane %v3354, 5
      %v4108 = vsel %vm1181, %v4106, %v4107
      %v4109 = vrot.slane %v4107, 4
      %v4110 = vrot.slane %v3355, 5
      %v4111 = vsel %vm1181, %v4109, %v4110
      %v4112 = vrot.slane %v3990, 5
      %v4113 = vrot.slane %v4112, 4
      %v4114 = vrot.slane %v3357, 5
      %v4115 = vsel %vm1181, %v4113, %v4114
      %v4116 = vrot.slane %v4114, 4
      %v4117 = vrot.slane %v3358, 5
      %v4118 = vsel %vm1181, %v4116, %v4117
      %v4119 = vrot.slane %v4117, 4
      %v4120 = vrot.slane %v3359, 5
      %v4121 = vsel %vm1181, %v4119, %v4120
      %v4122 = vrot.slane %v3991, 5
      %v4123 = vrot.slane %v4122, 4
      %v4124 = vrot.slane %v3361, 5
      %v4125 = vsel %vm1181, %v4123, %v4124
      %v4126 = vrot.slane %v4124, 4
      %v4127 = vrot.slane %v3362, 5
      %v4128 = vsel %vm1181, %v4126, %v4127
      %v4129 = vrot.slane %v4127, 4
      %v4130 = vrot.slane %v3363, 5
      %v4131 = vsel %vm1181, %v4129, %v4130
      %s4132 = scalar_lea.vmem %s1, 16
      %v4133 = vld [vmem:[%s4132] sm:$0x3]
      %v4134 = vunpack.c.l.b16 %v4035
      %v4135 = vunpack.c.l.b16 %v4038
      %v4136 = vunpack.c.l.b16 %v4041
      %v4137 = vunpack.c.l.b16 %v4045
      %v4138 = vunpack.c.l.b16 %v4048
      %v4139 = vunpack.c.l.b16 %v4051
      %v4140 = vunpack.c.l.b16 %v4055
      %v4141 = vunpack.c.l.b16 %v4058
      %v4142 = vunpack.c.l.b16 %v4061
      %v4143 = vunpack.c.l.b16 %v4065
      %v4144 = vunpack.c.l.b16 %v4068
      %v4145 = vunpack.c.l.b16 %v4071
      %v4146 = vunpack.c.l.b16 %v4075
      %v4147 = vunpack.c.l.b16 %v4078
      %v4148 = vunpack.c.l.b16 %v4081
      %v4149 = vunpack.c.l.b16 %v4085
      %v4150 = vunpack.c.l.b16 %v4088
      %v4151 = vunpack.c.l.b16 %v4091
      %v4152 = vunpack.c.l.b16 %v4095
      %v4153 = vunpack.c.l.b16 %v4098
      %v4154 = vunpack.c.l.b16 %v4101
      %v4155 = vunpack.c.l.b16 %v4105
      %v4156 = vunpack.c.l.b16 %v4108
      %v4157 = vunpack.c.l.b16 %v4111
      %v4158 = vunpack.c.l.b16 %v4115
      %v4159 = vunpack.c.l.b16 %v4118
      %v4160 = vunpack.c.l.b16 %v4121
      %v4161 = vunpack.c.l.b16 %v4125
      %v4162 = vunpack.c.l.b16 %v4128
      %v4163 = vunpack.c.l.b16 %v4131
      %v4164 = vpack.c.b16 %v4135, %v4134
      %v4165 = vpack.c.b16 %v4137, %v4136
      %v4166 = vpack.c.b16 %v4139, %v4138
      %v4167 = vpack.c.b16 %v4141, %v4140
      %v4168 = vpack.c.b16 %v4143, %v4142
      %v4169 = vpack.c.b16 %v4145, %v4144
      %v4170 = vpack.c.b16 %v4147, %v4146
      %v4171 = vpack.c.b16 %v4149, %v4148
      %v4172 = vpack.c.b16 %v4151, %v4150
      %v4173 = vpack.c.b16 %v4153, %v4152
      %v4174 = vpack.c.b16 %v4155, %v4154
      %v4175 = vpack.c.b16 %v4157, %v4156
      %v4176 = vpack.c.b16 %v4159, %v4158
      %v4177 = vpack.c.b16 %v4161, %v4160
      %v4178 = vpack.c.b16 %v4163, %v4162
      %v4180 = vsel %vm670, %v4164, 0
      %v4183 = vsel %vm670, %v4165, 0
      %v4186 = vsel %vm670, %v4166, 0
      %v4189 = vsel %vm670, %v4167, 0
      %v4192 = vsel %vm670, %v4168, 0
      %v4195 = vsel %vm670, %v4169, 0
      %v4198 = vsel %vm670, %v4170, 0
      %v4201 = vsel %vm670, %v4171, 0
      %v4204 = vsel %vm670, %v4172, 0
      %v4207 = vsel %vm670, %v4173, 0
      %v4210 = vsel %vm670, %v4174, 0
      %v4213 = vsel %vm670, %v4175, 0
      %v4216 = vsel %vm670, %v4176, 0
      %v4219 = vsel %vm670, %v4177, 0
      %v4222 = vsel %vm670, %v4178, 0
      %v4225 = vsel %vm716, %v4133, 0
      %4227 = vmatprep.subr.bf16.mxu0 0
      %4228 = vmatpush1.bf16.msra.mxu0 %v4225
      %4229 = vmatprep.subr.bf16.mxu0 0
      %4230 = vmatpush1.bf16.msra.mxu0 0
      %4231 = vmatprep.subr.bf16.mxu0 0
      %4232 = vmatpush1.bf16.msra.mxu0 0
      %4233 = vmatprep.subr.bf16.mxu0 0
      %4234 = vmatpush1.bf16.msra.mxu0 0
      %4235 = vmatprep.subr.bf16.mxu0 0
      %4236 = vmatpush1.bf16.msra.mxu0 0
      %4237 = vmatprep.subr.bf16.mxu0 0
      %4238 = vmatpush1.bf16.msra.mxu0 0
      %4239 = vmatprep.subr.bf16.mxu0 0
      %4240 = vmatpush1.bf16.msra.mxu0 0
      %4241 = vmatprep.subr.bf16.mxu0 0
      %4242 = vmatpush1.bf16.msra.mxu0 0
      %4243 = vmatprep.subr.bf16.mxu0 0
      %4244 = vmatpush1.bf16.msra.mxu0 0
      %4245 = vmatprep.subr.bf16.mxu0 0
      %4246 = vmatpush1.bf16.msra.mxu0 0
      %4247 = vmatprep.subr.bf16.mxu0 0
      %4248 = vmatpush1.bf16.msra.mxu0 0
      %4249 = vmatprep.subr.bf16.mxu0 0
      %4250 = vmatpush1.bf16.msra.mxu0 0
      %4251 = vmatprep.subr.bf16.mxu0 0
      %4252 = vmatpush1.bf16.msra.mxu0 0
      %4253 = vmatprep.subr.bf16.mxu0 0
      %4254 = vmatpush1.bf16.msra.mxu0 0
      %4255 = vmatprep.subr.bf16.mxu0 0
      %4256 = vmatpush1.bf16.msra.mxu0 0
      %4257 = vmatprep.subr.bf16.mxu0 0
      %4258 = vmatpush1.bf16.msra.mxu0 0
      %4259 = vmatprep.mubr.bf16.mxu0 0
      %4260 = vmatmul.mubr.bf16.gmra.mrb[0].mxu0 %v4180
      %v4261 = vpop.f32.mrb[0].mxu0
      %v4262 = vadd.f32 0.0, %v4261
      %v4263 = vpop.f32.mrb[0].mxu0
      %v4264 = vpop.f32.mrb[0].mxu0
      %v4265 = vadd.f32 0.0, %v4264
      %v4266 = vpop.f32.mrb[0].mxu0
      %4267 = vmatprep.mubr.bf16.mxu0 0
      %4268 = vmatmul.mubr.bf16.gmra.mrb[0].mxu0 %v4183
      %v4269 = vpop.f32.mrb[0].mxu0
      %v4270 = vadd.f32 0.0, %v4269
      %v4271 = vpop.f32.mrb[0].mxu0
      %v4272 = vpop.f32.mrb[0].mxu0
      %v4273 = vadd.f32 0.0, %v4272
      %v4274 = vpop.f32.mrb[0].mxu0
      %4275 = vmatprep.mubr.bf16.mxu0 0
      %4276 = vmatmul.mubr.bf16.gmra.mrb[0].mxu0 %v4186
      %v4277 = vpop.f32.mrb[0].mxu0
      %v4278 = vadd.f32 0.0, %v4277
      %v4279 = vpop.f32.mrb[0].mxu0
      %v4280 = vpop.f32.mrb[0].mxu0
      %v4281 = vadd.f32 0.0, %v4280
      %v4282 = vpop.f32.mrb[0].mxu0
      %4283 = vmatprep.mubr.bf16.mxu0 0
      %4284 = vmatmul.mubr.bf16.gmra.mrb[0].mxu0 %v4189
      %v4285 = vpop.f32.mrb[0].mxu0
      %v4286 = vadd.f32 0.0, %v4285
      %v4287 = vpop.f32.mrb[0].mxu0
      %v4288 = vpop.f32.mrb[0].mxu0
      %v4289 = vadd.f32 0.0, %v4288
      %v4290 = vpop.f32.mrb[0].mxu0
      %4291 = vmatprep.mubr.bf16.mxu0 0
      %4292 = vmatmul.mubr.bf16.gmra.mrb[0].mxu0 %v4192
      %v4293 = vpop.f32.mrb[0].mxu0
      %v4294 = vadd.f32 0.0, %v4293
      %v4295 = vpop.f32.mrb[0].mxu0
      %v4296 = vpop.f32.mrb[0].mxu0
      %v4297 = vadd.f32 0.0, %v4296
      %v4298 = vpop.f32.mrb[0].mxu0
      %4299 = vmatprep.mubr.bf16.mxu0 0
      %4300 = vmatmul.mubr.bf16.gmra.mrb[0].mxu0 %v4195
      %v4301 = vpop.f32.mrb[0].mxu0
      %v4302 = vadd.f32 0.0, %v4301
      %v4303 = vpop.f32.mrb[0].mxu0
      %v4304 = vpop.f32.mrb[0].mxu0
      %v4305 = vadd.f32 0.0, %v4304
      %v4306 = vpop.f32.mrb[0].mxu0
      %4307 = vmatprep.mubr.bf16.mxu0 0
      %4308 = vmatmul.mubr.bf16.gmra.mrb[0].mxu0 %v4198
      %v4309 = vpop.f32.mrb[0].mxu0
      %v4310 = vadd.f32 0.0, %v4309
      %v4311 = vpop.f32.mrb[0].mxu0
      %v4312 = vpop.f32.mrb[0].mxu0
      %v4313 = vadd.f32 0.0, %v4312
      %v4314 = vpop.f32.mrb[0].mxu0
      %4315 = vmatprep.mubr.bf16.mxu0 0
      %4316 = vmatmul.mubr.bf16.gmra.mrb[0].mxu0 %v4201
      %v4317 = vpop.f32.mrb[0].mxu0
      %v4318 = vadd.f32 0.0, %v4317
      %v4319 = vpop.f32.mrb[0].mxu0
      %v4320 = vpop.f32.mrb[0].mxu0
      %v4321 = vadd.f32 0.0, %v4320
      %v4322 = vpop.f32.mrb[0].mxu0
      %4323 = vmatprep.mubr.bf16.mxu0 0
      %4324 = vmatmul.mubr.bf16.gmra.mrb[0].mxu0 %v4204
      %v4325 = vpop.f32.mrb[0].mxu0
      %v4326 = vadd.f32 0.0, %v4325
      %v4327 = vpop.f32.mrb[0].mxu0
      %v4328 = vpop.f32.mrb[0].mxu0
      %v4329 = vadd.f32 0.0, %v4328
      %v4330 = vpop.f32.mrb[0].mxu0
      %4331 = vmatprep.mubr.bf16.mxu0 0
      %4332 = vmatmul.mubr.bf16.gmra.mrb[0].mxu0 %v4207
      %v4333 = vpop.f32.mrb[0].mxu0
      %v4334 = vadd.f32 0.0, %v4333
      %v4335 = vpop.f32.mrb[0].mxu0
      %v4336 = vpop.f32.mrb[0].mxu0
      %v4337 = vadd.f32 0.0, %v4336
      %v4338 = vpop.f32.mrb[0].mxu0
      %4339 = vmatprep.mubr.bf16.mxu0 0
      %4340 = vmatmul.mubr.bf16.gmra.mrb[0].mxu0 %v4210
      %v4341 = vpop.f32.mrb[0].mxu0
      %v4342 = vadd.f32 0.0, %v4341
      %v4343 = vpop.f32.mrb[0].mxu0
      %v4344 = vpop.f32.mrb[0].mxu0
      %v4345 = vadd.f32 0.0, %v4344
      %v4346 = vpop.f32.mrb[0].mxu0
      %4347 = vmatprep.mubr.bf16.mxu0 0
      %4348 = vmatmul.mubr.bf16.gmra.mrb[0].mxu0 %v4213
      %v4349 = vpop.f32.mrb[0].mxu0
      %v4350 = vadd.f32 0.0, %v4349
      %v4351 = vpop.f32.mrb[0].mxu0
      %v4352 = vpop.f32.mrb[0].mxu0
      %v4353 = vadd.f32 0.0, %v4352
      %v4354 = vpop.f32.mrb[0].mxu0
      %4355 = vmatprep.mubr.bf16.mxu0 0
      %4356 = vmatmul.mubr.bf16.gmra.mrb[0].mxu0 %v4216
      %v4357 = vpop.f32.mrb[0].mxu0
      %v4358 = vadd.f32 0.0, %v4357
      %v4359 = vpop.f32.mrb[0].mxu0
      %v4360 = vpop.f32.mrb[0].mxu0
      %v4361 = vadd.f32 0.0, %v4360
      %v4362 = vpop.f32.mrb[0].mxu0
      %4363 = vmatprep.mubr.bf16.mxu0 0
      %4364 = vmatmul.mubr.bf16.gmra.mrb[0].mxu0 %v4219
      %v4365 = vpop.f32.mrb[0].mxu0
      %v4366 = vadd.f32 0.0, %v4365
      %v4367 = vpop.f32.mrb[0].mxu0
      %v4368 = vpop.f32.mrb[0].mxu0
      %v4369 = vadd.f32 0.0, %v4368
      %v4370 = vpop.f32.mrb[0].mxu0
      %4371 = vmatprep.mubr.bf16.mxu0 0
      %4372 = vmatmul.mubr.bf16.gmra.mrb[0].mxu0 %v4222
      %v4373 = vpop.f32.mrb[0].mxu0
      %v4374 = vadd.f32 0.0, %v4373
      %v4375 = vpop.f32.mrb[0].mxu0
      %v4376 = vpop.f32.mrb[0].mxu0
      %v4377 = vadd.f32 0.0, %v4376
      %v4378 = vpop.f32.mrb[0].mxu0
      %4379 = vdwg.mxu0
      %v4380 = vadd.f32 %v3952, %v4262
      %v4381 = vadd.f32 %v3953, %v4265
      %v4382 = vadd.f32 %v3954, %v4270
      %v4383 = vadd.f32 %v3955, %v4273
      %v4384 = vadd.f32 %v3956, %v4278
      %v4385 = vadd.f32 %v3957, %v4281
      %v4386 = vadd.f32 %v3958, %v4286
      %v4387 = vadd.f32 %v3959, %v4289
      %v4388 = vadd.f32 %v3960, %v4294
      %v4389 = vadd.f32 %v3961, %v4297
      %v4390 = vadd.f32 %v3962, %v4302
      %v4391 = vadd.f32 %v3963, %v4305
      %v4392 = vadd.f32 %v3964, %v4310
      %v4393 = vadd.f32 %v3965, %v4313
      %v4394 = vadd.f32 %v3966, %v4318
      %v4395 = vadd.f32 %v3967, %v4321
      %v4396 = vadd.f32 %v3968, %v4326
      %v4397 = vadd.f32 %v3969, %v4329
      %v4398 = vadd.f32 %v3970, %v4334
      %v4399 = vadd.f32 %v3971, %v4337
      %v4400 = vadd.f32 %v3972, %v4342
      %v4401 = vadd.f32 %v3973, %v4345
      %v4402 = vadd.f32 %v3974, %v4350
      %v4403 = vadd.f32 %v3975, %v4353
      %v4404 = vadd.f32 %v3976, %v4358
      %v4405 = vadd.f32 %v3977, %v4361
      %v4406 = vadd.f32 %v3978, %v4366
      %v4407 = vadd.f32 %v3979, %v4369
      %v4408 = vadd.f32 %v3980, %v4374
      %v4409 = vadd.f32 %v3981, %v4377
      %v4410 = vld [vmem:[%s2] sm:$0x1]
      %v4412 = vlaneseq
      %v4413 = vshrl.u32 %v4412, 7
      %v4414 = vsub.s32 0, %v4413
      %v4415 = vrot.slane %v4410, %v4414
      %v4417 = vadd.f32 %v4380, %v4415
      %v4418 = vadd.f32 %v4381, %v4415
      %v4419 = vadd.f32 %v4382, %v4415
      %v4420 = vadd.f32 %v4383, %v4415
      %v4421 = vadd.f32 %v4384, %v4415
      %v4422 = vadd.f32 %v4385, %v4415
      %v4423 = vadd.f32 %v4386, %v4415
      %v4424 = vadd.f32 %v4387, %v4415
      %v4425 = vadd.f32 %v4388, %v4415
      %v4426 = vadd.f32 %v4389, %v4415
      %v4427 = vadd.f32 %v4390, %v4415
      %v4428 = vadd.f32 %v4391, %v4415
      %v4429 = vadd.f32 %v4392, %v4415
      %v4430 = vadd.f32 %v4393, %v4415
      %v4431 = vadd.f32 %v4394, %v4415
      %v4432 = vadd.f32 %v4395, %v4415
      %v4433 = vadd.f32 %v4396, %v4415
      %v4434 = vadd.f32 %v4397, %v4415
      %v4435 = vadd.f32 %v4398, %v4415
      %v4436 = vadd.f32 %v4399, %v4415
      %v4437 = vadd.f32 %v4400, %v4415
      %v4438 = vadd.f32 %v4401, %v4415
      %v4439 = vadd.f32 %v4402, %v4415
      %v4440 = vadd.f32 %v4403, %v4415
      %v4441 = vadd.f32 %v4404, %v4415
      %v4442 = vadd.f32 %v4405, %v4415
      %v4443 = vadd.f32 %v4406, %v4415
      %v4444 = vadd.f32 %v4407, %v4415
      %v4445 = vadd.f32 %v4408, %v4415
      %v4446 = vadd.f32 %v4409, %v4415
      %v4447 = vmax.f32 %v4417, 0.0
      %v4448 = vmax.f32 %v4418, 0.0
      %v4449 = vmax.f32 %v4419, 0.0
      %v4450 = vmax.f32 %v4420, 0.0
      %v4451 = vmax.f32 %v4421, 0.0
      %v4452 = vmax.f32 %v4422, 0.0
      %v4453 = vmax.f32 %v4423, 0.0
      %v4454 = vmax.f32 %v4424, 0.0
      %v4455 = vmax.f32 %v4425, 0.0
      %v4456 = vmax.f32 %v4426, 0.0
      %v4457 = vmax.f32 %v4427, 0.0
      %v4458 = vmax.f32 %v4428, 0.0
      %v4459 = vmax.f32 %v4429, 0.0
      %v4460 = vmax.f32 %v4430, 0.0
      %v4461 = vmax.f32 %v4431, 0.0
      %v4462 = vmax.f32 %v4432, 0.0
      %v4463 = vmax.f32 %v4433, 0.0
      %v4464 = vmax.f32 %v4434, 0.0
      %v4465 = vmax.f32 %v4435, 0.0
      %v4466 = vmax.f32 %v4436, 0.0
      %v4467 = vmax.f32 %v4437, 0.0
      %v4468 = vmax.f32 %v4438, 0.0
      %v4469 = vmax.f32 %v4439, 0.0
      %v4470 = vmax.f32 %v4440, 0.0
      %v4471 = vmax.f32 %v4441, 0.0
      %v4472 = vmax.f32 %v4442, 0.0
      %v4473 = vmax.f32 %v4443, 0.0
      %v4474 = vmax.f32 %v4444, 0.0
      %v4475 = vmax.f32 %v4445, 0.0
      %v4476 = vmax.f32 %v4446, 0.0
      %s4477 = ssub.s32 %s238, 1
      %v4478 = vstv %s4477
      %v4479 = vadd.s32 %v4478, 1
      %v4480 = vadd.s32 %v4478, 2
      %v4481 = vadd.s32 %v4478, 3
      %v4482 = vadd.s32 %v4478, 4
      %v4483 = vadd.s32 %v4478, 5
      %v4484 = vadd.s32 %v4478, 6
      %v4485 = vadd.s32 %v4478, 7
      %v4486 = vadd.s32 %v4478, 8
      %v4487 = vadd.s32 %v4478, 9
      %v4488 = vlaneseq
      %v4489 = vshrl.u32 %v4488, 7
      %v4490 = vadd.s32 %v4489, 8
      %v4491 = vadd.s32 %v4489, 16
      %v4492 = vsub.s32 %v4489, 1
      %v4493 = vsub.s32 %v4490, 1
      %v4494 = vsub.s32 %v4491, 1
      %vm4495 = vcmp.ge.s32.totalorder %v4478, 0
      %vm4496 = vcmp.ge.s32.totalorder %v4479, 0
      %vm4497 = vcmp.ge.s32.totalorder %v4480, 0
      %vm4498 = vcmp.ge.s32.totalorder %v4481, 0
      %vm4499 = vcmp.ge.s32.totalorder %v4482, 0
      %vm4500 = vcmp.ge.s32.totalorder %v4483, 0
      %vm4501 = vcmp.ge.s32.totalorder %v4484, 0
      %vm4502 = vcmp.ge.s32.totalorder %v4485, 0
      %vm4503 = vcmp.ge.s32.totalorder %v4486, 0
      %vm4504 = vcmp.ge.s32.totalorder %v4487, 0
      %vm4505 = vcmp.lt.s32.totalorder %v4478, 16
      %vm4506 = vcmp.lt.s32.totalorder %v4479, 16
      %vm4507 = vcmp.lt.s32.totalorder %v4480, 16
      %vm4508 = vcmp.lt.s32.totalorder %v4481, 16
      %vm4509 = vcmp.lt.s32.totalorder %v4482, 16
      %vm4510 = vcmp.lt.s32.totalorder %v4483, 16
      %vm4511 = vcmp.lt.s32.totalorder %v4484, 16
      %vm4512 = vcmp.lt.s32.totalorder %v4485, 16
      %vm4513 = vcmp.lt.s32.totalorder %v4486, 16
      %vm4514 = vcmp.lt.s32.totalorder %v4487, 16
      %vm4515 = vmand %vm4495, %vm4505
      %vm4516 = vmand %vm4496, %vm4506
      %vm4517 = vmand %vm4497, %vm4507
      %vm4518 = vmand %vm4498, %vm4508
      %vm4519 = vmand %vm4499, %vm4509
      %vm4520 = vmand %vm4500, %vm4510
      %vm4521 = vmand %vm4501, %vm4511
      %vm4522 = vmand %vm4502, %vm4512
      %vm4523 = vmand %vm4503, %vm4513
      %vm4524 = vmand %vm4504, %vm4514
      %vm4525 = vcmp.ge.s32.totalorder %v4492, 0
      %vm4526 = vcmp.ge.s32.totalorder %v4493, 0
      %vm4527 = vcmp.ge.s32.totalorder %v4494, 0
      %vm4528 = vmand %vm4515, %vm4525
      %vm4529 = vmand %vm4515, %vm4526
      %vm4530 = vmand %vm4515, %vm4527
      %vm4531 = vmand %vm4516, %vm4525
      %vm4532 = vmand %vm4516, %vm4526
      %vm4533 = vmand %vm4516, %vm4527
      %vm4534 = vmand %vm4517, %vm4525
      %vm4535 = vmand %vm4517, %vm4526
      %vm4536 = vmand %vm4517, %vm4527
      %vm4537 = vmand %vm4518, %vm4525
      %vm4538 = vmand %vm4518, %vm4526
      %vm4539 = vmand %vm4518, %vm4527
      %vm4540 = vmand %vm4519, %vm4525
      %vm4541 = vmand %vm4519, %vm4526
      %vm4542 = vmand %vm4519, %vm4527
      %vm4543 = vmand %vm4520, %vm4525
      %vm4544 = vmand %vm4520, %vm4526
      %vm4545 = vmand %vm4520, %vm4527
      %vm4546 = vmand %vm4521, %vm4525
      %vm4547 = vmand %vm4521, %vm4526
      %vm4548 = vmand %vm4521, %vm4527
      %vm4549 = vmand %vm4522, %vm4525
      %vm4550 = vmand %vm4522, %vm4526
      %vm4551 = vmand %vm4522, %vm4527
      %vm4552 = vmand %vm4523, %vm4525
      %vm4553 = vmand %vm4523, %vm4526
      %vm4554 = vmand %vm4523, %vm4527
      %vm4555 = vmand %vm4524, %vm4525
      %vm4556 = vmand %vm4524, %vm4526
      %vm4557 = vmand %vm4524, %vm4527
      %vm4558 = vcmp.lt.s32.totalorder %v4492, 16
      %vm4559 = vcmp.lt.s32.totalorder %v4493, 16
      %vm4560 = vcmp.lt.s32.totalorder %v4494, 16
      %vm4561 = vmand %vm4528, %vm4558
      %vm4562 = vmand %vm4529, %vm4559
      %vm4563 = vmand %vm4530, %vm4560
      %vm4564 = vmand %vm4531, %vm4558
      %vm4565 = vmand %vm4532, %vm4559
      %vm4566 = vmand %vm4533, %vm4560
      %vm4567 = vmand %vm4534, %vm4558
      %vm4568 = vmand %vm4535, %vm4559
      %vm4569 = vmand %vm4536, %vm4560
      %vm4570 = vmand %vm4537, %vm4558
      %vm4571 = vmand %vm4538, %vm4559
      %vm4572 = vmand %vm4539, %vm4560
      %vm4573 = vmand %vm4540, %vm4558
      %vm4574 = vmand %vm4541, %vm4559
      %vm4575 = vmand %vm4542, %vm4560
      %vm4576 = vmand %vm4543, %vm4558
      %vm4577 = vmand %vm4544, %vm4559
      %vm4578 = vmand %vm4545, %vm4560
      %vm4579 = vmand %vm4546, %vm4558
      %vm4580 = vmand %vm4547, %vm4559
      %vm4581 = vmand %vm4548, %vm4560
      %vm4582 = vmand %vm4549, %vm4558
      %vm4583 = vmand %vm4550, %vm4559
      %vm4584 = vmand %vm4551, %vm4560
      %vm4585 = vmand %vm4552, %vm4558
      %vm4586 = vmand %vm4553, %vm4559
      %vm4587 = vmand %vm4554, %vm4560
      %vm4588 = vmand %vm4555, %vm4558
      %vm4589 = vmand %vm4556, %vm4559
      %vm4590 = vmand %vm4557, %vm4560
      %v4591 = vsel %vm4561, 1, 0
      %v4592 = vsel %vm4562, 1, 0
      %v4593 = vsel %vm4563, 1, 0
      %v4594 = vsel %vm4564, 1, 0
      %v4595 = vsel %vm4565, 1, 0
      %v4596 = vsel %vm4566, 1, 0
      %v4597 = vsel %vm4567, 1, 0
      %v4598 = vsel %vm4568, 1, 0
      %v4599 = vsel %vm4569, 1, 0
      %v4600 = vsel %vm4570, 1, 0
      %v4601 = vsel %vm4571, 1, 0
      %v4602 = vsel %vm4572, 1, 0
      %v4603 = vsel %vm4573, 1, 0
      %v4604 = vsel %vm4574, 1, 0
      %v4605 = vsel %vm4575, 1, 0
      %v4606 = vsel %vm4576, 1, 0
      %v4607 = vsel %vm4577, 1, 0
      %v4608 = vsel %vm4578, 1, 0
      %v4609 = vsel %vm4579, 1, 0
      %v4610 = vsel %vm4580, 1, 0
      %v4611 = vsel %vm4581, 1, 0
      %v4612 = vsel %vm4582, 1, 0
      %v4613 = vsel %vm4583, 1, 0
      %v4614 = vsel %vm4584, 1, 0
      %v4615 = vsel %vm4585, 1, 0
      %v4616 = vsel %vm4586, 1, 0
      %v4617 = vsel %vm4587, 1, 0
      %v4618 = vsel %vm4588, 1, 0
      %v4619 = vsel %vm4589, 1, 0
      %v4620 = vsel %vm4590, 1, 0
      %vm4621 = vcmp.eq.s32.totalorder %v4591, 1
      %vm4622 = vcmp.eq.s32.totalorder %v4592, 1
      %vm4623 = vcmp.eq.s32.totalorder %v4593, 1
      %vm4624 = vcmp.eq.s32.totalorder %v4594, 1
      %vm4625 = vcmp.eq.s32.totalorder %v4595, 1
      %vm4626 = vcmp.eq.s32.totalorder %v4596, 1
      %vm4627 = vcmp.eq.s32.totalorder %v4597, 1
      %vm4628 = vcmp.eq.s32.totalorder %v4598, 1
      %vm4629 = vcmp.eq.s32.totalorder %v4599, 1
      %vm4630 = vcmp.eq.s32.totalorder %v4600, 1
      %vm4631 = vcmp.eq.s32.totalorder %v4601, 1
      %vm4632 = vcmp.eq.s32.totalorder %v4602, 1
      %vm4633 = vcmp.eq.s32.totalorder %v4603, 1
      %vm4634 = vcmp.eq.s32.totalorder %v4604, 1
      %vm4635 = vcmp.eq.s32.totalorder %v4605, 1
      %vm4636 = vcmp.eq.s32.totalorder %v4606, 1
      %vm4637 = vcmp.eq.s32.totalorder %v4607, 1
      %vm4638 = vcmp.eq.s32.totalorder %v4608, 1
      %vm4639 = vcmp.eq.s32.totalorder %v4609, 1
      %vm4640 = vcmp.eq.s32.totalorder %v4610, 1
      %vm4641 = vcmp.eq.s32.totalorder %v4611, 1
      %vm4642 = vcmp.eq.s32.totalorder %v4612, 1
      %vm4643 = vcmp.eq.s32.totalorder %v4613, 1
      %vm4644 = vcmp.eq.s32.totalorder %v4614, 1
      %vm4645 = vcmp.eq.s32.totalorder %v4615, 1
      %vm4646 = vcmp.eq.s32.totalorder %v4616, 1
      %vm4647 = vcmp.eq.s32.totalorder %v4617, 1
      %vm4648 = vcmp.eq.s32.totalorder %v4618, 1
      %vm4649 = vcmp.eq.s32.totalorder %v4619, 1
      %vm4650 = vcmp.eq.s32.totalorder %v4620, 1
      %v4651 = vsel %vm4621, %v4447, 0.0
      %v4652 = vsel %vm4622, %v4448, 0.0
      %v4653 = vsel %vm4623, %v4449, 0.0
      %v4654 = vsel %vm4624, %v4450, 0.0
      %v4655 = vsel %vm4625, %v4451, 0.0
      %v4656 = vsel %vm4626, %v4452, 0.0
      %v4657 = vsel %vm4627, %v4453, 0.0
      %v4658 = vsel %vm4628, %v4454, 0.0
      %v4659 = vsel %vm4629, %v4455, 0.0
      %v4660 = vsel %vm4630, %v4456, 0.0
      %v4661 = vsel %vm4631, %v4457, 0.0
      %v4662 = vsel %vm4632, %v4458, 0.0
      %v4663 = vsel %vm4633, %v4459, 0.0
      %v4664 = vsel %vm4634, %v4460, 0.0
      %v4665 = vsel %vm4635, %v4461, 0.0
      %v4666 = vsel %vm4636, %v4462, 0.0
      %v4667 = vsel %vm4637, %v4463, 0.0
      %v4668 = vsel %vm4638, %v4464, 0.0
      %v4669 = vsel %vm4639, %v4465, 0.0
      %v4670 = vsel %vm4640, %v4466, 0.0
      %v4671 = vsel %vm4641, %v4467, 0.0
      %v4672 = vsel %vm4642, %v4468, 0.0
      %v4673 = vsel %vm4643, %v4469, 0.0
      %v4674 = vsel %vm4644, %v4470, 0.0
      %v4675 = vsel %vm4645, %v4471, 0.0
      %v4676 = vsel %vm4646, %v4472, 0.0
      %v4677 = vsel %vm4647, %v4473, 0.0
      %v4678 = vsel %vm4648, %v4474, 0.0
      %v4679 = vsel %vm4649, %v4475, 0.0
      %v4680 = vsel %vm4650, %v4476, 0.0
      %v4681 = vpack.c.bf16 %v4652, %v4651
      %v4682 = vpack.c.bf16 %v4653, %v4653
      %v4683 = vpack.c.bf16 %v4655, %v4654
      %v4684 = vpack.c.bf16 %v4656, %v4656
      %v4685 = vpack.c.bf16 %v4658, %v4657
      %v4686 = vpack.c.bf16 %v4659, %v4659
      %v4687 = vpack.c.bf16 %v4661, %v4660
      %v4688 = vpack.c.bf16 %v4662, %v4662
      %v4689 = vpack.c.bf16 %v4664, %v4663
      %v4690 = vpack.c.bf16 %v4665, %v4665
      %v4691 = vpack.c.bf16 %v4667, %v4666
      %v4692 = vpack.c.bf16 %v4668, %v4668
      %v4693 = vpack.c.bf16 %v4670, %v4669
      %v4694 = vpack.c.bf16 %v4671, %v4671
      %v4695 = vpack.c.bf16 %v4673, %v4672
      %v4696 = vpack.c.bf16 %v4674, %v4674
      %v4697 = vpack.c.bf16 %v4676, %v4675
      %v4698 = vpack.c.bf16 %v4677, %v4677
      %v4699 = vpack.c.bf16 %v4679, %v4678
      %v4700 = vpack.c.bf16 %v4680, %v4680
      %v4701 = vld [vmem:[%s3] sm:$0xf]
      %v4702 = vld [vmem:[%s3 + $0x4] sm:$0xf]
      %v4703 = vld [vmem:[%s3 + $0x8] sm:$0xf]
      %v4704 = vld [vmem:[%s3 + $0xc] sm:$0xf]
      %v4705 = vld [vmem:[%s3 + $0x10] sm:$0xf]
      %v4706 = vld [vmem:[%s3 + $0x14] sm:$0xf]
      %v4707 = vld [vmem:[%s3 + $0x18] sm:$0xf]
      %v4708 = vld [vmem:[%s3 + $0x1c] sm:$0xf]
      %v4709 = vld [vmem:[%s3 + $0x20] sm:$0xf]
      %v4710 = vld [vmem:[%s3 + $0x24] sm:$0xf]
      %v4711 = vld [vmem:[%s3 + $0x28] sm:$0xf]
      %v4712 = vld [vmem:[%s3 + $0x2c] sm:$0xf]
      %v4713 = vld [vmem:[%s3 + $0x30] sm:$0xf]
      %v4714 = vld [vmem:[%s3 + $0x34] sm:$0xf]
      %v4715 = vld [vmem:[%s3 + $0x38] sm:$0xf]
      %v4716 = vld [vmem:[%s3 + $0x3c] sm:$0xf]
      %vm4717 = vsmask.f32 7424
      %v4719 = vshrl.u32 %v4681, 16
      %v4721 = vshll.u32 %v4681, 16
      %v4723 = vrot.slane %v4721, 1
      %v4724 = vor.u32 %v4719, %v4723
      %v4726 = vshll.u32 %v4682, 16
      %v4728 = vrot.slane %v4726, 1
      %v4729 = vsel %vm4717, %v4724, %v4728
      %v4731 = vshrl.u32 %v4683, 16
      %v4733 = vshll.u32 %v4683, 16
      %v4735 = vrot.slane %v4733, 1
      %v4736 = vor.u32 %v4731, %v4735
      %v4738 = vshll.u32 %v4684, 16
      %v4740 = vrot.slane %v4738, 1
      %v4741 = vsel %vm4717, %v4736, %v4740
      %v4743 = vshrl.u32 %v4685, 16
      %v4745 = vshll.u32 %v4685, 16
      %v4747 = vrot.slane %v4745, 1
      %v4748 = vor.u32 %v4743, %v4747
      %v4750 = vshll.u32 %v4686, 16
      %v4752 = vrot.slane %v4750, 1
      %v4753 = vsel %vm4717, %v4748, %v4752
      %v4755 = vshrl.u32 %v4687, 16
      %v4757 = vshll.u32 %v4687, 16
      %v4759 = vrot.slane %v4757, 1
      %v4760 = vor.u32 %v4755, %v4759
      %v4762 = vshll.u32 %v4688, 16
      %v4764 = vrot.slane %v4762, 1
      %v4765 = vsel %vm4717, %v4760, %v4764
      %v4767 = vshrl.u32 %v4689, 16
      %v4769 = vshll.u32 %v4689, 16
      %v4771 = vrot.slane %v4769, 1
      %v4772 = vor.u32 %v4767, %v4771
      %v4774 = vshll.u32 %v4690, 16
      %v4776 = vrot.slane %v4774, 1
      %v4777 = vsel %vm4717, %v4772, %v4776
      %v4779 = vshrl.u32 %v4691, 16
      %v4781 = vshll.u32 %v4691, 16
      %v4783 = vrot.slane %v4781, 1
      %v4784 = vor.u32 %v4779, %v4783
      %v4786 = vshll.u32 %v4692, 16
      %v4788 = vrot.slane %v4786, 1
      %v4789 = vsel %vm4717, %v4784, %v4788
      %v4791 = vshrl.u32 %v4693, 16
      %v4793 = vshll.u32 %v4693, 16
      %v4795 = vrot.slane %v4793, 1
      %v4796 = vor.u32 %v4791, %v4795
      %v4798 = vshll.u32 %v4694, 16
      %v4800 = vrot.slane %v4798, 1
      %v4801 = vsel %vm4717, %v4796, %v4800
      %v4803 = vshrl.u32 %v4695, 16
      %v4805 = vshll.u32 %v4695, 16
      %v4807 = vrot.slane %v4805, 1
      %v4808 = vor.u32 %v4803, %v4807
      %v4810 = vshll.u32 %v4696, 16
      %v4812 = vrot.slane %v4810, 1
      %v4813 = vsel %vm4717, %v4808, %v4812
      %s4822 = scalar_lea.vmem %s3, 64
      %v4823 = vld [vmem:[%s4822] sm:$0xf]
      %v4824 = vld [vmem:[%s4822 + $0x4] sm:$0xf]
      %v4825 = vld [vmem:[%s4822 + $0x8] sm:$0xf]
      %v4826 = vld [vmem:[%s4822 + $0xc] sm:$0xf]
      %v4827 = vld [vmem:[%s4822 + $0x10] sm:$0xf]
      %v4828 = vld [vmem:[%s4822 + $0x14] sm:$0xf]
      %v4829 = vld [vmem:[%s4822 + $0x18] sm:$0xf]
      %v4830 = vld [vmem:[%s4822 + $0x1c] sm:$0xf]
      %v4831 = vld [vmem:[%s4822 + $0x20] sm:$0xf]
      %v4832 = vld [vmem:[%s4822 + $0x24] sm:$0xf]
      %v4833 = vld [vmem:[%s4822 + $0x28] sm:$0xf]
      %v4834 = vld [vmem:[%s4822 + $0x2c] sm:$0xf]
      %v4835 = vld [vmem:[%s4822 + $0x30] sm:$0xf]
      %v4836 = vld [vmem:[%s4822 + $0x34] sm:$0xf]
      %v4837 = vld [vmem:[%s4822 + $0x38] sm:$0xf]
      %v4838 = vld [vmem:[%s4822 + $0x3c] sm:$0xf]
      %v4855 = vunpack.c.l.b16 %v4823
      %v4856 = vunpack.c.l.b16 %v4824
      %v4857 = vunpack.c.l.b16 %v4825
      %v4858 = vunpack.c.l.b16 %v4826
      %v4859 = vunpack.c.l.b16 %v4827
      %v4860 = vunpack.c.l.b16 %v4828
      %v4861 = vunpack.c.l.b16 %v4829
      %v4862 = vunpack.c.l.b16 %v4830
      %v4863 = vunpack.c.l.b16 %v4831
      %v4864 = vunpack.c.l.b16 %v4832
      %v4865 = vunpack.c.l.b16 %v4833
      %v4866 = vunpack.c.l.b16 %v4834
      %v4867 = vunpack.c.l.b16 %v4835
      %v4868 = vunpack.c.l.b16 %v4836
      %v4869 = vunpack.c.l.b16 %v4837
      %v4870 = vunpack.c.l.b16 %v4838
      %v4871 = vpack.c.b16 %v4856, %v4855
      %v4872 = vpack.c.b16 %v4858, %v4857
      %v4873 = vpack.c.b16 %v4860, %v4859
      %v4874 = vpack.c.b16 %v4862, %v4861
      %v4875 = vpack.c.b16 %v4864, %v4863
      %v4876 = vpack.c.b16 %v4866, %v4865
      %v4877 = vpack.c.b16 %v4868, %v4867
      %v4878 = vpack.c.b16 %v4870, %v4869
      %4887 = vmatprep.subr.bf16.mxu0 0
      %4888 = vmatpush1.bf16.msra.mxu0 %v4871
      %4889 = vmatprep.subr.bf16.mxu0 0
      %4890 = vmatpush1.bf16.msra.mxu0 %v4872
      %4891 = vmatprep.subr.bf16.mxu0 0
      %4892 = vmatpush1.bf16.msra.mxu0 %v4873
      %4893 = vmatprep.subr.bf16.mxu0 0
      %4894 = vmatpush1.bf16.msra.mxu0 %v4874
      %4895 = vmatprep.subr.bf16.mxu0 0
      %4896 = vmatpush1.bf16.msra.mxu0 %v4875
      %4897 = vmatprep.subr.bf16.mxu0 0
      %4898 = vmatpush1.bf16.msra.mxu0 %v4876
      %4899 = vmatprep.subr.bf16.mxu0 0
      %4900 = vmatpush1.bf16.msra.mxu0 %v4877
      %4901 = vmatprep.subr.bf16.mxu0 0
      %4902 = vmatpush1.bf16.msra.mxu0 %v4878
      %4903 = vmatprep.subr.bf16.mxu0 0
      %4904 = vmatpush1.bf16.msra.mxu0 0
      %4905 = vmatprep.subr.bf16.mxu0 0
      %4906 = vmatpush1.bf16.msra.mxu0 0
      %4907 = vmatprep.subr.bf16.mxu0 0
      %4908 = vmatpush1.bf16.msra.mxu0 0
      %4909 = vmatprep.subr.bf16.mxu0 0
      %4910 = vmatpush1.bf16.msra.mxu0 0
      %4911 = vmatprep.subr.bf16.mxu0 0
      %4912 = vmatpush1.bf16.msra.mxu0 0
      %4913 = vmatprep.subr.bf16.mxu0 0
      %4914 = vmatpush1.bf16.msra.mxu0 0
      %4915 = vmatprep.subr.bf16.mxu0 0
      %4916 = vmatpush1.bf16.msra.mxu0 0
      %4917 = vmatprep.subr.bf16.mxu0 0
      %4918 = vmatpush1.bf16.msra.mxu0 0
      %4919 = vmatprep.mubr.bf16.mxu0 0
      %4920 = vmatmul.mubr.bf16.gmra.mrb[0].mxu0 %v4729
      %v4921 = vpop.f32.mrb[0].mxu0
      %v4922 = vadd.f32 0.0, %v4921
      %v4923 = vpop.f32.mrb[0].mxu0
      %v4924 = vpop.f32.mrb[0].mxu0
      %v4925 = vadd.f32 0.0, %v4924
      %v4926 = vpop.f32.mrb[0].mxu0
      %4927 = vmatprep.mubr.bf16.mxu0 0
      %4928 = vmatmul.mubr.bf16.gmra.mrb[0].mxu0 %v4741
      %v4929 = vpop.f32.mrb[0].mxu0
      %v4930 = vadd.f32 0.0, %v4929
      %v4931 = vpop.f32.mrb[0].mxu0
      %v4932 = vpop.f32.mrb[0].mxu0
      %v4933 = vadd.f32 0.0, %v4932
      %v4934 = vpop.f32.mrb[0].mxu0
      %4935 = vmatprep.mubr.bf16.mxu0 0
      %4936 = vmatmul.mubr.bf16.gmra.mrb[0].mxu0 %v4753
      %v4937 = vpop.f32.mrb[0].mxu0
      %v4938 = vadd.f32 0.0, %v4937
      %v4939 = vpop.f32.mrb[0].mxu0
      %v4940 = vpop.f32.mrb[0].mxu0
      %v4941 = vadd.f32 0.0, %v4940
      %v4942 = vpop.f32.mrb[0].mxu0
      %4943 = vmatprep.mubr.bf16.mxu0 0
      %4944 = vmatmul.mubr.bf16.gmra.mrb[0].mxu0 %v4765
      %v4945 = vpop.f32.mrb[0].mxu0
      %v4946 = vadd.f32 0.0, %v4945
      %v4947 = vpop.f32.mrb[0].mxu0
      %v4948 = vpop.f32.mrb[0].mxu0
      %v4949 = vadd.f32 0.0, %v4948
      %v4950 = vpop.f32.mrb[0].mxu0
      %4951 = vmatprep.mubr.bf16.mxu0 0
      %4952 = vmatmul.mubr.bf16.gmra.mrb[0].mxu0 %v4777
      %v4953 = vpop.f32.mrb[0].mxu0
      %v4954 = vadd.f32 0.0, %v4953
      %v4955 = vpop.f32.mrb[0].mxu0
      %v4956 = vpop.f32.mrb[0].mxu0
      %v4957 = vadd.f32 0.0, %v4956
      %v4958 = vpop.f32.mrb[0].mxu0
      %4959 = vmatprep.mubr.bf16.mxu0 0
      %4960 = vmatmul.mubr.bf16.gmra.mrb[0].mxu0 %v4789
      %v4961 = vpop.f32.mrb[0].mxu0
      %v4962 = vadd.f32 0.0, %v4961
      %v4963 = vpop.f32.mrb[0].mxu0
      %v4964 = vpop.f32.mrb[0].mxu0
      %v4965 = vadd.f32 0.0, %v4964
      %v4966 = vpop.f32.mrb[0].mxu0
      %4967 = vmatprep.mubr.bf16.mxu0 0
      %4968 = vmatmul.mubr.bf16.gmra.mrb[0].mxu0 %v4801
      %v4969 = vpop.f32.mrb[0].mxu0
      %v4970 = vadd.f32 0.0, %v4969
      %v4971 = vpop.f32.mrb[0].mxu0
      %v4972 = vpop.f32.mrb[0].mxu0
      %v4973 = vadd.f32 0.0, %v4972
      %v4974 = vpop.f32.mrb[0].mxu0
      %4975 = vmatprep.mubr.bf16.mxu0 0
      %4976 = vmatmul.mubr.bf16.gmra.mrb[0].mxu0 %v4813
      %v4977 = vpop.f32.mrb[0].mxu0
      %v4978 = vadd.f32 0.0, %v4977
      %v4979 = vpop.f32.mrb[0].mxu0
      %v4980 = vpop.f32.mrb[0].mxu0
      %v4981 = vadd.f32 0.0, %v4980
      %v4982 = vpop.f32.mrb[0].mxu0
      %4983 = vdwg.mxu0
      %v5000 = vunpack.c.l.b16 %v4701
      %v5001 = vunpack.c.l.b16 %v4702
      %v5002 = vunpack.c.l.b16 %v4703
      %v5003 = vunpack.c.l.b16 %v4704
      %v5004 = vunpack.c.l.b16 %v4705
      %v5005 = vunpack.c.l.b16 %v4706
      %v5006 = vunpack.c.l.b16 %v4707
      %v5007 = vunpack.c.l.b16 %v4708
      %v5008 = vunpack.c.l.b16 %v4709
      %v5009 = vunpack.c.l.b16 %v4710
      %v5010 = vunpack.c.l.b16 %v4711
      %v5011 = vunpack.c.l.b16 %v4712
      %v5012 = vunpack.c.l.b16 %v4713
      %v5013 = vunpack.c.l.b16 %v4714
      %v5014 = vunpack.c.l.b16 %v4715
      %v5015 = vunpack.c.l.b16 %v4716
      %v5016 = vpack.c.b16 %v5001, %v5000
      %v5017 = vpack.c.b16 %v5003, %v5002
      %v5018 = vpack.c.b16 %v5005, %v5004
      %v5019 = vpack.c.b16 %v5007, %v5006
      %v5020 = vpack.c.b16 %v5009, %v5008
      %v5021 = vpack.c.b16 %v5011, %v5010
      %v5022 = vpack.c.b16 %v5013, %v5012
      %v5023 = vpack.c.b16 %v5015, %v5014
      %5032 = vmatprep.subr.bf16.mxu0 0
      %5033 = vmatpush1.bf16.msra.mxu0 %v5016
      %5034 = vmatprep.subr.bf16.mxu0 0
      %5035 = vmatpush1.bf16.msra.mxu0 %v5017
      %5036 = vmatprep.subr.bf16.mxu0 0
      %5037 = vmatpush1.bf16.msra.mxu0 %v5018
      %5038 = vmatprep.subr.bf16.mxu0 0
      %5039 = vmatpush1.bf16.msra.mxu0 %v5019
      %5040 = vmatprep.subr.bf16.mxu0 0
      %5041 = vmatpush1.bf16.msra.mxu0 %v5020
      %5042 = vmatprep.subr.bf16.mxu0 0
      %5043 = vmatpush1.bf16.msra.mxu0 %v5021
      %5044 = vmatprep.subr.bf16.mxu0 0
      %5045 = vmatpush1.bf16.msra.mxu0 %v5022
      %5046 = vmatprep.subr.bf16.mxu0 0
      %5047 = vmatpush1.bf16.msra.mxu0 %v5023
      %5048 = vmatprep.subr.bf16.mxu0 0
      %5049 = vmatpush1.bf16.msra.mxu0 0
      %5050 = vmatprep.subr.bf16.mxu0 0
      %5051 = vmatpush1.bf16.msra.mxu0 0
      %5052 = vmatprep.subr.bf16.mxu0 0
      %5053 = vmatpush1.bf16.msra.mxu0 0
      %5054 = vmatprep.subr.bf16.mxu0 0
      %5055 = vmatpush1.bf16.msra.mxu0 0
      %5056 = vmatprep.subr.bf16.mxu0 0
      %5057 = vmatpush1.bf16.msra.mxu0 0
      %5058 = vmatprep.subr.bf16.mxu0 0
      %5059 = vmatpush1.bf16.msra.mxu0 0
      %5060 = vmatprep.subr.bf16.mxu0 0
      %5061 = vmatpush1.bf16.msra.mxu0 0
      %5062 = vmatprep.subr.bf16.mxu0 0
      %5063 = vmatpush1.bf16.msra.mxu0 0
      %5064 = vmatprep.mubr.bf16.mxu0 0
      %5065 = vmatmul.mubr.bf16.gmra.mrb[0].mxu0 %v4681
      %v5066 = vpop.f32.mrb[0].mxu0
      %v5067 = vadd.f32 %v4922, %v5066
      %v5068 = vpop.f32.mrb[0].mxu0
      %v5069 = vpop.f32.mrb[0].mxu0
      %v5070 = vadd.f32 %v4925, %v5069
      %v5071 = vpop.f32.mrb[0].mxu0
      %5072 = vmatprep.mubr.bf16.mxu0 0
      %5073 = vmatmul.mubr.bf16.gmra.mrb[0].mxu0 %v4683
      %v5074 = vpop.f32.mrb[0].mxu0
      %v5075 = vadd.f32 %v4930, %v5074
      %v5076 = vpop.f32.mrb[0].mxu0
      %v5077 = vpop.f32.mrb[0].mxu0
      %v5078 = vadd.f32 %v4933, %v5077
      %v5079 = vpop.f32.mrb[0].mxu0
      %5080 = vmatprep.mubr.bf16.mxu0 0
      %5081 = vmatmul.mubr.bf16.gmra.mrb[0].mxu0 %v4685
      %v5082 = vpop.f32.mrb[0].mxu0
      %v5083 = vadd.f32 %v4938, %v5082
      %v5084 = vpop.f32.mrb[0].mxu0
      %v5085 = vpop.f32.mrb[0].mxu0
      %v5086 = vadd.f32 %v4941, %v5085
      %v5087 = vpop.f32.mrb[0].mxu0
      %5088 = vmatprep.mubr.bf16.mxu0 0
      %5089 = vmatmul.mubr.bf16.gmra.mrb[0].mxu0 %v4687
      %v5090 = vpop.f32.mrb[0].mxu0
      %v5091 = vadd.f32 %v4946, %v5090
      %v5092 = vpop.f32.mrb[0].mxu0
      %v5093 = vpop.f32.mrb[0].mxu0
      %v5094 = vadd.f32 %v4949, %v5093
      %v5095 = vpop.f32.mrb[0].mxu0
      %5096 = vmatprep.mubr.bf16.mxu0 0
      %5097 = vmatmul.mubr.bf16.gmra.mrb[0].mxu0 %v4689
      %v5098 = vpop.f32.mrb[0].mxu0
      %v5099 = vadd.f32 %v4954, %v5098
      %v5100 = vpop.f32.mrb[0].mxu0
      %v5101 = vpop.f32.mrb[0].mxu0
      %v5102 = vadd.f32 %v4957, %v5101
      %v5103 = vpop.f32.mrb[0].mxu0
      %5104 = vmatprep.mubr.bf16.mxu0 0
      %5105 = vmatmul.mubr.bf16.gmra.mrb[0].mxu0 %v4691
      %v5106 = vpop.f32.mrb[0].mxu0
      %v5107 = vadd.f32 %v4962, %v5106
      %v5108 = vpop.f32.mrb[0].mxu0
      %v5109 = vpop.f32.mrb[0].mxu0
      %v5110 = vadd.f32 %v4965, %v5109
      %v5111 = vpop.f32.mrb[0].mxu0
      %5112 = vmatprep.mubr.bf16.mxu0 0
      %5113 = vmatmul.mubr.bf16.gmra.mrb[0].mxu0 %v4693
      %v5114 = vpop.f32.mrb[0].mxu0
      %v5115 = vadd.f32 %v4970, %v5114
      %v5116 = vpop.f32.mrb[0].mxu0
      %v5117 = vpop.f32.mrb[0].mxu0
      %v5118 = vadd.f32 %v4973, %v5117
      %v5119 = vpop.f32.mrb[0].mxu0
      %5120 = vmatprep.mubr.bf16.mxu0 0
      %5121 = vmatmul.mubr.bf16.gmra.mrb[0].mxu0 %v4695
      %v5122 = vpop.f32.mrb[0].mxu0
      %v5123 = vadd.f32 %v4978, %v5122
      %v5124 = vpop.f32.mrb[0].mxu0
      %v5125 = vpop.f32.mrb[0].mxu0
      %v5126 = vadd.f32 %v4981, %v5125
      %v5127 = vpop.f32.mrb[0].mxu0
      %5128 = vdwg.mxu0
      %vm5145 = vcmask 1046528
      %v5146 = vrot.slane %v4681, 1
      %v5147 = vrot.slane %v4682, 1
      %v5148 = vsel %vm5145, %v5146, %v5147
      %v5149 = vrot.slane %v4683, 1
      %v5150 = vrot.slane %v4684, 1
      %v5151 = vsel %vm5145, %v5149, %v5150
      %v5152 = vrot.slane %v4685, 1
      %v5153 = vrot.slane %v4686, 1
      %v5154 = vsel %vm5145, %v5152, %v5153
      %v5155 = vrot.slane %v4687, 1
      %v5156 = vrot.slane %v4688, 1
      %v5157 = vsel %vm5145, %v5155, %v5156
      %v5158 = vrot.slane %v4689, 1
      %v5159 = vrot.slane %v4690, 1
      %v5160 = vsel %vm5145, %v5158, %v5159
      %v5161 = vrot.slane %v4691, 1
      %v5162 = vrot.slane %v4692, 1
      %v5163 = vsel %vm5145, %v5161, %v5162
      %v5164 = vrot.slane %v4693, 1
      %v5165 = vrot.slane %v4694, 1
      %v5166 = vsel %vm5145, %v5164, %v5165
      %v5167 = vrot.slane %v4695, 1
      %v5168 = vrot.slane %v4696, 1
      %v5169 = vsel %vm5145, %v5167, %v5168
      %s5178 = scalar_lea.vmem %s3, 128
      %v5179 = vld [vmem:[%s5178] sm:$0xf]
      %v5180 = vld [vmem:[%s5178 + $0x4] sm:$0xf]
      %v5181 = vld [vmem:[%s5178 + $0x8] sm:$0xf]
      %v5182 = vld [vmem:[%s5178 + $0xc] sm:$0xf]
      %v5183 = vld [vmem:[%s5178 + $0x10] sm:$0xf]
      %v5184 = vld [vmem:[%s5178 + $0x14] sm:$0xf]
      %v5185 = vld [vmem:[%s5178 + $0x18] sm:$0xf]
      %v5186 = vld [vmem:[%s5178 + $0x1c] sm:$0xf]
      %v5187 = vld [vmem:[%s5178 + $0x20] sm:$0xf]
      %v5188 = vld [vmem:[%s5178 + $0x24] sm:$0xf]
      %v5189 = vld [vmem:[%s5178 + $0x28] sm:$0xf]
      %v5190 = vld [vmem:[%s5178 + $0x2c] sm:$0xf]
      %v5191 = vld [vmem:[%s5178 + $0x30] sm:$0xf]
      %v5192 = vld [vmem:[%s5178 + $0x34] sm:$0xf]
      %v5193 = vld [vmem:[%s5178 + $0x38] sm:$0xf]
      %v5194 = vld [vmem:[%s5178 + $0x3c] sm:$0xf]
      %v5211 = vunpack.c.l.b16 %v5179
      %v5212 = vunpack.c.l.b16 %v5180
      %v5213 = vunpack.c.l.b16 %v5181
      %v5214 = vunpack.c.l.b16 %v5182
      %v5215 = vunpack.c.l.b16 %v5183
      %v5216 = vunpack.c.l.b16 %v5184
      %v5217 = vunpack.c.l.b16 %v5185
      %v5218 = vunpack.c.l.b16 %v5186
      %v5219 = vunpack.c.l.b16 %v5187
      %v5220 = vunpack.c.l.b16 %v5188
      %v5221 = vunpack.c.l.b16 %v5189
      %v5222 = vunpack.c.l.b16 %v5190
      %v5223 = vunpack.c.l.b16 %v5191
      %v5224 = vunpack.c.l.b16 %v5192
      %v5225 = vunpack.c.l.b16 %v5193
      %v5226 = vunpack.c.l.b16 %v5194
      %v5227 = vpack.c.b16 %v5212, %v5211
      %v5228 = vpack.c.b16 %v5214, %v5213
      %v5229 = vpack.c.b16 %v5216, %v5215
      %v5230 = vpack.c.b16 %v5218, %v5217
      %v5231 = vpack.c.b16 %v5220, %v5219
      %v5232 = vpack.c.b16 %v5222, %v5221
      %v5233 = vpack.c.b16 %v5224, %v5223
      %v5234 = vpack.c.b16 %v5226, %v5225
      %5243 = vmatprep.subr.bf16.mxu0 0
      %5244 = vmatpush1.bf16.msra.mxu0 %v5227
      %5245 = vmatprep.subr.bf16.mxu0 0
      %5246 = vmatpush1.bf16.msra.mxu0 %v5228
      %5247 = vmatprep.subr.bf16.mxu0 0
      %5248 = vmatpush1.bf16.msra.mxu0 %v5229
      %5249 = vmatprep.subr.bf16.mxu0 0
      %5250 = vmatpush1.bf16.msra.mxu0 %v5230
      %5251 = vmatprep.subr.bf16.mxu0 0
      %5252 = vmatpush1.bf16.msra.mxu0 %v5231
      %5253 = vmatprep.subr.bf16.mxu0 0
      %5254 = vmatpush1.bf16.msra.mxu0 %v5232
      %5255 = vmatprep.subr.bf16.mxu0 0
      %5256 = vmatpush1.bf16.msra.mxu0 %v5233
      %5257 = vmatprep.subr.bf16.mxu0 0
      %5258 = vmatpush1.bf16.msra.mxu0 %v5234
      %5259 = vmatprep.subr.bf16.mxu0 0
      %5260 = vmatpush1.bf16.msra.mxu0 0
      %5261 = vmatprep.subr.bf16.mxu0 0
      %5262 = vmatpush1.bf16.msra.mxu0 0
      %5263 = vmatprep.subr.bf16.mxu0 0
      %5264 = vmatpush1.bf16.msra.mxu0 0
      %5265 = vmatprep.subr.bf16.mxu0 0
      %5266 = vmatpush1.bf16.msra.mxu0 0
      %5267 = vmatprep.subr.bf16.mxu0 0
      %5268 = vmatpush1.bf16.msra.mxu0 0
      %5269 = vmatprep.subr.bf16.mxu0 0
      %5270 = vmatpush1.bf16.msra.mxu0 0
      %5271 = vmatprep.subr.bf16.mxu0 0
      %5272 = vmatpush1.bf16.msra.mxu0 0
      %5273 = vmatprep.subr.bf16.mxu0 0
      %5274 = vmatpush1.bf16.msra.mxu0 0
      %5275 = vmatprep.mubr.bf16.mxu0 0
      %5276 = vmatmul.mubr.bf16.gmra.mrb[0].mxu0 %v5148
      %v5277 = vpop.f32.mrb[0].mxu0
      %v5278 = vadd.f32 0.0, %v5277
      %v5279 = vpop.f32.mrb[0].mxu0
      %v5280 = vpop.f32.mrb[0].mxu0
      %v5281 = vadd.f32 0.0, %v5280
      %v5282 = vpop.f32.mrb[0].mxu0
      %5283 = vmatprep.mubr.bf16.mxu0 0
      %5284 = vmatmul.mubr.bf16.gmra.mrb[0].mxu0 %v5151
      %v5285 = vpop.f32.mrb[0].mxu0
      %v5286 = vadd.f32 0.0, %v5285
      %v5287 = vpop.f32.mrb[0].mxu0
      %v5288 = vpop.f32.mrb[0].mxu0
      %v5289 = vadd.f32 0.0, %v5288
      %v5290 = vpop.f32.mrb[0].mxu0
      %5291 = vmatprep.mubr.bf16.mxu0 0
      %5292 = vmatmul.mubr.bf16.gmra.mrb[0].mxu0 %v5154
      %v5293 = vpop.f32.mrb[0].mxu0
      %v5294 = vadd.f32 0.0, %v5293
      %v5295 = vpop.f32.mrb[0].mxu0
      %v5296 = vpop.f32.mrb[0].mxu0
      %v5297 = vadd.f32 0.0, %v5296
      %v5298 = vpop.f32.mrb[0].mxu0
      %5299 = vmatprep.mubr.bf16.mxu0 0
      %5300 = vmatmul.mubr.bf16.gmra.mrb[0].mxu0 %v5157
      %v5301 = vpop.f32.mrb[0].mxu0
      %v5302 = vadd.f32 0.0, %v5301
      %v5303 = vpop.f32.mrb[0].mxu0
      %v5304 = vpop.f32.mrb[0].mxu0
      %v5305 = vadd.f32 0.0, %v5304
      %v5306 = vpop.f32.mrb[0].mxu0
      %5307 = vmatprep.mubr.bf16.mxu0 0
      %5308 = vmatmul.mubr.bf16.gmra.mrb[0].mxu0 %v5160
      %v5309 = vpop.f32.mrb[0].mxu0
      %v5310 = vadd.f32 0.0, %v5309
      %v5311 = vpop.f32.mrb[0].mxu0
      %v5312 = vpop.f32.mrb[0].mxu0
      %v5313 = vadd.f32 0.0, %v5312
      %v5314 = vpop.f32.mrb[0].mxu0
      %5315 = vmatprep.mubr.bf16.mxu0 0
      %5316 = vmatmul.mubr.bf16.gmra.mrb[0].mxu0 %v5163
      %v5317 = vpop.f32.mrb[0].mxu0
      %v5318 = vadd.f32 0.0, %v5317
      %v5319 = vpop.f32.mrb[0].mxu0
      %v5320 = vpop.f32.mrb[0].mxu0
      %v5321 = vadd.f32 0.0, %v5320
      %v5322 = vpop.f32.mrb[0].mxu0
      %5323 = vmatprep.mubr.bf16.mxu0 0
      %5324 = vmatmul.mubr.bf16.gmra.mrb[0].mxu0 %v5166
      %v5325 = vpop.f32.mrb[0].mxu0
      %v5326 = vadd.f32 0.0, %v5325
      %v5327 = vpop.f32.mrb[0].mxu0
      %v5328 = vpop.f32.mrb[0].mxu0
      %v5329 = vadd.f32 0.0, %v5328
      %v5330 = vpop.f32.mrb[0].mxu0
      %5331 = vmatprep.mubr.bf16.mxu0 0
      %5332 = vmatmul.mubr.bf16.gmra.mrb[0].mxu0 %v5169
      %v5333 = vpop.f32.mrb[0].mxu0
      %v5334 = vadd.f32 0.0, %v5333
      %v5335 = vpop.f32.mrb[0].mxu0
      %v5336 = vpop.f32.mrb[0].mxu0
      %v5337 = vadd.f32 0.0, %v5336
      %v5338 = vpop.f32.mrb[0].mxu0
      %5339 = vdwg.mxu0
      %v5340 = vadd.f32 %v5067, %v5278
      %v5341 = vadd.f32 %v5070, %v5281
      %v5342 = vadd.f32 %v5075, %v5286
      %v5343 = vadd.f32 %v5078, %v5289
      %v5344 = vadd.f32 %v5083, %v5294
      %v5345 = vadd.f32 %v5086, %v5297
      %v5346 = vadd.f32 %v5091, %v5302
      %v5347 = vadd.f32 %v5094, %v5305
      %v5348 = vadd.f32 %v5099, %v5310
      %v5349 = vadd.f32 %v5102, %v5313
      %v5350 = vadd.f32 %v5107, %v5318
      %v5351 = vadd.f32 %v5110, %v5321
      %v5352 = vadd.f32 %v5115, %v5326
      %v5353 = vadd.f32 %v5118, %v5329
      %v5354 = vadd.f32 %v5123, %v5334
      %v5355 = vadd.f32 %v5126, %v5337
      %s5356 = scalar_lea.vmem %s3, 192
      %v5357 = vld [vmem:[%s5356] sm:$0xf]
      %v5358 = vld [vmem:[%s5356 + $0x4] sm:$0xf]
      %v5359 = vld [vmem:[%s5356 + $0x8] sm:$0xf]
      %v5360 = vld [vmem:[%s5356 + $0xc] sm:$0xf]
      %v5361 = vld [vmem:[%s5356 + $0x10] sm:$0xf]
      %v5362 = vld [vmem:[%s5356 + $0x14] sm:$0xf]
      %v5363 = vld [vmem:[%s5356 + $0x18] sm:$0xf]
      %v5364 = vld [vmem:[%s5356 + $0x1c] sm:$0xf]
      %v5365 = vld [vmem:[%s5356 + $0x20] sm:$0xf]
      %v5366 = vld [vmem:[%s5356 + $0x24] sm:$0xf]
      %v5367 = vld [vmem:[%s5356 + $0x28] sm:$0xf]
      %v5368 = vld [vmem:[%s5356 + $0x2c] sm:$0xf]
      %v5369 = vld [vmem:[%s5356 + $0x30] sm:$0xf]
      %v5370 = vld [vmem:[%s5356 + $0x34] sm:$0xf]
      %v5371 = vld [vmem:[%s5356 + $0x38] sm:$0xf]
      %v5372 = vld [vmem:[%s5356 + $0x3c] sm:$0xf]
      %v5389 = vunpack.c.l.b16 %v5357
      %v5390 = vunpack.c.l.b16 %v5358
      %v5391 = vunpack.c.l.b16 %v5359
      %v5392 = vunpack.c.l.b16 %v5360
      %v5393 = vunpack.c.l.b16 %v5361
      %v5394 = vunpack.c.l.b16 %v5362
      %v5395 = vunpack.c.l.b16 %v5363
      %v5396 = vunpack.c.l.b16 %v5364
      %v5397 = vunpack.c.l.b16 %v5365
      %v5398 = vunpack.c.l.b16 %v5366
      %v5399 = vunpack.c.l.b16 %v5367
      %v5400 = vunpack.c.l.b16 %v5368
      %v5401 = vunpack.c.l.b16 %v5369
      %v5402 = vunpack.c.l.b16 %v5370
      %v5403 = vunpack.c.l.b16 %v5371
      %v5404 = vunpack.c.l.b16 %v5372
      %v5405 = vpack.c.b16 %v5390, %v5389
      %v5406 = vpack.c.b16 %v5392, %v5391
      %v5407 = vpack.c.b16 %v5394, %v5393
      %v5408 = vpack.c.b16 %v5396, %v5395
      %v5409 = vpack.c.b16 %v5398, %v5397
      %v5410 = vpack.c.b16 %v5400, %v5399
      %v5411 = vpack.c.b16 %v5402, %v5401
      %v5412 = vpack.c.b16 %v5404, %v5403
      %5421 = vmatprep.subr.bf16.mxu0 0
      %5422 = vmatpush1.bf16.msra.mxu0 %v5405
      %5423 = vmatprep.subr.bf16.mxu0 0
      %5424 = vmatpush1.bf16.msra.mxu0 %v5406
      %5425 = vmatprep.subr.bf16.mxu0 0
      %5426 = vmatpush1.bf16.msra.mxu0 %v5407
      %5427 = vmatprep.subr.bf16.mxu0 0
      %5428 = vmatpush1.bf16.msra.mxu0 %v5408
      %5429 = vmatprep.subr.bf16.mxu0 0
      %5430 = vmatpush1.bf16.msra.mxu0 %v5409
      %5431 = vmatprep.subr.bf16.mxu0 0
      %5432 = vmatpush1.bf16.msra.mxu0 %v5410
      %5433 = vmatprep.subr.bf16.mxu0 0
      %5434 = vmatpush1.bf16.msra.mxu0 %v5411
      %5435 = vmatprep.subr.bf16.mxu0 0
      %5436 = vmatpush1.bf16.msra.mxu0 %v5412
      %5437 = vmatprep.subr.bf16.mxu0 0
      %5438 = vmatpush1.bf16.msra.mxu0 0
      %5439 = vmatprep.subr.bf16.mxu0 0
      %5440 = vmatpush1.bf16.msra.mxu0 0
      %5441 = vmatprep.subr.bf16.mxu0 0
      %5442 = vmatpush1.bf16.msra.mxu0 0
      %5443 = vmatprep.subr.bf16.mxu0 0
      %5444 = vmatpush1.bf16.msra.mxu0 0
      %5445 = vmatprep.subr.bf16.mxu0 0
      %5446 = vmatpush1.bf16.msra.mxu0 0
      %5447 = vmatprep.subr.bf16.mxu0 0
      %5448 = vmatpush1.bf16.msra.mxu0 0
      %5449 = vmatprep.subr.bf16.mxu0 0
      %5450 = vmatpush1.bf16.msra.mxu0 0
      %5451 = vmatprep.subr.bf16.mxu0 0
      %5452 = vmatpush1.bf16.msra.mxu0 0
      %5453 = vmatprep.mubr.bf16.mxu0 0
      %5454 = vmatmul.mubr.bf16.gmra.mrb[0].mxu0 %v4683
      %v5455 = vpop.f32.mrb[0].mxu0
      %v5456 = vadd.f32 0.0, %v5455
      %v5457 = vpop.f32.mrb[0].mxu0
      %v5458 = vpop.f32.mrb[0].mxu0
      %v5459 = vadd.f32 0.0, %v5458
      %v5460 = vpop.f32.mrb[0].mxu0
      %5461 = vmatprep.mubr.bf16.mxu0 0
      %5462 = vmatmul.mubr.bf16.gmra.mrb[0].mxu0 %v4685
      %v5463 = vpop.f32.mrb[0].mxu0
      %v5464 = vadd.f32 0.0, %v5463
      %v5465 = vpop.f32.mrb[0].mxu0
      %v5466 = vpop.f32.mrb[0].mxu0
      %v5467 = vadd.f32 0.0, %v5466
      %v5468 = vpop.f32.mrb[0].mxu0
      %5469 = vmatprep.mubr.bf16.mxu0 0
      %5470 = vmatmul.mubr.bf16.gmra.mrb[0].mxu0 %v4687
      %v5471 = vpop.f32.mrb[0].mxu0
      %v5472 = vadd.f32 0.0, %v5471
      %v5473 = vpop.f32.mrb[0].mxu0
      %v5474 = vpop.f32.mrb[0].mxu0
      %v5475 = vadd.f32 0.0, %v5474
      %v5476 = vpop.f32.mrb[0].mxu0
      %5477 = vmatprep.mubr.bf16.mxu0 0
      %5478 = vmatmul.mubr.bf16.gmra.mrb[0].mxu0 %v4689
      %v5479 = vpop.f32.mrb[0].mxu0
      %v5480 = vadd.f32 0.0, %v5479
      %v5481 = vpop.f32.mrb[0].mxu0
      %v5482 = vpop.f32.mrb[0].mxu0
      %v5483 = vadd.f32 0.0, %v5482
      %v5484 = vpop.f32.mrb[0].mxu0
      %5485 = vmatprep.mubr.bf16.mxu0 0
      %5486 = vmatmul.mubr.bf16.gmra.mrb[0].mxu0 %v4691
      %v5487 = vpop.f32.mrb[0].mxu0
      %v5488 = vadd.f32 0.0, %v5487
      %v5489 = vpop.f32.mrb[0].mxu0
      %v5490 = vpop.f32.mrb[0].mxu0
      %v5491 = vadd.f32 0.0, %v5490
      %v5492 = vpop.f32.mrb[0].mxu0
      %5493 = vmatprep.mubr.bf16.mxu0 0
      %5494 = vmatmul.mubr.bf16.gmra.mrb[0].mxu0 %v4693
      %v5495 = vpop.f32.mrb[0].mxu0
      %v5496 = vadd.f32 0.0, %v5495
      %v5497 = vpop.f32.mrb[0].mxu0
      %v5498 = vpop.f32.mrb[0].mxu0
      %v5499 = vadd.f32 0.0, %v5498
      %v5500 = vpop.f32.mrb[0].mxu0
      %5501 = vmatprep.mubr.bf16.mxu0 0
      %5502 = vmatmul.mubr.bf16.gmra.mrb[0].mxu0 %v4695
      %v5503 = vpop.f32.mrb[0].mxu0
      %v5504 = vadd.f32 0.0, %v5503
      %v5505 = vpop.f32.mrb[0].mxu0
      %v5506 = vpop.f32.mrb[0].mxu0
      %v5507 = vadd.f32 0.0, %v5506
      %v5508 = vpop.f32.mrb[0].mxu0
      %5509 = vmatprep.mubr.bf16.mxu0 0
      %5510 = vmatmul.mubr.bf16.gmra.mrb[0].mxu0 %v4697
      %v5511 = vpop.f32.mrb[0].mxu0
      %v5512 = vadd.f32 0.0, %v5511
      %v5513 = vpop.f32.mrb[0].mxu0
      %v5514 = vpop.f32.mrb[0].mxu0
      %v5515 = vadd.f32 0.0, %v5514
      %v5516 = vpop.f32.mrb[0].mxu0
      %5517 = vdwg.mxu0
      %v5518 = vadd.f32 %v5340, %v5456
      %v5519 = vadd.f32 %v5341, %v5459
      %v5520 = vadd.f32 %v5342, %v5464
      %v5521 = vadd.f32 %v5343, %v5467
      %v5522 = vadd.f32 %v5344, %v5472
      %v5523 = vadd.f32 %v5345, %v5475
      %v5524 = vadd.f32 %v5346, %v5480
      %v5525 = vadd.f32 %v5347, %v5483
      %v5526 = vadd.f32 %v5348, %v5488
      %v5527 = vadd.f32 %v5349, %v5491
      %v5528 = vadd.f32 %v5350, %v5496
      %v5529 = vadd.f32 %v5351, %v5499
      %v5530 = vadd.f32 %v5352, %v5504
      %v5531 = vadd.f32 %v5353, %v5507
      %v5532 = vadd.f32 %v5354, %v5512
      %v5533 = vadd.f32 %v5355, %v5515
      %v5535 = vshrl.u32 %v4697, 16
      %v5537 = vshll.u32 %v4697, 16
      %v5539 = vrot.slane %v5537, 1
      %v5540 = vor.u32 %v5535, %v5539
      %v5542 = vshll.u32 %v4698, 16
      %v5544 = vrot.slane %v5542, 1
      %v5545 = vsel %vm4717, %v5540, %v5544
      %s5547 = scalar_lea.vmem %s3, 256
      %v5548 = vld [vmem:[%s5547] sm:$0xf]
      %v5549 = vld [vmem:[%s5547 + $0x4] sm:$0xf]
      %v5550 = vld [vmem:[%s5547 + $0x8] sm:$0xf]
      %v5551 = vld [vmem:[%s5547 + $0xc] sm:$0xf]
      %v5552 = vld [vmem:[%s5547 + $0x10] sm:$0xf]
      %v5553 = vld [vmem:[%s5547 + $0x14] sm:$0xf]
      %v5554 = vld [vmem:[%s5547 + $0x18] sm:$0xf]
      %v5555 = vld [vmem:[%s5547 + $0x1c] sm:$0xf]
      %v5556 = vld [vmem:[%s5547 + $0x20] sm:$0xf]
      %v5557 = vld [vmem:[%s5547 + $0x24] sm:$0xf]
      %v5558 = vld [vmem:[%s5547 + $0x28] sm:$0xf]
      %v5559 = vld [vmem:[%s5547 + $0x2c] sm:$0xf]
      %v5560 = vld [vmem:[%s5547 + $0x30] sm:$0xf]
      %v5561 = vld [vmem:[%s5547 + $0x34] sm:$0xf]
      %v5562 = vld [vmem:[%s5547 + $0x38] sm:$0xf]
      %v5563 = vld [vmem:[%s5547 + $0x3c] sm:$0xf]
      %v5580 = vunpack.c.l.b16 %v5548
      %v5581 = vunpack.c.l.b16 %v5549
      %v5582 = vunpack.c.l.b16 %v5550
      %v5583 = vunpack.c.l.b16 %v5551
      %v5584 = vunpack.c.l.b16 %v5552
      %v5585 = vunpack.c.l.b16 %v5553
      %v5586 = vunpack.c.l.b16 %v5554
      %v5587 = vunpack.c.l.b16 %v5555
      %v5588 = vunpack.c.l.b16 %v5556
      %v5589 = vunpack.c.l.b16 %v5557
      %v5590 = vunpack.c.l.b16 %v5558
      %v5591 = vunpack.c.l.b16 %v5559
      %v5592 = vunpack.c.l.b16 %v5560
      %v5593 = vunpack.c.l.b16 %v5561
      %v5594 = vunpack.c.l.b16 %v5562
      %v5595 = vunpack.c.l.b16 %v5563
      %v5596 = vpack.c.b16 %v5581, %v5580
      %v5597 = vpack.c.b16 %v5583, %v5582
      %v5598 = vpack.c.b16 %v5585, %v5584
      %v5599 = vpack.c.b16 %v5587, %v5586
      %v5600 = vpack.c.b16 %v5589, %v5588
      %v5601 = vpack.c.b16 %v5591, %v5590
      %v5602 = vpack.c.b16 %v5593, %v5592
      %v5603 = vpack.c.b16 %v5595, %v5594
      %5612 = vmatprep.subr.bf16.mxu0 0
      %5613 = vmatpush1.bf16.msra.mxu0 %v5596
      %5614 = vmatprep.subr.bf16.mxu0 0
      %5615 = vmatpush1.bf16.msra.mxu0 %v5597
      %5616 = vmatprep.subr.bf16.mxu0 0
      %5617 = vmatpush1.bf16.msra.mxu0 %v5598
      %5618 = vmatprep.subr.bf16.mxu0 0
      %5619 = vmatpush1.bf16.msra.mxu0 %v5599
      %5620 = vmatprep.subr.bf16.mxu0 0
      %5621 = vmatpush1.bf16.msra.mxu0 %v5600
      %5622 = vmatprep.subr.bf16.mxu0 0
      %5623 = vmatpush1.bf16.msra.mxu0 %v5601
      %5624 = vmatprep.subr.bf16.mxu0 0
      %5625 = vmatpush1.bf16.msra.mxu0 %v5602
      %5626 = vmatprep.subr.bf16.mxu0 0
      %5627 = vmatpush1.bf16.msra.mxu0 %v5603
      %5628 = vmatprep.subr.bf16.mxu0 0
      %5629 = vmatpush1.bf16.msra.mxu0 0
      %5630 = vmatprep.subr.bf16.mxu0 0
      %5631 = vmatpush1.bf16.msra.mxu0 0
      %5632 = vmatprep.subr.bf16.mxu0 0
      %5633 = vmatpush1.bf16.msra.mxu0 0
      %5634 = vmatprep.subr.bf16.mxu0 0
      %5635 = vmatpush1.bf16.msra.mxu0 0
      %5636 = vmatprep.subr.bf16.mxu0 0
      %5637 = vmatpush1.bf16.msra.mxu0 0
      %5638 = vmatprep.subr.bf16.mxu0 0
      %5639 = vmatpush1.bf16.msra.mxu0 0
      %5640 = vmatprep.subr.bf16.mxu0 0
      %5641 = vmatpush1.bf16.msra.mxu0 0
      %5642 = vmatprep.subr.bf16.mxu0 0
      %5643 = vmatpush1.bf16.msra.mxu0 0
      %5644 = vmatprep.mubr.bf16.mxu0 0
      %5645 = vmatmul.mubr.bf16.gmra.mrb[0].mxu0 %v4741
      %v5646 = vpop.f32.mrb[0].mxu0
      %v5647 = vadd.f32 0.0, %v5646
      %v5648 = vpop.f32.mrb[0].mxu0
      %v5649 = vpop.f32.mrb[0].mxu0
      %v5650 = vadd.f32 0.0, %v5649
      %v5651 = vpop.f32.mrb[0].mxu0
      %5652 = vmatprep.mubr.bf16.mxu0 0
      %5653 = vmatmul.mubr.bf16.gmra.mrb[0].mxu0 %v4753
      %v5654 = vpop.f32.mrb[0].mxu0
      %v5655 = vadd.f32 0.0, %v5654
      %v5656 = vpop.f32.mrb[0].mxu0
      %v5657 = vpop.f32.mrb[0].mxu0
      %v5658 = vadd.f32 0.0, %v5657
      %v5659 = vpop.f32.mrb[0].mxu0
      %5660 = vmatprep.mubr.bf16.mxu0 0
      %5661 = vmatmul.mubr.bf16.gmra.mrb[0].mxu0 %v4765
      %v5662 = vpop.f32.mrb[0].mxu0
      %v5663 = vadd.f32 0.0, %v5662
      %v5664 = vpop.f32.mrb[0].mxu0
      %v5665 = vpop.f32.mrb[0].mxu0
      %v5666 = vadd.f32 0.0, %v5665
      %v5667 = vpop.f32.mrb[0].mxu0
      %5668 = vmatprep.mubr.bf16.mxu0 0
      %5669 = vmatmul.mubr.bf16.gmra.mrb[0].mxu0 %v4777
      %v5670 = vpop.f32.mrb[0].mxu0
      %v5671 = vadd.f32 0.0, %v5670
      %v5672 = vpop.f32.mrb[0].mxu0
      %v5673 = vpop.f32.mrb[0].mxu0
      %v5674 = vadd.f32 0.0, %v5673
      %v5675 = vpop.f32.mrb[0].mxu0
      %5676 = vmatprep.mubr.bf16.mxu0 0
      %5677 = vmatmul.mubr.bf16.gmra.mrb[0].mxu0 %v4789
      %v5678 = vpop.f32.mrb[0].mxu0
      %v5679 = vadd.f32 0.0, %v5678
      %v5680 = vpop.f32.mrb[0].mxu0
      %v5681 = vpop.f32.mrb[0].mxu0
      %v5682 = vadd.f32 0.0, %v5681
      %v5683 = vpop.f32.mrb[0].mxu0
      %5684 = vmatprep.mubr.bf16.mxu0 0
      %5685 = vmatmul.mubr.bf16.gmra.mrb[0].mxu0 %v4801
      %v5686 = vpop.f32.mrb[0].mxu0
      %v5687 = vadd.f32 0.0, %v5686
      %v5688 = vpop.f32.mrb[0].mxu0
      %v5689 = vpop.f32.mrb[0].mxu0
      %v5690 = vadd.f32 0.0, %v5689
      %v5691 = vpop.f32.mrb[0].mxu0
      %5692 = vmatprep.mubr.bf16.mxu0 0
      %5693 = vmatmul.mubr.bf16.gmra.mrb[0].mxu0 %v4813
      %v5694 = vpop.f32.mrb[0].mxu0
      %v5695 = vadd.f32 0.0, %v5694
      %v5696 = vpop.f32.mrb[0].mxu0
      %v5697 = vpop.f32.mrb[0].mxu0
      %v5698 = vadd.f32 0.0, %v5697
      %v5699 = vpop.f32.mrb[0].mxu0
      %5700 = vmatprep.mubr.bf16.mxu0 0
      %5701 = vmatmul.mubr.bf16.gmra.mrb[0].mxu0 %v5545
      %v5702 = vpop.f32.mrb[0].mxu0
      %v5703 = vadd.f32 0.0, %v5702
      %v5704 = vpop.f32.mrb[0].mxu0
      %v5705 = vpop.f32.mrb[0].mxu0
      %v5706 = vadd.f32 0.0, %v5705
      %v5707 = vpop.f32.mrb[0].mxu0
      %5708 = vdwg.mxu0
      %v5709 = vadd.f32 %v5518, %v5647
      %v5710 = vadd.f32 %v5519, %v5650
      %v5711 = vadd.f32 %v5520, %v5655
      %v5712 = vadd.f32 %v5521, %v5658
      %v5713 = vadd.f32 %v5522, %v5663
      %v5714 = vadd.f32 %v5523, %v5666
      %v5715 = vadd.f32 %v5524, %v5671
      %v5716 = vadd.f32 %v5525, %v5674
      %v5717 = vadd.f32 %v5526, %v5679
      %v5718 = vadd.f32 %v5527, %v5682
      %v5719 = vadd.f32 %v5528, %v5687
      %v5720 = vadd.f32 %v5529, %v5690
      %v5721 = vadd.f32 %v5530, %v5695
      %v5722 = vadd.f32 %v5531, %v5698
      %v5723 = vadd.f32 %v5532, %v5703
      %v5724 = vadd.f32 %v5533, %v5706
      %v5727 = vrot.slane %v4697, 1
      %v5728 = vrot.slane %v4698, 1
      %v5729 = vsel %vm5145, %v5727, %v5728
      %s5731 = scalar_lea.vmem %s3, 320
      %v5732 = vld [vmem:[%s5731] sm:$0xf]
      %v5733 = vld [vmem:[%s5731 + $0x4] sm:$0xf]
      %v5734 = vld [vmem:[%s5731 + $0x8] sm:$0xf]
      %v5735 = vld [vmem:[%s5731 + $0xc] sm:$0xf]
      %v5736 = vld [vmem:[%s5731 + $0x10] sm:$0xf]
      %v5737 = vld [vmem:[%s5731 + $0x14] sm:$0xf]
      %v5738 = vld [vmem:[%s5731 + $0x18] sm:$0xf]
      %v5739 = vld [vmem:[%s5731 + $0x1c] sm:$0xf]
      %v5740 = vld [vmem:[%s5731 + $0x20] sm:$0xf]
      %v5741 = vld [vmem:[%s5731 + $0x24] sm:$0xf]
      %v5742 = vld [vmem:[%s5731 + $0x28] sm:$0xf]
      %v5743 = vld [vmem:[%s5731 + $0x2c] sm:$0xf]
      %v5744 = vld [vmem:[%s5731 + $0x30] sm:$0xf]
      %v5745 = vld [vmem:[%s5731 + $0x34] sm:$0xf]
      %v5746 = vld [vmem:[%s5731 + $0x38] sm:$0xf]
      %v5747 = vld [vmem:[%s5731 + $0x3c] sm:$0xf]
      %v5764 = vunpack.c.l.b16 %v5732
      %v5765 = vunpack.c.l.b16 %v5733
      %v5766 = vunpack.c.l.b16 %v5734
      %v5767 = vunpack.c.l.b16 %v5735
      %v5768 = vunpack.c.l.b16 %v5736
      %v5769 = vunpack.c.l.b16 %v5737
      %v5770 = vunpack.c.l.b16 %v5738
      %v5771 = vunpack.c.l.b16 %v5739
      %v5772 = vunpack.c.l.b16 %v5740
      %v5773 = vunpack.c.l.b16 %v5741
      %v5774 = vunpack.c.l.b16 %v5742
      %v5775 = vunpack.c.l.b16 %v5743
      %v5776 = vunpack.c.l.b16 %v5744
      %v5777 = vunpack.c.l.b16 %v5745
      %v5778 = vunpack.c.l.b16 %v5746
      %v5779 = vunpack.c.l.b16 %v5747
      %v5780 = vpack.c.b16 %v5765, %v5764
      %v5781 = vpack.c.b16 %v5767, %v5766
      %v5782 = vpack.c.b16 %v5769, %v5768
      %v5783 = vpack.c.b16 %v5771, %v5770
      %v5784 = vpack.c.b16 %v5773, %v5772
      %v5785 = vpack.c.b16 %v5775, %v5774
      %v5786 = vpack.c.b16 %v5777, %v5776
      %v5787 = vpack.c.b16 %v5779, %v5778
      %5796 = vmatprep.subr.bf16.mxu0 0
      %5797 = vmatpush1.bf16.msra.mxu0 %v5780
      %5798 = vmatprep.subr.bf16.mxu0 0
      %5799 = vmatpush1.bf16.msra.mxu0 %v5781
      %5800 = vmatprep.subr.bf16.mxu0 0
      %5801 = vmatpush1.bf16.msra.mxu0 %v5782
      %5802 = vmatprep.subr.bf16.mxu0 0
      %5803 = vmatpush1.bf16.msra.mxu0 %v5783
      %5804 = vmatprep.subr.bf16.mxu0 0
      %5805 = vmatpush1.bf16.msra.mxu0 %v5784
      %5806 = vmatprep.subr.bf16.mxu0 0
      %5807 = vmatpush1.bf16.msra.mxu0 %v5785
      %5808 = vmatprep.subr.bf16.mxu0 0
      %5809 = vmatpush1.bf16.msra.mxu0 %v5786
      %5810 = vmatprep.subr.bf16.mxu0 0
      %5811 = vmatpush1.bf16.msra.mxu0 %v5787
      %5812 = vmatprep.subr.bf16.mxu0 0
      %5813 = vmatpush1.bf16.msra.mxu0 0
      %5814 = vmatprep.subr.bf16.mxu0 0
      %5815 = vmatpush1.bf16.msra.mxu0 0
      %5816 = vmatprep.subr.bf16.mxu0 0
      %5817 = vmatpush1.bf16.msra.mxu0 0
      %5818 = vmatprep.subr.bf16.mxu0 0
      %5819 = vmatpush1.bf16.msra.mxu0 0
      %5820 = vmatprep.subr.bf16.mxu0 0
      %5821 = vmatpush1.bf16.msra.mxu0 0
      %5822 = vmatprep.subr.bf16.mxu0 0
      %5823 = vmatpush1.bf16.msra.mxu0 0
      %5824 = vmatprep.subr.bf16.mxu0 0
      %5825 = vmatpush1.bf16.msra.mxu0 0
      %5826 = vmatprep.subr.bf16.mxu0 0
      %5827 = vmatpush1.bf16.msra.mxu0 0
      %5828 = vmatprep.mubr.bf16.mxu0 0
      %5829 = vmatmul.mubr.bf16.gmra.mrb[0].mxu0 %v5151
      %v5830 = vpop.f32.mrb[0].mxu0
      %v5831 = vadd.f32 0.0, %v5830
      %v5832 = vpop.f32.mrb[0].mxu0
      %v5833 = vpop.f32.mrb[0].mxu0
      %v5834 = vadd.f32 0.0, %v5833
      %v5835 = vpop.f32.mrb[0].mxu0
      %5836 = vmatprep.mubr.bf16.mxu0 0
      %5837 = vmatmul.mubr.bf16.gmra.mrb[0].mxu0 %v5154
      %v5838 = vpop.f32.mrb[0].mxu0
      %v5839 = vadd.f32 0.0, %v5838
      %v5840 = vpop.f32.mrb[0].mxu0
      %v5841 = vpop.f32.mrb[0].mxu0
      %v5842 = vadd.f32 0.0, %v5841
      %v5843 = vpop.f32.mrb[0].mxu0
      %5844 = vmatprep.mubr.bf16.mxu0 0
      %5845 = vmatmul.mubr.bf16.gmra.mrb[0].mxu0 %v5157
      %v5846 = vpop.f32.mrb[0].mxu0
      %v5847 = vadd.f32 0.0, %v5846
      %v5848 = vpop.f32.mrb[0].mxu0
      %v5849 = vpop.f32.mrb[0].mxu0
      %v5850 = vadd.f32 0.0, %v5849
      %v5851 = vpop.f32.mrb[0].mxu0
      %5852 = vmatprep.mubr.bf16.mxu0 0
      %5853 = vmatmul.mubr.bf16.gmra.mrb[0].mxu0 %v5160
      %v5854 = vpop.f32.mrb[0].mxu0
      %v5855 = vadd.f32 0.0, %v5854
      %v5856 = vpop.f32.mrb[0].mxu0
      %v5857 = vpop.f32.mrb[0].mxu0
      %v5858 = vadd.f32 0.0, %v5857
      %v5859 = vpop.f32.mrb[0].mxu0
      %5860 = vmatprep.mubr.bf16.mxu0 0
      %5861 = vmatmul.mubr.bf16.gmra.mrb[0].mxu0 %v5163
      %v5862 = vpop.f32.mrb[0].mxu0
      %v5863 = vadd.f32 0.0, %v5862
      %v5864 = vpop.f32.mrb[0].mxu0
      %v5865 = vpop.f32.mrb[0].mxu0
      %v5866 = vadd.f32 0.0, %v5865
      %v5867 = vpop.f32.mrb[0].mxu0
      %5868 = vmatprep.mubr.bf16.mxu0 0
      %5869 = vmatmul.mubr.bf16.gmra.mrb[0].mxu0 %v5166
      %v5870 = vpop.f32.mrb[0].mxu0
      %v5871 = vadd.f32 0.0, %v5870
      %v5872 = vpop.f32.mrb[0].mxu0
      %v5873 = vpop.f32.mrb[0].mxu0
      %v5874 = vadd.f32 0.0, %v5873
      %v5875 = vpop.f32.mrb[0].mxu0
      %5876 = vmatprep.mubr.bf16.mxu0 0
      %5877 = vmatmul.mubr.bf16.gmra.mrb[0].mxu0 %v5169
      %v5878 = vpop.f32.mrb[0].mxu0
      %v5879 = vadd.f32 0.0, %v5878
      %v5880 = vpop.f32.mrb[0].mxu0
      %v5881 = vpop.f32.mrb[0].mxu0
      %v5882 = vadd.f32 0.0, %v5881
      %v5883 = vpop.f32.mrb[0].mxu0
      %5884 = vmatprep.mubr.bf16.mxu0 0
      %5885 = vmatmul.mubr.bf16.gmra.mrb[0].mxu0 %v5729
      %v5886 = vpop.f32.mrb[0].mxu0
      %v5887 = vadd.f32 0.0, %v5886
      %v5888 = vpop.f32.mrb[0].mxu0
      %v5889 = vpop.f32.mrb[0].mxu0
      %v5890 = vadd.f32 0.0, %v5889
      %v5891 = vpop.f32.mrb[0].mxu0
      %5892 = vdwg.mxu0
      %v5893 = vadd.f32 %v5709, %v5831
      %v5894 = vadd.f32 %v5710, %v5834
      %v5895 = vadd.f32 %v5711, %v5839
      %v5896 = vadd.f32 %v5712, %v5842
      %v5897 = vadd.f32 %v5713, %v5847
      %v5898 = vadd.f32 %v5714, %v5850
      %v5899 = vadd.f32 %v5715, %v5855
      %v5900 = vadd.f32 %v5716, %v5858
      %v5901 = vadd.f32 %v5717, %v5863
      %v5902 = vadd.f32 %v5718, %v5866
      %v5903 = vadd.f32 %v5719, %v5871
      %v5904 = vadd.f32 %v5720, %v5874
      %v5905 = vadd.f32 %v5721, %v5879
      %v5906 = vadd.f32 %v5722, %v5882
      %v5907 = vadd.f32 %v5723, %v5887
      %v5908 = vadd.f32 %v5724, %v5890
      %s5909 = scalar_lea.vmem %s3, 384
      %v5910 = vld [vmem:[%s5909] sm:$0xf]
      %v5911 = vld [vmem:[%s5909 + $0x4] sm:$0xf]
      %v5912 = vld [vmem:[%s5909 + $0x8] sm:$0xf]
      %v5913 = vld [vmem:[%s5909 + $0xc] sm:$0xf]
      %v5914 = vld [vmem:[%s5909 + $0x10] sm:$0xf]
      %v5915 = vld [vmem:[%s5909 + $0x14] sm:$0xf]
      %v5916 = vld [vmem:[%s5909 + $0x18] sm:$0xf]
      %v5917 = vld [vmem:[%s5909 + $0x1c] sm:$0xf]
      %v5918 = vld [vmem:[%s5909 + $0x20] sm:$0xf]
      %v5919 = vld [vmem:[%s5909 + $0x24] sm:$0xf]
      %v5920 = vld [vmem:[%s5909 + $0x28] sm:$0xf]
      %v5921 = vld [vmem:[%s5909 + $0x2c] sm:$0xf]
      %v5922 = vld [vmem:[%s5909 + $0x30] sm:$0xf]
      %v5923 = vld [vmem:[%s5909 + $0x34] sm:$0xf]
      %v5924 = vld [vmem:[%s5909 + $0x38] sm:$0xf]
      %v5925 = vld [vmem:[%s5909 + $0x3c] sm:$0xf]
      %v5942 = vunpack.c.l.b16 %v5910
      %v5943 = vunpack.c.l.b16 %v5911
      %v5944 = vunpack.c.l.b16 %v5912
      %v5945 = vunpack.c.l.b16 %v5913
      %v5946 = vunpack.c.l.b16 %v5914
      %v5947 = vunpack.c.l.b16 %v5915
      %v5948 = vunpack.c.l.b16 %v5916
      %v5949 = vunpack.c.l.b16 %v5917
      %v5950 = vunpack.c.l.b16 %v5918
      %v5951 = vunpack.c.l.b16 %v5919
      %v5952 = vunpack.c.l.b16 %v5920
      %v5953 = vunpack.c.l.b16 %v5921
      %v5954 = vunpack.c.l.b16 %v5922
      %v5955 = vunpack.c.l.b16 %v5923
      %v5956 = vunpack.c.l.b16 %v5924
      %v5957 = vunpack.c.l.b16 %v5925
      %v5958 = vpack.c.b16 %v5943, %v5942
      %v5959 = vpack.c.b16 %v5945, %v5944
      %v5960 = vpack.c.b16 %v5947, %v5946
      %v5961 = vpack.c.b16 %v5949, %v5948
      %v5962 = vpack.c.b16 %v5951, %v5950
      %v5963 = vpack.c.b16 %v5953, %v5952
      %v5964 = vpack.c.b16 %v5955, %v5954
      %v5965 = vpack.c.b16 %v5957, %v5956
      %5974 = vmatprep.subr.bf16.mxu0 0
      %5975 = vmatpush1.bf16.msra.mxu0 %v5958
      %5976 = vmatprep.subr.bf16.mxu0 0
      %5977 = vmatpush1.bf16.msra.mxu0 %v5959
      %5978 = vmatprep.subr.bf16.mxu0 0
      %5979 = vmatpush1.bf16.msra.mxu0 %v5960
      %5980 = vmatprep.subr.bf16.mxu0 0
      %5981 = vmatpush1.bf16.msra.mxu0 %v5961
      %5982 = vmatprep.subr.bf16.mxu0 0
      %5983 = vmatpush1.bf16.msra.mxu0 %v5962
      %5984 = vmatprep.subr.bf16.mxu0 0
      %5985 = vmatpush1.bf16.msra.mxu0 %v5963
      %5986 = vmatprep.subr.bf16.mxu0 0
      %5987 = vmatpush1.bf16.msra.mxu0 %v5964
      %5988 = vmatprep.subr.bf16.mxu0 0
      %5989 = vmatpush1.bf16.msra.mxu0 %v5965
      %5990 = vmatprep.subr.bf16.mxu0 0
      %5991 = vmatpush1.bf16.msra.mxu0 0
      %5992 = vmatprep.subr.bf16.mxu0 0
      %5993 = vmatpush1.bf16.msra.mxu0 0
      %5994 = vmatprep.subr.bf16.mxu0 0
      %5995 = vmatpush1.bf16.msra.mxu0 0
      %5996 = vmatprep.subr.bf16.mxu0 0
      %5997 = vmatpush1.bf16.msra.mxu0 0
      %5998 = vmatprep.subr.bf16.mxu0 0
      %5999 = vmatpush1.bf16.msra.mxu0 0
      %6000 = vmatprep.subr.bf16.mxu0 0
      %6001 = vmatpush1.bf16.msra.mxu0 0
      %6002 = vmatprep.subr.bf16.mxu0 0
      %6003 = vmatpush1.bf16.msra.mxu0 0
      %6004 = vmatprep.subr.bf16.mxu0 0
      %6005 = vmatpush1.bf16.msra.mxu0 0
      %6006 = vmatprep.mubr.bf16.mxu0 0
      %6007 = vmatmul.mubr.bf16.gmra.mrb[0].mxu0 %v4685
      %v6008 = vpop.f32.mrb[0].mxu0
      %v6009 = vadd.f32 0.0, %v6008
      %v6010 = vpop.f32.mrb[0].mxu0
      %v6011 = vpop.f32.mrb[0].mxu0
      %v6012 = vadd.f32 0.0, %v6011
      %v6013 = vpop.f32.mrb[0].mxu0
      %6014 = vmatprep.mubr.bf16.mxu0 0
      %6015 = vmatmul.mubr.bf16.gmra.mrb[0].mxu0 %v4687
      %v6016 = vpop.f32.mrb[0].mxu0
      %v6017 = vadd.f32 0.0, %v6016
      %v6018 = vpop.f32.mrb[0].mxu0
      %v6019 = vpop.f32.mrb[0].mxu0
      %v6020 = vadd.f32 0.0, %v6019
      %v6021 = vpop.f32.mrb[0].mxu0
      %6022 = vmatprep.mubr.bf16.mxu0 0
      %6023 = vmatmul.mubr.bf16.gmra.mrb[0].mxu0 %v4689
      %v6024 = vpop.f32.mrb[0].mxu0
      %v6025 = vadd.f32 0.0, %v6024
      %v6026 = vpop.f32.mrb[0].mxu0
      %v6027 = vpop.f32.mrb[0].mxu0
      %v6028 = vadd.f32 0.0, %v6027
      %v6029 = vpop.f32.mrb[0].mxu0
      %6030 = vmatprep.mubr.bf16.mxu0 0
      %6031 = vmatmul.mubr.bf16.gmra.mrb[0].mxu0 %v4691
      %v6032 = vpop.f32.mrb[0].mxu0
      %v6033 = vadd.f32 0.0, %v6032
      %v6034 = vpop.f32.mrb[0].mxu0
      %v6035 = vpop.f32.mrb[0].mxu0
      %v6036 = vadd.f32 0.0, %v6035
      %v6037 = vpop.f32.mrb[0].mxu0
      %6038 = vmatprep.mubr.bf16.mxu0 0
      %6039 = vmatmul.mubr.bf16.gmra.mrb[0].mxu0 %v4693
      %v6040 = vpop.f32.mrb[0].mxu0
      %v6041 = vadd.f32 0.0, %v6040
      %v6042 = vpop.f32.mrb[0].mxu0
      %v6043 = vpop.f32.mrb[0].mxu0
      %v6044 = vadd.f32 0.0, %v6043
      %v6045 = vpop.f32.mrb[0].mxu0
      %6046 = vmatprep.mubr.bf16.mxu0 0
      %6047 = vmatmul.mubr.bf16.gmra.mrb[0].mxu0 %v4695
      %v6048 = vpop.f32.mrb[0].mxu0
      %v6049 = vadd.f32 0.0, %v6048
      %v6050 = vpop.f32.mrb[0].mxu0
      %v6051 = vpop.f32.mrb[0].mxu0
      %v6052 = vadd.f32 0.0, %v6051
      %v6053 = vpop.f32.mrb[0].mxu0
      %6054 = vmatprep.mubr.bf16.mxu0 0
      %6055 = vmatmul.mubr.bf16.gmra.mrb[0].mxu0 %v4697
      %v6056 = vpop.f32.mrb[0].mxu0
      %v6057 = vadd.f32 0.0, %v6056
      %v6058 = vpop.f32.mrb[0].mxu0
      %v6059 = vpop.f32.mrb[0].mxu0
      %v6060 = vadd.f32 0.0, %v6059
      %v6061 = vpop.f32.mrb[0].mxu0
      %6062 = vmatprep.mubr.bf16.mxu0 0
      %6063 = vmatmul.mubr.bf16.gmra.mrb[0].mxu0 %v4699
      %v6064 = vpop.f32.mrb[0].mxu0
      %v6065 = vadd.f32 0.0, %v6064
      %v6066 = vpop.f32.mrb[0].mxu0
      %v6067 = vpop.f32.mrb[0].mxu0
      %v6068 = vadd.f32 0.0, %v6067
      %v6069 = vpop.f32.mrb[0].mxu0
      %6070 = vdwg.mxu0
      %v6071 = vadd.f32 %v5893, %v6009
      %v6072 = vadd.f32 %v5894, %v6012
      %v6073 = vadd.f32 %v5895, %v6017
      %v6074 = vadd.f32 %v5896, %v6020
      %v6075 = vadd.f32 %v5897, %v6025
      %v6076 = vadd.f32 %v5898, %v6028
      %v6077 = vadd.f32 %v5899, %v6033
      %v6078 = vadd.f32 %v5900, %v6036
      %v6079 = vadd.f32 %v5901, %v6041
      %v6080 = vadd.f32 %v5902, %v6044
      %v6081 = vadd.f32 %v5903, %v6049
      %v6082 = vadd.f32 %v5904, %v6052
      %v6083 = vadd.f32 %v5905, %v6057
      %v6084 = vadd.f32 %v5906, %v6060
      %v6085 = vadd.f32 %v5907, %v6065
      %v6086 = vadd.f32 %v5908, %v6068
      %v6088 = vshrl.u32 %v4699, 16
      %v6090 = vshll.u32 %v4699, 16
      %v6092 = vrot.slane %v6090, 1
      %v6093 = vor.u32 %v6088, %v6092
      %v6095 = vshll.u32 %v4700, 16
      %v6097 = vrot.slane %v6095, 1
      %v6098 = vsel %vm4717, %v6093, %v6097
      %s6100 = scalar_lea.vmem %s3, 448
      %v6101 = vld [vmem:[%s6100] sm:$0xf]
      %v6102 = vld [vmem:[%s6100 + $0x4] sm:$0xf]
      %v6103 = vld [vmem:[%s6100 + $0x8] sm:$0xf]
      %v6104 = vld [vmem:[%s6100 + $0xc] sm:$0xf]
      %v6105 = vld [vmem:[%s6100 + $0x10] sm:$0xf]
      %v6106 = vld [vmem:[%s6100 + $0x14] sm:$0xf]
      %v6107 = vld [vmem:[%s6100 + $0x18] sm:$0xf]
      %v6108 = vld [vmem:[%s6100 + $0x1c] sm:$0xf]
      %v6109 = vld [vmem:[%s6100 + $0x20] sm:$0xf]
      %v6110 = vld [vmem:[%s6100 + $0x24] sm:$0xf]
      %v6111 = vld [vmem:[%s6100 + $0x28] sm:$0xf]
      %v6112 = vld [vmem:[%s6100 + $0x2c] sm:$0xf]
      %v6113 = vld [vmem:[%s6100 + $0x30] sm:$0xf]
      %v6114 = vld [vmem:[%s6100 + $0x34] sm:$0xf]
      %v6115 = vld [vmem:[%s6100 + $0x38] sm:$0xf]
      %v6116 = vld [vmem:[%s6100 + $0x3c] sm:$0xf]
      %v6133 = vunpack.c.l.b16 %v6101
      %v6134 = vunpack.c.l.b16 %v6102
      %v6135 = vunpack.c.l.b16 %v6103
      %v6136 = vunpack.c.l.b16 %v6104
      %v6137 = vunpack.c.l.b16 %v6105
      %v6138 = vunpack.c.l.b16 %v6106
      %v6139 = vunpack.c.l.b16 %v6107
      %v6140 = vunpack.c.l.b16 %v6108
      %v6141 = vunpack.c.l.b16 %v6109
      %v6142 = vunpack.c.l.b16 %v6110
      %v6143 = vunpack.c.l.b16 %v6111
      %v6144 = vunpack.c.l.b16 %v6112
      %v6145 = vunpack.c.l.b16 %v6113
      %v6146 = vunpack.c.l.b16 %v6114
      %v6147 = vunpack.c.l.b16 %v6115
      %v6148 = vunpack.c.l.b16 %v6116
      %v6149 = vpack.c.b16 %v6134, %v6133
      %v6150 = vpack.c.b16 %v6136, %v6135
      %v6151 = vpack.c.b16 %v6138, %v6137
      %v6152 = vpack.c.b16 %v6140, %v6139
      %v6153 = vpack.c.b16 %v6142, %v6141
      %v6154 = vpack.c.b16 %v6144, %v6143
      %v6155 = vpack.c.b16 %v6146, %v6145
      %v6156 = vpack.c.b16 %v6148, %v6147
      %6165 = vmatprep.subr.bf16.mxu0 0
      %6166 = vmatpush1.bf16.msra.mxu0 %v6149
      %6167 = vmatprep.subr.bf16.mxu0 0
      %6168 = vmatpush1.bf16.msra.mxu0 %v6150
      %6169 = vmatprep.subr.bf16.mxu0 0
      %6170 = vmatpush1.bf16.msra.mxu0 %v6151
      %6171 = vmatprep.subr.bf16.mxu0 0
      %6172 = vmatpush1.bf16.msra.mxu0 %v6152
      %6173 = vmatprep.subr.bf16.mxu0 0
      %6174 = vmatpush1.bf16.msra.mxu0 %v6153
      %6175 = vmatprep.subr.bf16.mxu0 0
      %6176 = vmatpush1.bf16.msra.mxu0 %v6154
      %6177 = vmatprep.subr.bf16.mxu0 0
      %6178 = vmatpush1.bf16.msra.mxu0 %v6155
      %6179 = vmatprep.subr.bf16.mxu0 0
      %6180 = vmatpush1.bf16.msra.mxu0 %v6156
      %6181 = vmatprep.subr.bf16.mxu0 0
      %6182 = vmatpush1.bf16.msra.mxu0 0
      %6183 = vmatprep.subr.bf16.mxu0 0
      %6184 = vmatpush1.bf16.msra.mxu0 0
      %6185 = vmatprep.subr.bf16.mxu0 0
      %6186 = vmatpush1.bf16.msra.mxu0 0
      %6187 = vmatprep.subr.bf16.mxu0 0
      %6188 = vmatpush1.bf16.msra.mxu0 0
      %6189 = vmatprep.subr.bf16.mxu0 0
      %6190 = vmatpush1.bf16.msra.mxu0 0
      %6191 = vmatprep.subr.bf16.mxu0 0
      %6192 = vmatpush1.bf16.msra.mxu0 0
      %6193 = vmatprep.subr.bf16.mxu0 0
      %6194 = vmatpush1.bf16.msra.mxu0 0
      %6195 = vmatprep.subr.bf16.mxu0 0
      %6196 = vmatpush1.bf16.msra.mxu0 0
      %6197 = vmatprep.mubr.bf16.mxu0 0
      %6198 = vmatmul.mubr.bf16.gmra.mrb[0].mxu0 %v4753
      %v6199 = vpop.f32.mrb[0].mxu0
      %v6200 = vadd.f32 0.0, %v6199
      %v6201 = vpop.f32.mrb[0].mxu0
      %v6202 = vpop.f32.mrb[0].mxu0
      %v6203 = vadd.f32 0.0, %v6202
      %v6204 = vpop.f32.mrb[0].mxu0
      %6205 = vmatprep.mubr.bf16.mxu0 0
      %6206 = vmatmul.mubr.bf16.gmra.mrb[0].mxu0 %v4765
      %v6207 = vpop.f32.mrb[0].mxu0
      %v6208 = vadd.f32 0.0, %v6207
      %v6209 = vpop.f32.mrb[0].mxu0
      %v6210 = vpop.f32.mrb[0].mxu0
      %v6211 = vadd.f32 0.0, %v6210
      %v6212 = vpop.f32.mrb[0].mxu0
      %6213 = vmatprep.mubr.bf16.mxu0 0
      %6214 = vmatmul.mubr.bf16.gmra.mrb[0].mxu0 %v4777
      %v6215 = vpop.f32.mrb[0].mxu0
      %v6216 = vadd.f32 0.0, %v6215
      %v6217 = vpop.f32.mrb[0].mxu0
      %v6218 = vpop.f32.mrb[0].mxu0
      %v6219 = vadd.f32 0.0, %v6218
      %v6220 = vpop.f32.mrb[0].mxu0
      %6221 = vmatprep.mubr.bf16.mxu0 0
      %6222 = vmatmul.mubr.bf16.gmra.mrb[0].mxu0 %v4789
      %v6223 = vpop.f32.mrb[0].mxu0
      %v6224 = vadd.f32 0.0, %v6223
      %v6225 = vpop.f32.mrb[0].mxu0
      %v6226 = vpop.f32.mrb[0].mxu0
      %v6227 = vadd.f32 0.0, %v6226
      %v6228 = vpop.f32.mrb[0].mxu0
      %6229 = vmatprep.mubr.bf16.mxu0 0
      %6230 = vmatmul.mubr.bf16.gmra.mrb[0].mxu0 %v4801
      %v6231 = vpop.f32.mrb[0].mxu0
      %v6232 = vadd.f32 0.0, %v6231
      %v6233 = vpop.f32.mrb[0].mxu0
      %v6234 = vpop.f32.mrb[0].mxu0
      %v6235 = vadd.f32 0.0, %v6234
      %v6236 = vpop.f32.mrb[0].mxu0
      %6237 = vmatprep.mubr.bf16.mxu0 0
      %6238 = vmatmul.mubr.bf16.gmra.mrb[0].mxu0 %v4813
      %v6239 = vpop.f32.mrb[0].mxu0
      %v6240 = vadd.f32 0.0, %v6239
      %v6241 = vpop.f32.mrb[0].mxu0
      %v6242 = vpop.f32.mrb[0].mxu0
      %v6243 = vadd.f32 0.0, %v6242
      %v6244 = vpop.f32.mrb[0].mxu0
      %6245 = vmatprep.mubr.bf16.mxu0 0
      %6246 = vmatmul.mubr.bf16.gmra.mrb[0].mxu0 %v5545
      %v6247 = vpop.f32.mrb[0].mxu0
      %v6248 = vadd.f32 0.0, %v6247
      %v6249 = vpop.f32.mrb[0].mxu0
      %v6250 = vpop.f32.mrb[0].mxu0
      %v6251 = vadd.f32 0.0, %v6250
      %v6252 = vpop.f32.mrb[0].mxu0
      %6253 = vmatprep.mubr.bf16.mxu0 0
      %6254 = vmatmul.mubr.bf16.gmra.mrb[0].mxu0 %v6098
      %v6255 = vpop.f32.mrb[0].mxu0
      %v6256 = vadd.f32 0.0, %v6255
      %v6257 = vpop.f32.mrb[0].mxu0
      %v6258 = vpop.f32.mrb[0].mxu0
      %v6259 = vadd.f32 0.0, %v6258
      %v6260 = vpop.f32.mrb[0].mxu0
      %6261 = vdwg.mxu0
      %v6262 = vadd.f32 %v6071, %v6200
      %v6263 = vadd.f32 %v6072, %v6203
      %v6264 = vadd.f32 %v6073, %v6208
      %v6265 = vadd.f32 %v6074, %v6211
      %v6266 = vadd.f32 %v6075, %v6216
      %v6267 = vadd.f32 %v6076, %v6219
      %v6268 = vadd.f32 %v6077, %v6224
      %v6269 = vadd.f32 %v6078, %v6227
      %v6270 = vadd.f32 %v6079, %v6232
      %v6271 = vadd.f32 %v6080, %v6235
      %v6272 = vadd.f32 %v6081, %v6240
      %v6273 = vadd.f32 %v6082, %v6243
      %v6274 = vadd.f32 %v6083, %v6248
      %v6275 = vadd.f32 %v6084, %v6251
      %v6276 = vadd.f32 %v6085, %v6256
      %v6277 = vadd.f32 %v6086, %v6259
      %v6280 = vrot.slane %v4699, 1
      %v6281 = vrot.slane %v4700, 1
      %v6282 = vsel %vm5145, %v6280, %v6281
      %s6284 = scalar_lea.vmem %s3, 512
      %v6285 = vld [vmem:[%s6284] sm:$0xf]
      %v6286 = vld [vmem:[%s6284 + $0x4] sm:$0xf]
      %v6287 = vld [vmem:[%s6284 + $0x8] sm:$0xf]
      %v6288 = vld [vmem:[%s6284 + $0xc] sm:$0xf]
      %v6289 = vld [vmem:[%s6284 + $0x10] sm:$0xf]
      %v6290 = vld [vmem:[%s6284 + $0x14] sm:$0xf]
      %v6291 = vld [vmem:[%s6284 + $0x18] sm:$0xf]
      %v6292 = vld [vmem:[%s6284 + $0x1c] sm:$0xf]
      %v6293 = vld [vmem:[%s6284 + $0x20] sm:$0xf]
      %v6294 = vld [vmem:[%s6284 + $0x24] sm:$0xf]
      %v6295 = vld [vmem:[%s6284 + $0x28] sm:$0xf]
      %v6296 = vld [vmem:[%s6284 + $0x2c] sm:$0xf]
      %v6297 = vld [vmem:[%s6284 + $0x30] sm:$0xf]
      %v6298 = vld [vmem:[%s6284 + $0x34] sm:$0xf]
      %v6299 = vld [vmem:[%s6284 + $0x38] sm:$0xf]
      %v6300 = vld [vmem:[%s6284 + $0x3c] sm:$0xf]
      %v6317 = vunpack.c.l.b16 %v6285
      %v6318 = vunpack.c.l.b16 %v6286
      %v6319 = vunpack.c.l.b16 %v6287
      %v6320 = vunpack.c.l.b16 %v6288
      %v6321 = vunpack.c.l.b16 %v6289
      %v6322 = vunpack.c.l.b16 %v6290
      %v6323 = vunpack.c.l.b16 %v6291
      %v6324 = vunpack.c.l.b16 %v6292
      %v6325 = vunpack.c.l.b16 %v6293
      %v6326 = vunpack.c.l.b16 %v6294
      %v6327 = vunpack.c.l.b16 %v6295
      %v6328 = vunpack.c.l.b16 %v6296
      %v6329 = vunpack.c.l.b16 %v6297
      %v6330 = vunpack.c.l.b16 %v6298
      %v6331 = vunpack.c.l.b16 %v6299
      %v6332 = vunpack.c.l.b16 %v6300
      %v6333 = vpack.c.b16 %v6318, %v6317
      %v6334 = vpack.c.b16 %v6320, %v6319
      %v6335 = vpack.c.b16 %v6322, %v6321
      %v6336 = vpack.c.b16 %v6324, %v6323
      %v6337 = vpack.c.b16 %v6326, %v6325
      %v6338 = vpack.c.b16 %v6328, %v6327
      %v6339 = vpack.c.b16 %v6330, %v6329
      %v6340 = vpack.c.b16 %v6332, %v6331
      %6349 = vmatprep.subr.bf16.mxu0 0
      %6350 = vmatpush1.bf16.msra.mxu0 %v6333
      %6351 = vmatprep.subr.bf16.mxu0 0
      %6352 = vmatpush1.bf16.msra.mxu0 %v6334
      %6353 = vmatprep.subr.bf16.mxu0 0
      %6354 = vmatpush1.bf16.msra.mxu0 %v6335
      %6355 = vmatprep.subr.bf16.mxu0 0
      %6356 = vmatpush1.bf16.msra.mxu0 %v6336
      %6357 = vmatprep.subr.bf16.mxu0 0
      %6358 = vmatpush1.bf16.msra.mxu0 %v6337
      %6359 = vmatprep.subr.bf16.mxu0 0
      %6360 = vmatpush1.bf16.msra.mxu0 %v6338
      %6361 = vmatprep.subr.bf16.mxu0 0
      %6362 = vmatpush1.bf16.msra.mxu0 %v6339
      %6363 = vmatprep.subr.bf16.mxu0 0
      %6364 = vmatpush1.bf16.msra.mxu0 %v6340
      %6365 = vmatprep.subr.bf16.mxu0 0
      %6366 = vmatpush1.bf16.msra.mxu0 0
      %6367 = vmatprep.subr.bf16.mxu0 0
      %6368 = vmatpush1.bf16.msra.mxu0 0
      %6369 = vmatprep.subr.bf16.mxu0 0
      %6370 = vmatpush1.bf16.msra.mxu0 0
      %6371 = vmatprep.subr.bf16.mxu0 0
      %6372 = vmatpush1.bf16.msra.mxu0 0
      %6373 = vmatprep.subr.bf16.mxu0 0
      %6374 = vmatpush1.bf16.msra.mxu0 0
      %6375 = vmatprep.subr.bf16.mxu0 0
      %6376 = vmatpush1.bf16.msra.mxu0 0
      %6377 = vmatprep.subr.bf16.mxu0 0
      %6378 = vmatpush1.bf16.msra.mxu0 0
      %6379 = vmatprep.subr.bf16.mxu0 0
      %6380 = vmatpush1.bf16.msra.mxu0 0
      %6381 = vmatprep.mubr.bf16.mxu0 0
      %6382 = vmatmul.mubr.bf16.gmra.mrb[0].mxu0 %v5154
      %v6383 = vpop.f32.mrb[0].mxu0
      %v6384 = vadd.f32 0.0, %v6383
      %v6385 = vpop.f32.mrb[0].mxu0
      %v6386 = vpop.f32.mrb[0].mxu0
      %v6387 = vadd.f32 0.0, %v6386
      %v6388 = vpop.f32.mrb[0].mxu0
      %6389 = vmatprep.mubr.bf16.mxu0 0
      %6390 = vmatmul.mubr.bf16.gmra.mrb[0].mxu0 %v5157
      %v6391 = vpop.f32.mrb[0].mxu0
      %v6392 = vadd.f32 0.0, %v6391
      %v6393 = vpop.f32.mrb[0].mxu0
      %v6394 = vpop.f32.mrb[0].mxu0
      %v6395 = vadd.f32 0.0, %v6394
      %v6396 = vpop.f32.mrb[0].mxu0
      %6397 = vmatprep.mubr.bf16.mxu0 0
      %6398 = vmatmul.mubr.bf16.gmra.mrb[0].mxu0 %v5160
      %v6399 = vpop.f32.mrb[0].mxu0
      %v6400 = vadd.f32 0.0, %v6399
      %v6401 = vpop.f32.mrb[0].mxu0
      %v6402 = vpop.f32.mrb[0].mxu0
      %v6403 = vadd.f32 0.0, %v6402
      %v6404 = vpop.f32.mrb[0].mxu0
      %6405 = vmatprep.mubr.bf16.mxu0 0
      %6406 = vmatmul.mubr.bf16.gmra.mrb[0].mxu0 %v5163
      %v6407 = vpop.f32.mrb[0].mxu0
      %v6408 = vadd.f32 0.0, %v6407
      %v6409 = vpop.f32.mrb[0].mxu0
      %v6410 = vpop.f32.mrb[0].mxu0
      %v6411 = vadd.f32 0.0, %v6410
      %v6412 = vpop.f32.mrb[0].mxu0
      %6413 = vmatprep.mubr.bf16.mxu0 0
      %6414 = vmatmul.mubr.bf16.gmra.mrb[0].mxu0 %v5166
      %v6415 = vpop.f32.mrb[0].mxu0
      %v6416 = vadd.f32 0.0, %v6415
      %v6417 = vpop.f32.mrb[0].mxu0
      %v6418 = vpop.f32.mrb[0].mxu0
      %v6419 = vadd.f32 0.0, %v6418
      %v6420 = vpop.f32.mrb[0].mxu0
      %6421 = vmatprep.mubr.bf16.mxu0 0
      %6422 = vmatmul.mubr.bf16.gmra.mrb[0].mxu0 %v5169
      %v6423 = vpop.f32.mrb[0].mxu0
      %v6424 = vadd.f32 0.0, %v6423
      %v6425 = vpop.f32.mrb[0].mxu0
      %v6426 = vpop.f32.mrb[0].mxu0
      %v6427 = vadd.f32 0.0, %v6426
      %v6428 = vpop.f32.mrb[0].mxu0
      %6429 = vmatprep.mubr.bf16.mxu0 0
      %6430 = vmatmul.mubr.bf16.gmra.mrb[0].mxu0 %v5729
      %v6431 = vpop.f32.mrb[0].mxu0
      %v6432 = vadd.f32 0.0, %v6431
      %v6433 = vpop.f32.mrb[0].mxu0
      %v6434 = vpop.f32.mrb[0].mxu0
      %v6435 = vadd.f32 0.0, %v6434
      %v6436 = vpop.f32.mrb[0].mxu0
      %6437 = vmatprep.mubr.bf16.mxu0 0
      %6438 = vmatmul.mubr.bf16.gmra.mrb[0].mxu0 %v6282
      %v6439 = vpop.f32.mrb[0].mxu0
      %v6440 = vadd.f32 0.0, %v6439
      %v6441 = vpop.f32.mrb[0].mxu0
      %v6442 = vpop.f32.mrb[0].mxu0
      %v6443 = vadd.f32 0.0, %v6442
      %v6444 = vpop.f32.mrb[0].mxu0
      %6445 = vdwg.mxu0
      %v6446 = vadd.f32 %v6262, %v6384
      %v6447 = vadd.f32 %v6263, %v6387
      %v6448 = vadd.f32 %v6264, %v6392
      %v6449 = vadd.f32 %v6265, %v6395
      %v6450 = vadd.f32 %v6266, %v6400
      %v6451 = vadd.f32 %v6267, %v6403
      %v6452 = vadd.f32 %v6268, %v6408
      %v6453 = vadd.f32 %v6269, %v6411
      %v6454 = vadd.f32 %v6270, %v6416
      %v6455 = vadd.f32 %v6271, %v6419
      %v6456 = vadd.f32 %v6272, %v6424
      %v6457 = vadd.f32 %v6273, %v6427
      %v6458 = vadd.f32 %v6274, %v6432
      %v6459 = vadd.f32 %v6275, %v6435
      %v6460 = vadd.f32 %v6276, %v6440
      %v6461 = vadd.f32 %v6277, %v6443
      %v6462 = vld [vmem:[%s4] sm:$0x1]
      %v6464 = vlaneseq
      %v6465 = vshrl.u32 %v6464, 7
      %v6466 = vsub.s32 0, %v6465
      %v6467 = vrot.slane %v6462, %v6466
      %v6469 = vadd.f32 %v6446, %v6467
      %v6470 = vadd.f32 %v6447, %v6467
      %v6471 = vadd.f32 %v6448, %v6467
      %v6472 = vadd.f32 %v6449, %v6467
      %v6473 = vadd.f32 %v6450, %v6467
      %v6474 = vadd.f32 %v6451, %v6467
      %v6475 = vadd.f32 %v6452, %v6467
      %v6476 = vadd.f32 %v6453, %v6467
      %v6477 = vadd.f32 %v6454, %v6467
      %v6478 = vadd.f32 %v6455, %v6467
      %v6479 = vadd.f32 %v6456, %v6467
      %v6480 = vadd.f32 %v6457, %v6467
      %v6481 = vadd.f32 %v6458, %v6467
      %v6482 = vadd.f32 %v6459, %v6467
      %v6483 = vadd.f32 %v6460, %v6467
      %v6484 = vadd.f32 %v6461, %v6467
      %v6485 = vmax.f32 %v6469, 0.0
      %v6486 = vmax.f32 %v6470, 0.0
      %v6487 = vmax.f32 %v6471, 0.0
      %v6488 = vmax.f32 %v6472, 0.0
      %v6489 = vmax.f32 %v6473, 0.0
      %v6490 = vmax.f32 %v6474, 0.0
      %v6491 = vmax.f32 %v6475, 0.0
      %v6492 = vmax.f32 %v6476, 0.0
      %v6493 = vmax.f32 %v6477, 0.0
      %v6494 = vmax.f32 %v6478, 0.0
      %v6495 = vmax.f32 %v6479, 0.0
      %v6496 = vmax.f32 %v6480, 0.0
      %v6497 = vmax.f32 %v6481, 0.0
      %v6498 = vmax.f32 %v6482, 0.0
      %v6499 = vmax.f32 %v6483, 0.0
      %v6500 = vmax.f32 %v6484, 0.0
      %6501 = vst [vmem:[%s224] sm:$0xff] %v6485
      %6502 = vst [vmem:[%s224 + $0x8] sm:$0xff] %v6486
      %6503 = vst [vmem:[%s224 + $0x10] sm:$0xff] %v6487
      %6504 = vst [vmem:[%s224 + $0x18] sm:$0xff] %v6488
      %6505 = vst [vmem:[%s224 + $0x20] sm:$0xff] %v6489
      %6506 = vst [vmem:[%s224 + $0x28] sm:$0xff] %v6490
      %6507 = vst [vmem:[%s224 + $0x30] sm:$0xff] %v6491
      %6508 = vst [vmem:[%s224 + $0x38] sm:$0xff] %v6492
      %6509 = vst [vmem:[%s224 + $0x40] sm:$0xff] %v6493
      %6510 = vst [vmem:[%s224 + $0x48] sm:$0xff] %v6494
      %6511 = vst [vmem:[%s224 + $0x50] sm:$0xff] %v6495
      %6512 = vst [vmem:[%s224 + $0x58] sm:$0xff] %v6496
      %6513 = vst [vmem:[%s224 + $0x60] sm:$0xff] %v6497
      %6514 = vst [vmem:[%s224 + $0x68] sm:$0xff] %v6498
      %6515 = vst [vmem:[%s224 + $0x70] sm:$0xff] %v6499
      %6516 = vst [vmem:[%s224 + $0x78] sm:$0xff] %v6500
      %p6517 = scmp.lt.s32.totalorder %s16, 3
      %s6518 = scalar_select %p6517, %s16, 3
      %s6519 = smul.addr %s6518, 16
      %s6520 = smul.addr %s6519, 8
      %s6521 = scalar_lea.vmem %s5, %s6520
      // Predicated region
      $region41: #{down_forward.1} parent=39 // pred_check
        %p6522 = pneg %p144
      $region42: #{down_forward.1} parent=39 // pred_check_branch
        %6524 = sbr.rel (%p6522) target = $region44
      $region43: #{down_forward.1} parent=39 // pred_region
        _
      $region44: #{down_forward.1} parent=39 // pred_fallthru
        _
    $region40: #{down_forward.1} parent=5 // pred_fallthru
      _
    %p6525 = scmp.le.s32.totalorder 2, %s11
    // Predicated region
    $region45: #{down_forward.1} parent=5 // pred_check
      %p6526 = pneg %p6525
    $region46: #{down_forward.1} parent=5 // pred_check_branch
      %6528 = sbr.rel (%p6526) target = $region48
    $region47: #{down_forward.1} parent=5 // pred_region
      %s6529 = ssub.s32 %s11, 2
      // Predicated region
      $region49: #{down_forward.1} parent=47 // pred_check
        %p6530 = pneg %p150
      $region50: #{down_forward.1} parent=47 // pred_check_branch
        %6532 = sbr.rel (%p6530) target = $region52
      $region51: #{down_forward.1} parent=47 // pred_region
        %p6533 = scmp.lt.s32.totalorder %s17, 3
        %s6534 = scalar_select %p6533, %s17, 3
        %s6535 = smul.addr %s6534, 16
        %s6536 = smul.addr %s6535, 8
        %s6537 = scalar_lea.vmem %s5, %s6536
      $region52: #{down_forward.1} parent=47 // pred_fallthru
        _
    $region48: #{down_forward.1} parent=5 // pred_fallthru
      _
  $region6: #{down_forward.1} parent=0 // loop_footer
    %s15 = sadd.s32 1, %s11
  $region7: #{down_forward.1} parent=0 // loop_footer_branch
    %10 = sbr.rel target = $region3
  $region8: #{down_forward.1} parent=0 // loop_exit
    _

</llo_original>
